<compile_context>
chip_gen: v5e
topology: v5e:2x2
jax: 0.10.0
libtpu: 0.0.40
codegen_flags: <defaults>
</compile_context>

<pallas_src>
import functools

import jax
import jax.numpy as jnp
from jax.experimental import pallas as pl
from jax.experimental.pallas import tpu as pltpu


# ---------------------------------------------------------------------------
# In-kernel helpers (traced inside the fused kernel body).
# ---------------------------------------------------------------------------
def _gather3x3(src_ref, hout, wout, stride):
    """Gather the 9 shifted 3x3 windows from a zero-padded VMEM scratch ref and
    concatenate them along the lane (channel) axis -> [hout*wout, 9*Cin]."""
    cols = []
    for di in range(3):
        for dj in range(3):
            if stride == 1:
                win = src_ref[di:di + hout, dj:dj + wout, :]
            else:
                win = src_ref[pl.ds(di, hout, stride=stride),
                              pl.ds(dj, wout, stride=stride), :]
            cols.append(win)
    cols = jnp.concatenate(cols, axis=-1)              # [hout, wout, 9*Cin]
    return cols.reshape(hout * wout, cols.shape[-1])   # sublane-aligned reshape


def _conv3x3(src_ref, w_ref, b_ref, hout, wout, stride, relu=True):
    cols = _gather3x3(src_ref, hout, wout, stride)
    y = jnp.dot(cols, w_ref[...], preferred_element_type=jnp.float32)
    y = y + b_ref[...]                                 # (M, Cout) + (1, Cout)
    if relu:
        y = jnp.maximum(y, 0.0)
    return y                                           # [hout*wout, Cout] f32


# ---------------------------------------------------------------------------
# Fused U-Net kernel: one grid step == one batch element; activations in VMEM.
# ---------------------------------------------------------------------------
def _unet_kernel(x_ref, w1_ref, b1_ref, w2_ref, b2_ref, upmat_ref,
                 wd_ref, bd_ref, wh_ref, bh_ref,
                 out_ref, xp_ref, e1p_ref, dp_ref, *, H, W, C, F):
    H2, W2 = H // 2, W // 2
    C2 = 2 * F

    # Zero the padded scratch buffers (borders provide the conv zero padding).
    xp_ref[...] = jnp.zeros_like(xp_ref)
    e1p_ref[...] = jnp.zeros_like(e1p_ref)
    dp_ref[...] = jnp.zeros_like(dp_ref)

    # ---- stage input into padded scratch ----
    xp_ref[1:H + 1, 1:W + 1, :] = x_ref[0]

    # ---- encoder ----
    e1 = _conv3x3(xp_ref, w1_ref, b1_ref, H, W, 1)            # [H*W, F]
    e1_3d = e1.reshape(H, W, F)
    e1p_ref[1:H + 1, 1:W + 1, :] = e1_3d

    e2 = _conv3x3(e1p_ref, w2_ref, b2_ref, H2, W2, 2)         # [H2*W2, 2F]

    # ---- decoder ----
    # nearest 2x upsample == constant 0/1 selection matrix, done on the MXU.
    up = jnp.dot(upmat_ref[...], e2,
                 preferred_element_type=jnp.float32)          # [H*W, 2F]
    dp_ref[1:H + 1, 1:W + 1, 0:C2] = up.reshape(H, W, C2)     # concat ch [0:2F]
    dp_ref[1:H + 1, 1:W + 1, C2:C2 + F] = e1_3d               # skip   ch [2F:3F]

    d = _conv3x3(dp_ref, wd_ref, bd_ref, H, W, 1)             # [H*W, F]

    # ---- fused 1x1 heads; transposed so the HBM store is lane-dense ----
    heads = jnp.dot(d, wh_ref[...], preferred_element_type=jnp.float32)
    heads = heads + bh_ref[...]                               # [H*W, 2]
    out_ref[0] = jnp.transpose(heads)                         # [2, H*W]


# ---------------------------------------------------------------------------
# Host-side wrapper.
# ---------------------------------------------------------------------------
def _nearest_upsample_matrix(H, W):
    H2, W2 = H // 2, W // 2
    yy = jnp.arange(H) // 2
    xx = jnp.arange(W) // 2
    src = (yy[:, None] * W2 + xx[None, :]).reshape(-1)        # [H*W]
    return jax.nn.one_hot(src, H2 * W2, dtype=jnp.float32)    # [H*W, H2*W2]


def encoder_decoder_forward(params, x_nchw):
    x = jnp.transpose(x_nchw, (0, 2, 3, 1)).astype(jnp.float32)   # NCHW -> NHWC
    N, H, W, C = x.shape
    F = params["enc1_w"].shape[-1]
    C2 = 2 * F
    H2, W2 = H // 2, W // 2

    # im2col-ordered 2-D weights ([(di,dj) outer, cin inner], cout) + row biases
    w1 = params["enc1_w"].reshape(9 * C, F)
    b1 = params["enc1_b"].reshape(1, F)
    w2 = params["enc2_w"].reshape(9 * F, C2)
    b2 = params["enc2_b"].reshape(1, C2)
    wd = params["dec1_w"].reshape(9 * (C2 + F), F)
    bd = params["dec1_b"].reshape(1, F)
    wh = jnp.concatenate([params["head_bt_w"].reshape(F, 1),
                          params["head_ndvi_w"].reshape(F, 1)], axis=1)  # [F, 2]
    bh = jnp.concatenate([params["head_bt_b"],
                          params["head_ndvi_b"]], axis=0).reshape(1, 2)
    upmat = _nearest_upsample_matrix(H, W)                    # [H*W, H2*W2]

    kernel = functools.partial(_unet_kernel, H=H, W=W, C=C, F=F)
    full = lambda shape: pl.BlockSpec(shape, lambda n: (0,) * len(shape))

    out = pl.pallas_call(
        kernel,
        out_shape=jax.ShapeDtypeStruct((N, 2, H * W), jnp.float32),
        grid=(N,),
        in_specs=[
            pl.BlockSpec((1, H, W, C), lambda n: (n, 0, 0, 0)),   # input image
            full((9 * C, F)), full((1, F)),                       # enc1
            full((9 * F, C2)), full((1, C2)),                     # enc2
            full((H * W, H2 * W2)),                               # upsample mat
            full((9 * (C2 + F), F)), full((1, F)),                # dec1
            full((F, 2)), full((1, 2)),                           # fused heads
        ],
        out_specs=pl.BlockSpec((1, 2, H * W), lambda n: (n, 0, 0)),
        scratch_shapes=[
            pltpu.VMEM((H + 2, W + 2, C), jnp.float32),       # padded input
            pltpu.VMEM((H + 2, W + 2, F), jnp.float32),       # padded e1 (skip)
            pltpu.VMEM((H + 2, W + 2, C2 + F), jnp.float32),  # padded dec input
        ],
        compiler_params=pltpu.CompilerParams(
            dimension_semantics=("parallel",)),               # 2 TCs on v7x
    )(x, w1, b1, w2, b2, upmat, wd, bd, wh, bh)

    out = out.reshape(N, 2, H, W)
    return out[:, 0:1], out[:, 1:2]


# ---------------------------------------------------------------------------
# Parameter init: xavier-normal weights (gain=1), zero bias (as _init_weights).
# ---------------------------------------------------------------------------
def xavier_conv(key, kh, kw, cin, cout, gain=1.0):
    fan_in = cin * kh * kw
    fan_out = cout * kh * kw
    std = gain * jnp.sqrt(2.0 / (fan_in + fan_out))
    w = std * jax.random.normal(key, (kh, kw, cin, cout), dtype=jnp.float32)
    b = jnp.zeros((cout,), dtype=jnp.float32)
    return w, b


def init_params(key, c_in, feat):
    ks = jax.random.split(key, 5)
    p = {}
    p["enc1_w"], p["enc1_b"] = xavier_conv(ks[0], 3, 3, c_in, feat)
    p["enc2_w"], p["enc2_b"] = xavier_conv(ks[1], 3, 3, feat, 2 * feat)
    p["dec1_w"], p["dec1_b"] = xavier_conv(ks[2], 3, 3, 3 * feat, feat)
    p["head_bt_w"], p["head_bt_b"] = xavier_conv(ks[3], 1, 1, feat, 1)
    p["head_ndvi_w"], p["head_ndvi_b"] = xavier_conv(ks[4], 1, 1, feat, 1)
    return p


# ---------------------------------------------------------------------------
# Pure-JAX reference (same math, no Pallas) for a correctness check.
# ---------------------------------------------------------------------------
def _im2col_ref(x_nhwc, kh, kw, stride, padding):
    N, H, W, C = x_nhwc.shape
    xp = jnp.pad(x_nhwc, ((0, 0), (padding, padding), (padding, padding), (0, 0)))
    Ho = (H + 2 * padding - kh) // stride + 1
    Wo = (W + 2 * padding - kw) // stride + 1
    patches = []
    for i in range(kh):
        for j in range(kw):
            patches.append(xp[:, i:i + Ho * stride:stride,
                               j:j + Wo * stride:stride, :])
    cols = jnp.concatenate(patches, axis=-1)
    return cols.reshape(N * Ho * Wo, kh * kw * C), (N, Ho, Wo)


def _conv2d_ref(x_nhwc, w, b, *, stride=1, padding=0, relu=False):
    kh, kw, cin, cout = w.shape
    cols, (N, Ho, Wo) = _im2col_ref(x_nhwc, kh, kw, stride, padding)
    y = jnp.dot(cols, w.reshape(kh * kw * cin, cout), precision="highest") + b
    if relu:
        y = jnp.maximum(y, 0.0)
    return y.reshape(N, Ho, Wo, cout)


def encoder_decoder_reference(params, x_nchw):
    x = jnp.transpose(x_nchw, (0, 2, 3, 1)).astype(jnp.float32)
    e1 = _conv2d_ref(x, params["enc1_w"], params["enc1_b"],
                     stride=1, padding=1, relu=True)
    e2 = _conv2d_ref(e1, params["enc2_w"], params["enc2_b"],
                     stride=2, padding=1, relu=True)
    up = jnp.repeat(jnp.repeat(e2, 2, axis=1), 2, axis=2)
    d = jnp.concatenate([up, e1], axis=-1)
    d = _conv2d_ref(d, params["dec1_w"], params["dec1_b"],
                    stride=1, padding=1, relu=True)
    bt = _conv2d_ref(d, params["head_bt_w"], params["head_bt_b"])
    ndvi = _conv2d_ref(d, params["head_ndvi_w"], params["head_ndvi_b"])
    return jnp.transpose(bt, (0, 3, 1, 2)), jnp.transpose(ndvi, (0, 3, 1, 2))


if __name__ == "__main__":
    key = jax.random.PRNGKey(0)
    k_param, k_input = jax.random.split(key)

    N, C, H, W = 2, 4, 16, 16
    FEAT = 8

    params = init_params(k_param, C, FEAT)
    x = jax.random.normal(k_input, (N, C, H, W), dtype=jnp.float32)

    fwd = jax.jit(functools.partial(encoder_decoder_forward, params))
    x_bt, x_ndvi = fwd(x)
    jax.block_until_ready((x_bt, x_ndvi))

    assert x_bt.shape == (N, 1, H, W), x_bt.shape
    assert x_ndvi.shape == (N, 1, H, W), x_ndvi.shape
    assert bool(jnp.all(jnp.isfinite(x_bt))) and bool(jnp.all(jnp.isfinite(x_ndvi)))

    # Correctness check against the pure-JAX reference of the same network.
    ref_bt, ref_ndvi = jax.jit(
        functools.partial(encoder_decoder_reference, params))(x)
    assert bool(jnp.allclose(x_bt, ref_bt, atol=2e-2, rtol=2e-2)), \
        float(jnp.max(jnp.abs(x_bt - ref_bt)))
    assert bool(jnp.allclose(x_ndvi, ref_ndvi, atol=2e-2, rtol=2e-2)), \
        float(jnp.max(jnp.abs(x_ndvi - ref_ndvi)))

    print("KERNEL_OK")
</pallas_src>

<mosaic_0001>
module attributes {stable_mosaic.version = 11 : i64} {
  func.func @_unet_kernel(%arg0: i32, %arg1: memref<1x16x16x4xf32, #tpu.memory_space<vmem>>, %arg2: memref<36x8xf32, #tpu.memory_space<vmem>>, %arg3: memref<1x8xf32, #tpu.memory_space<vmem>>, %arg4: memref<72x16xf32, #tpu.memory_space<vmem>>, %arg5: memref<1x16xf32, #tpu.memory_space<vmem>>, %arg6: memref<256x64xf32, #tpu.memory_space<vmem>>, %arg7: memref<216x8xf32, #tpu.memory_space<vmem>>, %arg8: memref<1x8xf32, #tpu.memory_space<vmem>>, %arg9: memref<8x2xf32, #tpu.memory_space<vmem>>, %arg10: memref<1x2xf32, #tpu.memory_space<vmem>>, %arg11: memref<1x2x256xf32, #tpu.memory_space<vmem>>, %arg12: memref<18x18x4xf32, #tpu.memory_space<vmem>>, %arg13: memref<18x18x8xf32, #tpu.memory_space<vmem>>, %arg14: memref<18x18x24xf32, #tpu.memory_space<vmem>>) attributes {dimension_semantics = [#tpu.dimension_semantics<parallel>], iteration_bounds = array<i64: 2>, scalar_prefetch = 0 : i64, scratch_operands = 3 : i64, tpu.core_type = #tpu.core_type<tc>, window_params = [{transform_indices = @transform_0, window_bounds = array<i64: 1, 16, 16, 4>}, {pipeline_mode = #tpu.pipeline_mode<synchronous>, transform_indices = @transform_1, window_bounds = array<i64: 36, 8>}, {pipeline_mode = #tpu.pipeline_mode<synchronous>, transform_indices = @transform_2, window_bounds = array<i64: 1, 8>}, {pipeline_mode = #tpu.pipeline_mode<synchronous>, transform_indices = @transform_3, window_bounds = array<i64: 72, 16>}, {pipeline_mode = #tpu.pipeline_mode<synchronous>, transform_indices = @transform_4, window_bounds = array<i64: 1, 16>}, {pipeline_mode = #tpu.pipeline_mode<synchronous>, transform_indices = @transform_5, window_bounds = array<i64: 256, 64>}, {pipeline_mode = #tpu.pipeline_mode<synchronous>, transform_indices = @transform_6, window_bounds = array<i64: 216, 8>}, {pipeline_mode = #tpu.pipeline_mode<synchronous>, transform_indices = @transform_7, window_bounds = array<i64: 1, 8>}, {pipeline_mode = #tpu.pipeline_mode<synchronous>, transform_indices = @transform_8, window_bounds = array<i64: 8, 2>}, {pipeline_mode = #tpu.pipeline_mode<synchronous>, transform_indices = @transform_9, window_bounds = array<i64: 1, 2>}, {transform_indices = @transform_10, window_bounds = array<i64: 1, 2, 256>}]} {
    %cst = arith.constant 0.000000e+00 : f32
    %0 = vector.broadcast %cst : f32 to vector<18x18x4xf32>
    %c0 = arith.constant 0 : index
    %c0_0 = arith.constant 0 : index
    %c0_1 = arith.constant 0 : index
    %1 = vector.load %arg12[%c0, %c0_0, %c0_1] : memref<18x18x4xf32, #tpu.memory_space<vmem>>, vector<18x18x4xf32>
    tpu.vector_store %arg12[%c0, %c0_0, %c0_1], %0 {strides = array<i32>} : memref<18x18x4xf32, #tpu.memory_space<vmem>>, vector<18x18x4xf32>,
    %cst_2 = arith.constant 0.000000e+00 : f32
    %2 = vector.broadcast %cst_2 : f32 to vector<18x18x8xf32>
    %c0_3 = arith.constant 0 : index
    %c0_4 = arith.constant 0 : index
    %c0_5 = arith.constant 0 : index
    %3 = vector.load %arg13[%c0_3, %c0_4, %c0_5] : memref<18x18x8xf32, #tpu.memory_space<vmem>>, vector<18x18x8xf32>
    tpu.vector_store %arg13[%c0_3, %c0_4, %c0_5], %2 {strides = array<i32>} : memref<18x18x8xf32, #tpu.memory_space<vmem>>, vector<18x18x8xf32>,
    %cst_6 = arith.constant 0.000000e+00 : f32
    %4 = vector.broadcast %cst_6 : f32 to vector<18x18x24xf32>
    %c0_7 = arith.constant 0 : index
    %c0_8 = arith.constant 0 : index
    %c0_9 = arith.constant 0 : index
    %5 = vector.load %arg14[%c0_7, %c0_8, %c0_9] : memref<18x18x24xf32, #tpu.memory_space<vmem>>, vector<18x18x24xf32>
    tpu.vector_store %arg14[%c0_7, %c0_8, %c0_9], %4 {strides = array<i32>} : memref<18x18x24xf32, #tpu.memory_space<vmem>>, vector<18x18x24xf32>,
    %c0_10 = arith.constant 0 : index
    %c0_11 = arith.constant 0 : index
    %c0_12 = arith.constant 0 : index
    %c0_13 = arith.constant 0 : index
    %6 = vector.load %arg1[%c0_10, %c0_11, %c0_12, %c0_13] : memref<1x16x16x4xf32, #tpu.memory_space<vmem>>, vector<1x16x16x4xf32>
    %7 = vector.shape_cast %6 : vector<1x16x16x4xf32> to vector<16x16x4xf32>
    %c1 = arith.constant 1 : index
    %c1_14 = arith.constant 1 : index
    %c0_15 = arith.constant 0 : index
    %8 = vector.load %arg12[%c1, %c1_14, %c0_15] : memref<18x18x4xf32, #tpu.memory_space<vmem>>, vector<16x16x4xf32>
    tpu.vector_store %arg12[%c1, %c1_14, %c0_15], %7 {strides = array<i32>} : memref<18x18x4xf32, #tpu.memory_space<vmem>>, vector<16x16x4xf32>,
    %c0_16 = arith.constant 0 : index
    %c0_17 = arith.constant 0 : index
    %c0_18 = arith.constant 0 : index
    %9 = vector.load %arg12[%c0_16, %c0_17, %c0_18] : memref<18x18x4xf32, #tpu.memory_space<vmem>>, vector<16x16x4xf32>
    %c0_19 = arith.constant 0 : index
    %c1_20 = arith.constant 1 : index
    %c0_21 = arith.constant 0 : index
    %10 = vector.load %arg12[%c0_19, %c1_20, %c0_21] : memref<18x18x4xf32, #tpu.memory_space<vmem>>, vector<16x16x4xf32>
    %c0_22 = arith.constant 0 : index
    %c2 = arith.constant 2 : index
    %c0_23 = arith.constant 0 : index
    %11 = vector.load %arg12[%c0_22, %c2, %c0_23] : memref<18x18x4xf32, #tpu.memory_space<vmem>>, vector<16x16x4xf32>
    %c1_24 = arith.constant 1 : index
    %c0_25 = arith.constant 0 : index
    %c0_26 = arith.constant 0 : index
    %12 = vector.load %arg12[%c1_24, %c0_25, %c0_26] : memref<18x18x4xf32, #tpu.memory_space<vmem>>, vector<16x16x4xf32>
    %c1_27 = arith.constant 1 : index
    %c1_28 = arith.constant 1 : index
    %c0_29 = arith.constant 0 : index
    %13 = vector.load %arg12[%c1_27, %c1_28, %c0_29] : memref<18x18x4xf32, #tpu.memory_space<vmem>>, vector<16x16x4xf32>
    %c1_30 = arith.constant 1 : index
    %c2_31 = arith.constant 2 : index
    %c0_32 = arith.constant 0 : index
    %14 = vector.load %arg12[%c1_30, %c2_31, %c0_32] : memref<18x18x4xf32, #tpu.memory_space<vmem>>, vector<16x16x4xf32>
    %c2_33 = arith.constant 2 : index
    %c0_34 = arith.constant 0 : index
    %c0_35 = arith.constant 0 : index
    %15 = vector.load %arg12[%c2_33, %c0_34, %c0_35] : memref<18x18x4xf32, #tpu.memory_space<vmem>>, vector<16x16x4xf32>
    %c2_36 = arith.constant 2 : index
    %c1_37 = arith.constant 1 : index
    %c0_38 = arith.constant 0 : index
    %16 = vector.load %arg12[%c2_36, %c1_37, %c0_38] : memref<18x18x4xf32, #tpu.memory_space<vmem>>, vector<16x16x4xf32>
    %c2_39 = arith.constant 2 : index
    %c2_40 = arith.constant 2 : index
    %c0_41 = arith.constant 0 : index
    %17 = vector.load %arg12[%c2_39, %c2_40, %c0_41] : memref<18x18x4xf32, #tpu.memory_space<vmem>>, vector<16x16x4xf32>
    %18 = tpu.concatenate %9, %10, %11, %12, %13, %14, %15, %16, %17 in 2 : vector<16x16x4xf32>, vector<16x16x4xf32>, vector<16x16x4xf32>, vector<16x16x4xf32>, vector<16x16x4xf32>, vector<16x16x4xf32>, vector<16x16x4xf32>, vector<16x16x4xf32>, vector<16x16x4xf32> -> vector<16x16x36xf32>
    %19 = vector.shape_cast %18 : vector<16x16x36xf32> to vector<256x36xf32>
    %c0_42 = arith.constant 0 : index
    %c0_43 = arith.constant 0 : index
    %20 = vector.load %arg2[%c0_42, %c0_43] : memref<36x8xf32, #tpu.memory_space<vmem>>, vector<36x8xf32>
    %cst_44 = arith.constant dense<0.000000e+00> : vector<256x8xf32>
    %21 = tpu.matmul %19, %20, %cst_44 {dimension_numbers = #tpu.dot_dimension_numbers<[1], [0], [0], [1], [0, 0, 1, 1], [], []>} : vector<256x36xf32>, vector<36x8xf32>, vector<256x8xf32> -> vector<256x8xf32>
    %c0_45 = arith.constant 0 : index
    %c0_46 = arith.constant 0 : index
    %22 = vector.load %arg3[%c0_45, %c0_46] : memref<1x8xf32, #tpu.memory_space<vmem>>, vector<1x8xf32>
    %23 = vector.broadcast %22 : vector<1x8xf32> to vector<256x8xf32>
    %24 = arith.addf %21, %23 : vector<256x8xf32>
    %cst_47 = arith.constant 0.000000e+00 : f32
    %25 = vector.broadcast %cst_47 : f32 to vector<256x8xf32>
    %26 = arith.maximumf %24, %25 : vector<256x8xf32>
    %27 = vector.shape_cast %26 : vector<256x8xf32> to vector<16x16x8xf32>
    %c1_48 = arith.constant 1 : index
    %c1_49 = arith.constant 1 : index
    %c0_50 = arith.constant 0 : index
    %28 = vector.load %arg13[%c1_48, %c1_49, %c0_50] : memref<18x18x8xf32, #tpu.memory_space<vmem>>, vector<16x16x8xf32>
    tpu.vector_store %arg13[%c1_48, %c1_49, %c0_50], %27 {strides = array<i32>} : memref<18x18x8xf32, #tpu.memory_space<vmem>>, vector<16x16x8xf32>,
    %c0_51 = arith.constant 0 : index
    %c0_52 = arith.constant 0 : index
    %c0_53 = arith.constant 0 : index
    %29 = tpu.strided_load %arg13[%c0_51, %c0_52, %c0_53] {strides = array<i32: 2, 2, 1>} : memref<18x18x8xf32, #tpu.memory_space<vmem>>, vector<8x8x8xf32>
    %c0_54 = arith.constant 0 : index
    %c1_55 = arith.constant 1 : index
    %c0_56 = arith.constant 0 : index
    %30 = tpu.strided_load %arg13[%c0_54, %c1_55, %c0_56] {strides = array<i32: 2, 2, 1>} : memref<18x18x8xf32, #tpu.memory_space<vmem>>, vector<8x8x8xf32>
    %c0_57 = arith.constant 0 : index
    %c2_58 = arith.constant 2 : index
    %c0_59 = arith.constant 0 : index
    %31 = tpu.strided_load %arg13[%c0_57, %c2_58, %c0_59] {strides = array<i32: 2, 2, 1>} : memref<18x18x8xf32, #tpu.memory_space<vmem>>, vector<8x8x8xf32>
    %c1_60 = arith.constant 1 : index
    %c0_61 = arith.constant 0 : index
    %c0_62 = arith.constant 0 : index
    %32 = tpu.strided_load %arg13[%c1_60, %c0_61, %c0_62] {strides = array<i32: 2, 2, 1>} : memref<18x18x8xf32, #tpu.memory_space<vmem>>, vector<8x8x8xf32>
    %c1_63 = arith.constant 1 : index
    %c1_64 = arith.constant 1 : index
    %c0_65 = arith.constant 0 : index
    %33 = tpu.strided_load %arg13[%c1_63, %c1_64, %c0_65] {strides = array<i32: 2, 2, 1>} : memref<18x18x8xf32, #tpu.memory_space<vmem>>, vector<8x8x8xf32>
    %c1_66 = arith.constant 1 : index
    %c2_67 = arith.constant 2 : index
    %c0_68 = arith.constant 0 : index
    %34 = tpu.strided_load %arg13[%c1_66, %c2_67, %c0_68] {strides = array<i32: 2, 2, 1>} : memref<18x18x8xf32, #tpu.memory_space<vmem>>, vector<8x8x8xf32>
    %c2_69 = arith.constant 2 : index
    %c0_70 = arith.constant 0 : index
    %c0_71 = arith.constant 0 : index
    %35 = tpu.strided_load %arg13[%c2_69, %c0_70, %c0_71] {strides = array<i32: 2, 2, 1>} : memref<18x18x8xf32, #tpu.memory_space<vmem>>, vector<8x8x8xf32>
    %c2_72 = arith.constant 2 : index
    %c1_73 = arith.constant 1 : index
    %c0_74 = arith.constant 0 : index
    %36 = tpu.strided_load %arg13[%c2_72, %c1_73, %c0_74] {strides = array<i32: 2, 2, 1>} : memref<18x18x8xf32, #tpu.memory_space<vmem>>, vector<8x8x8xf32>
    %c2_75 = arith.constant 2 : index
    %c2_76 = arith.constant 2 : index
    %c0_77 = arith.constant 0 : index
    %37 = tpu.strided_load %arg13[%c2_75, %c2_76, %c0_77] {strides = array<i32: 2, 2, 1>} : memref<18x18x8xf32, #tpu.memory_space<vmem>>, vector<8x8x8xf32>
    %38 = tpu.concatenate %29, %30, %31, %32, %33, %34, %35, %36, %37 in 2 : vector<8x8x8xf32>, vector<8x8x8xf32>, vector<8x8x8xf32>, vector<8x8x8xf32>, vector<8x8x8xf32>, vector<8x8x8xf32>, vector<8x8x8xf32>, vector<8x8x8xf32>, vector<8x8x8xf32> -> vector<8x8x72xf32>
    %39 = vector.shape_cast %38 : vector<8x8x72xf32> to vector<64x72xf32>
    %c0_78 = arith.constant 0 : index
    %c0_79 = arith.constant 0 : index
    %40 = vector.load %arg4[%c0_78, %c0_79] : memref<72x16xf32, #tpu.memory_space<vmem>>, vector<72x16xf32>
    %cst_80 = arith.constant dense<0.000000e+00> : vector<64x16xf32>
    %41 = tpu.matmul %39, %40, %cst_80 {dimension_numbers = #tpu.dot_dimension_numbers<[1], [0], [0], [1], [0, 0, 1, 1], [], []>} : vector<64x72xf32>, vector<72x16xf32>, vector<64x16xf32> -> vector<64x16xf32>
    %c0_81 = arith.constant 0 : index
    %c0_82 = arith.constant 0 : index
    %42 = vector.load %arg5[%c0_81, %c0_82] : memref<1x16xf32, #tpu.memory_space<vmem>>, vector<1x16xf32>
    %43 = vector.broadcast %42 : vector<1x16xf32> to vector<64x16xf32>
    %44 = arith.addf %41, %43 : vector<64x16xf32>
    %cst_83 = arith.constant 0.000000e+00 : f32
    %45 = vector.broadcast %cst_83 : f32 to vector<64x16xf32>
    %46 = arith.maximumf %44, %45 : vector<64x16xf32>
    %c0_84 = arith.constant 0 : index
    %c0_85 = arith.constant 0 : index
    %47 = vector.load %arg6[%c0_84, %c0_85] : memref<256x64xf32, #tpu.memory_space<vmem>>, vector<256x64xf32>
    %cst_86 = arith.constant dense<0.000000e+00> : vector<256x16xf32>
    %48 = tpu.matmul %47, %46, %cst_86 {dimension_numbers = #tpu.dot_dimension_numbers<[1], [0], [0], [1], [0, 0, 1, 1], [], []>} : vector<256x64xf32>, vector<64x16xf32>, vector<256x16xf32> -> vector<256x16xf32>
    %49 = vector.shape_cast %48 : vector<256x16xf32> to vector<16x16x16xf32>
    %c1_87 = arith.constant 1 : index
    %c1_88 = arith.constant 1 : index
    %c0_89 = arith.constant 0 : index
    %50 = vector.load %arg14[%c1_87, %c1_88, %c0_89] : memref<18x18x24xf32, #tpu.memory_space<vmem>>, vector<16x16x16xf32>
    tpu.vector_store %arg14[%c1_87, %c1_88, %c0_89], %49 {strides = array<i32>} : memref<18x18x24xf32, #tpu.memory_space<vmem>>, vector<16x16x16xf32>,
    %c1_90 = arith.constant 1 : index
    %c1_91 = arith.constant 1 : index
    %c16 = arith.constant 16 : index
    %51 = vector.load %arg14[%c1_90, %c1_91, %c16] : memref<18x18x24xf32, #tpu.memory_space<vmem>>, vector<16x16x8xf32>
    tpu.vector_store %arg14[%c1_90, %c1_91, %c16], %27 {strides = array<i32>} : memref<18x18x24xf32, #tpu.memory_space<vmem>>, vector<16x16x8xf32>,
    %c0_92 = arith.constant 0 : index
    %c0_93 = arith.constant 0 : index
    %c0_94 = arith.constant 0 : index
    %52 = vector.load %arg14[%c0_92, %c0_93, %c0_94] : memref<18x18x24xf32, #tpu.memory_space<vmem>>, vector<16x16x24xf32>
    %c0_95 = arith.constant 0 : index
    %c1_96 = arith.constant 1 : index
    %c0_97 = arith.constant 0 : index
    %53 = vector.load %arg14[%c0_95, %c1_96, %c0_97] : memref<18x18x24xf32, #tpu.memory_space<vmem>>, vector<16x16x24xf32>
    %c0_98 = arith.constant 0 : index
    %c2_99 = arith.constant 2 : index
    %c0_100 = arith.constant 0 : index
    %54 = vector.load %arg14[%c0_98, %c2_99, %c0_100] : memref<18x18x24xf32, #tpu.memory_space<vmem>>, vector<16x16x24xf32>
    %c1_101 = arith.constant 1 : index
    %c0_102 = arith.constant 0 : index
    %c0_103 = arith.constant 0 : index
    %55 = vector.load %arg14[%c1_101, %c0_102, %c0_103] : memref<18x18x24xf32, #tpu.memory_space<vmem>>, vector<16x16x24xf32>
    %c1_104 = arith.constant 1 : index
    %c1_105 = arith.constant 1 : index
    %c0_106 = arith.constant 0 : index
    %56 = vector.load %arg14[%c1_104, %c1_105, %c0_106] : memref<18x18x24xf32, #tpu.memory_space<vmem>>, vector<16x16x24xf32>
    %c1_107 = arith.constant 1 : index
    %c2_108 = arith.constant 2 : index
    %c0_109 = arith.constant 0 : index
    %57 = vector.load %arg14[%c1_107, %c2_108, %c0_109] : memref<18x18x24xf32, #tpu.memory_space<vmem>>, vector<16x16x24xf32>
    %c2_110 = arith.constant 2 : index
    %c0_111 = arith.constant 0 : index
    %c0_112 = arith.constant 0 : index
    %58 = vector.load %arg14[%c2_110, %c0_111, %c0_112] : memref<18x18x24xf32, #tpu.memory_space<vmem>>, vector<16x16x24xf32>
    %c2_113 = arith.constant 2 : index
    %c1_114 = arith.constant 1 : index
    %c0_115 = arith.constant 0 : index
    %59 = vector.load %arg14[%c2_113, %c1_114, %c0_115] : memref<18x18x24xf32, #tpu.memory_space<vmem>>, vector<16x16x24xf32>
    %c2_116 = arith.constant 2 : index
    %c2_117 = arith.constant 2 : index
    %c0_118 = arith.constant 0 : index
    %60 = vector.load %arg14[%c2_116, %c2_117, %c0_118] : memref<18x18x24xf32, #tpu.memory_space<vmem>>, vector<16x16x24xf32>
    %61 = tpu.concatenate %52, %53, %54, %55, %56, %57, %58, %59, %60 in 2 : vector<16x16x24xf32>, vector<16x16x24xf32>, vector<16x16x24xf32>, vector<16x16x24xf32>, vector<16x16x24xf32>, vector<16x16x24xf32>, vector<16x16x24xf32>, vector<16x16x24xf32>, vector<16x16x24xf32> -> vector<16x16x216xf32>
    %62 = vector.shape_cast %61 : vector<16x16x216xf32> to vector<256x216xf32>
    %c0_119 = arith.constant 0 : index
    %c0_120 = arith.constant 0 : index
    %63 = vector.load %arg7[%c0_119, %c0_120] : memref<216x8xf32, #tpu.memory_space<vmem>>, vector<216x8xf32>
    %cst_121 = arith.constant dense<0.000000e+00> : vector<256x8xf32>
    %64 = tpu.matmul %62, %63, %cst_121 {dimension_numbers = #tpu.dot_dimension_numbers<[1], [0], [0], [1], [0, 0, 1, 1], [], []>} : vector<256x216xf32>, vector<216x8xf32>, vector<256x8xf32> -> vector<256x8xf32>
    %c0_122 = arith.constant 0 : index
    %c0_123 = arith.constant 0 : index
    %65 = vector.load %arg8[%c0_122, %c0_123] : memref<1x8xf32, #tpu.memory_space<vmem>>, vector<1x8xf32>
    %66 = vector.broadcast %65 : vector<1x8xf32> to vector<256x8xf32>
    %67 = arith.addf %64, %66 : vector<256x8xf32>
    %cst_124 = arith.constant 0.000000e+00 : f32
    %68 = vector.broadcast %cst_124 : f32 to vector<256x8xf32>
    %69 = arith.maximumf %67, %68 : vector<256x8xf32>
    %c0_125 = arith.constant 0 : index
    %c0_126 = arith.constant 0 : index
    %70 = vector.load %arg9[%c0_125, %c0_126] : memref<8x2xf32, #tpu.memory_space<vmem>>, vector<8x2xf32>
    %cst_127 = arith.constant dense<0.000000e+00> : vector<256x2xf32>
    %71 = tpu.matmul %69, %70, %cst_127 {dimension_numbers = #tpu.dot_dimension_numbers<[1], [0], [0], [1], [0, 0, 1, 1], [], []>} : vector<256x8xf32>, vector<8x2xf32>, vector<256x2xf32> -> vector<256x2xf32>
    %c0_128 = arith.constant 0 : index
    %c0_129 = arith.constant 0 : index
    %72 = vector.load %arg10[%c0_128, %c0_129] : memref<1x2xf32, #tpu.memory_space<vmem>>, vector<1x2xf32>
    %73 = vector.broadcast %72 : vector<1x2xf32> to vector<256x2xf32>
    %74 = arith.addf %71, %73 : vector<256x2xf32>
    %75 = tpu.transpose %74, [1, 0] : vector<256x2xf32> -> vector<2x256xf32>
    %c0_130 = arith.constant 0 : index
    %c0_131 = arith.constant 0 : index
    %c0_132 = arith.constant 0 : index
    %76 = vector.load %arg11[%c0_130, %c0_131, %c0_132] : memref<1x2x256xf32, #tpu.memory_space<vmem>>, vector<1x2x256xf32>
    %77 = vector.shape_cast %76 : vector<1x2x256xf32> to vector<2x256xf32>
    %78 = vector.shape_cast %75 : vector<2x256xf32> to vector<1x2x256xf32>
    tpu.vector_store %arg11[%c0_130, %c0_131, %c0_132], %78 {strides = array<i32>} : memref<1x2x256xf32, #tpu.memory_space<vmem>>, vector<1x2x256xf32>,
    return
  }
  func.func @transform_0(%arg0: i32) -> (i32, i32, i32, i32) {
    %c0_i32 = arith.constant 0 : i32
    %c0_i32_0 = arith.constant 0 : i32
    %c0_i32_1 = arith.constant 0 : i32
    %c0_i32_2 = arith.constant 0 : i32
    return %arg0, %c0_i32, %c0_i32_0, %c0_i32_1 : i32, i32, i32, i32
  }
  func.func @transform_1(%arg0: i32) -> (i32, i32) {
    %c0_i32 = arith.constant 0 : i32
    %c0_i32_0 = arith.constant 0 : i32
    %c0_i32_1 = arith.constant 0 : i32
    return %c0_i32, %c0_i32_0 : i32, i32
  }
  func.func @transform_2(%arg0: i32) -> (i32, i32) {
    %c0_i32 = arith.constant 0 : i32
    %c0_i32_0 = arith.constant 0 : i32
    %c0_i32_1 = arith.constant 0 : i32
    return %c0_i32, %c0_i32_0 : i32, i32
  }
  func.func @transform_3(%arg0: i32) -> (i32, i32) {
    %c0_i32 = arith.constant 0 : i32
    %c0_i32_0 = arith.constant 0 : i32
    %c0_i32_1 = arith.constant 0 : i32
    return %c0_i32, %c0_i32_0 : i32, i32
  }
  func.func @transform_4(%arg0: i32) -> (i32, i32) {
    %c0_i32 = arith.constant 0 : i32
    %c0_i32_0 = arith.constant 0 : i32
    %c0_i32_1 = arith.constant 0 : i32
    return %c0_i32, %c0_i32_0 : i32, i32
  }
  func.func @transform_5(%arg0: i32) -> (i32, i32) {
    %c0_i32 = arith.constant 0 : i32
    %c0_i32_0 = arith.constant 0 : i32
    %c0_i32_1 = arith.constant 0 : i32
    return %c0_i32, %c0_i32_0 : i32, i32
  }
  func.func @transform_6(%arg0: i32) -> (i32, i32) {
    %c0_i32 = arith.constant 0 : i32
    %c0_i32_0 = arith.constant 0 : i32
    %c0_i32_1 = arith.constant 0 : i32
    return %c0_i32, %c0_i32_0 : i32, i32
  }
  func.func @transform_7(%arg0: i32) -> (i32, i32) {
    %c0_i32 = arith.constant 0 : i32
    %c0_i32_0 = arith.constant 0 : i32
    %c0_i32_1 = arith.constant 0 : i32
    return %c0_i32, %c0_i32_0 : i32, i32
  }
  func.func @transform_8(%arg0: i32) -> (i32, i32) {
    %c0_i32 = arith.constant 0 : i32
    %c0_i32_0 = arith.constant 0 : i32
    %c0_i32_1 = arith.constant 0 : i32
    return %c0_i32, %c0_i32_0 : i32, i32
  }
  func.func @transform_9(%arg0: i32) -> (i32, i32) {
    %c0_i32 = arith.constant 0 : i32
    %c0_i32_0 = arith.constant 0 : i32
    %c0_i32_1 = arith.constant 0 : i32
    return %c0_i32, %c0_i32_0 : i32, i32
  }
  func.func @transform_10(%arg0: i32) -> (i32, i32, i32) {
    %c0_i32 = arith.constant 0 : i32
    %c0_i32_0 = arith.constant 0 : i32
    %c0_i32_1 = arith.constant 0 : i32
    return %arg0, %c0_i32, %c0_i32_0 : i32, i32, i32
  }
}

</mosaic_0001>

<llo_original>
// kernel: encoder_decoder_forward.1
$region0: #{encoder_decoder_forward.1}
  #allocation0 [shape = 'u32[]', space=smem, size = 0x4, offset = 0x4, fixed_abs, tag = 'smem constant byte address 0x4 - core index']
  #allocation1 [shape = 'u32[72,128]{1,0:T(1,128)}', space=vmem, size = 0x9000, scoped, tag = 'internal scratch']
  #allocation2 [shape = 'f32[18,18,4]{2,1,0:T(8,128)}', space=vmem, size = 0x36000, scoped, tag = 'scratch operand']
  #allocation3 [shape = 'f32[18,18,8]{2,1,0:T(8,128)}', space=vmem, size = 0x36000, scoped, tag = 'scratch operand']
  #allocation4 [shape = 'f32[18,18,24]{2,1,0:T(8,128)}', space=vmem, size = 0x36000, scoped, tag = 'scratch operand']
  %s0 = inlined_call_operand.vmem [shape: f32[2,16,16,4], index: 0, kind: input, shape index: {}]
  %s1 = inlined_call_operand.vmem [shape: f32[36,8], index: 1, kind: input, shape index: {}]
  %s2 = inlined_call_operand.vmem [shape: f32[1,8], index: 2, kind: input, shape index: {}, may-alias: {2,7}]
  %s3 = inlined_call_operand.vmem [shape: f32[72,16], index: 3, kind: input, shape index: {}]
  %s4 = inlined_call_operand.vmem [shape: f32[1,16], index: 4, kind: input, shape index: {}]
  %s5 = inlined_call_operand.vmem [shape: f32[256,64], index: 5, kind: input, shape index: {}]
  %s6 = inlined_call_operand.vmem [shape: f32[216,8], index: 6, kind: input, shape index: {}]
  %s7 = inlined_call_operand.vmem [shape: f32[1,8], index: 7, kind: input, shape index: {}, may-alias: {2,7}]
  %s8 = inlined_call_operand.vmem [shape: f32[8,2], index: 8, kind: input, shape index: {}]
  %s9 = inlined_call_operand.vmem [shape: f32[1,2], index: 9, kind: input, shape index: {}]
  %s10 = inlined_call_operand.vmem [shape: f32[2,2,256], index: 10, kind: output, shape index: {}]
  %s11 = sld [smem:[#allocation0]]
  $region73: #{encoder_decoder_forward.1} parent=0
    _
  %s13 = ssub.s32 1, %s11
  %s14 = scalar_select 0, %s13, %s11
  loop: start=0, step=1, limit=4
  $region2: #{encoder_decoder_forward.1} parent=0 // loop_pre_header
    _
  $region3: #{encoder_decoder_forward.1} parent=0 // loop_header
    %s16 = sphi 0, %s20
    %p17 = scmp.ge.s32.totalorder %s16, 4
    %s26 = sphi 0, %s28
    %s29 = sphi 0, %s26
    %s30 = sphi 0, %s29
    %s46 = sphi 0, %s30
    %s50 = sphi 0, %s50
    %s52 = sphi 0, %s50
    %s53 = sphi 0, %s52
    %s67 = sphi 0, %s53
    %s71 = sphi 0, %s71
    %s73 = sphi 0, %s71
    %s74 = sphi 0, %s73
    %s88 = sphi 0, %s74
    %s92 = sphi 0, %s92
    %s94 = sphi 0, %s92
    %s95 = sphi 0, %s94
    %s109 = sphi 0, %s95
    %s113 = sphi 0, %s113
    %s115 = sphi 0, %s113
    %s116 = sphi 0, %s115
    %s130 = sphi 0, %s116
    %s134 = sphi 0, %s134
    %s136 = sphi 0, %s134
    %s137 = sphi 0, %s136
    %s151 = sphi 0, %s137
    %s155 = sphi 0, %s155
    %s157 = sphi 0, %s155
    %s158 = sphi 0, %s157
    %s172 = sphi 0, %s158
    %s176 = sphi 0, %s176
    %s178 = sphi 0, %s176
    %s179 = sphi 0, %s178
    %s193 = sphi 0, %s179
    %s197 = sphi 0, %s197
    %s199 = sphi 0, %s197
    %s200 = sphi 0, %s199
    %s214 = sphi 0, %s200
    %s218 = sphi 0, %s218
    %s220 = sphi 0, %s218
    %s221 = sphi 0, %s220
    %s235 = sphi 0, %s221
    %s241 = sphi 0, %s243
    %s244 = sphi 0, %s241
    %s245 = sphi 0, %s244
    %s261 = sphi 0, %s245
  $region4: #{encoder_decoder_forward.1} parent=0 // loop_header_branch
    %19 = sbr.rel (%p17) target = $region8
  $region5: #{encoder_decoder_forward.1} parent=0 // loop_body
    %s21 = ssub.s32 %s16, 1
    %s22 = ssub.s32 %s16, 2
    %s23 = sadd.s32 %s16, 1
    %s24 = ssub.s32 %s16, %s23
    %p25 = scmp.eq.s32.totalorder %s24, 0
    %s27 = sadd.s32 %s26, 1
    %s28 = scalar_select %p25, %s26, %s27
    %p31 = pneg %p25
    %p32 = scmp.eq.s32.totalorder %s16, 1
    %p33 = por %p31, %p32
    %p34 = scmp.ne.s32.totalorder %s26, %s29
    %p35 = scmp.eq.s32.totalorder %s16, 0
    %p36 = por %p34, %p35
    %p37 = scmp.ne.s32.totalorder %s26, %s29
    %p38 = scmp.eq.s32.totalorder %s21, 1
    %p39 = por %p37, %p38
    %p40 = scmp.ne.s32.totalorder %s29, %s30
    %p41 = scmp.eq.s32.totalorder %s21, 0
    %p42 = por %p40, %p41
    %p43 = scmp.ne.s32.totalorder %s29, %s30
    %p44 = scmp.eq.s32.totalorder %s22, 1
    %p45 = por %p43, %p44
    %p47 = scmp.ne.s32.totalorder %s30, %s46
    %p48 = scmp.eq.s32.totalorder %s22, 0
    %p49 = por %p47, %p48
    %s51 = sadd.s32 %s50, 1
    %p54 = scmp.eq.s32.totalorder %s16, 1
    %p55 = scmp.ne.s32.totalorder %s50, %s52
    %p56 = scmp.eq.s32.totalorder %s16, 0
    %p57 = por %p55, %p56
    %p58 = scmp.ne.s32.totalorder %s50, %s52
    %p59 = scmp.eq.s32.totalorder %s21, 1
    %p60 = por %p58, %p59
    %p61 = scmp.ne.s32.totalorder %s52, %s53
    %p62 = scmp.eq.s32.totalorder %s21, 0
    %p63 = por %p61, %p62
    %p64 = scmp.ne.s32.totalorder %s52, %s53
    %p65 = scmp.eq.s32.totalorder %s22, 1
    %p66 = por %p64, %p65
    %p68 = scmp.ne.s32.totalorder %s53, %s67
    %p69 = scmp.eq.s32.totalorder %s22, 0
    %p70 = por %p68, %p69
    %s72 = sadd.s32 %s71, 1
    %p75 = scmp.eq.s32.totalorder %s16, 1
    %p76 = scmp.ne.s32.totalorder %s71, %s73
    %p77 = scmp.eq.s32.totalorder %s16, 0
    %p78 = por %p76, %p77
    %p79 = scmp.ne.s32.totalorder %s71, %s73
    %p80 = scmp.eq.s32.totalorder %s21, 1
    %p81 = por %p79, %p80
    %p82 = scmp.ne.s32.totalorder %s73, %s74
    %p83 = scmp.eq.s32.totalorder %s21, 0
    %p84 = por %p82, %p83
    %p85 = scmp.ne.s32.totalorder %s73, %s74
    %p86 = scmp.eq.s32.totalorder %s22, 1
    %p87 = por %p85, %p86
    %p89 = scmp.ne.s32.totalorder %s74, %s88
    %p90 = scmp.eq.s32.totalorder %s22, 0
    %p91 = por %p89, %p90
    %s93 = sadd.s32 %s92, 1
    %p96 = scmp.eq.s32.totalorder %s16, 1
    %p97 = scmp.ne.s32.totalorder %s92, %s94
    %p98 = scmp.eq.s32.totalorder %s16, 0
    %p99 = por %p97, %p98
    %p100 = scmp.ne.s32.totalorder %s92, %s94
    %p101 = scmp.eq.s32.totalorder %s21, 1
    %p102 = por %p100, %p101
    %p103 = scmp.ne.s32.totalorder %s94, %s95
    %p104 = scmp.eq.s32.totalorder %s21, 0
    %p105 = por %p103, %p104
    %p106 = scmp.ne.s32.totalorder %s94, %s95
    %p107 = scmp.eq.s32.totalorder %s22, 1
    %p108 = por %p106, %p107
    %p110 = scmp.ne.s32.totalorder %s95, %s109
    %p111 = scmp.eq.s32.totalorder %s22, 0
    %p112 = por %p110, %p111
    %s114 = sadd.s32 %s113, 1
    %p117 = scmp.eq.s32.totalorder %s16, 1
    %p118 = scmp.ne.s32.totalorder %s113, %s115
    %p119 = scmp.eq.s32.totalorder %s16, 0
    %p120 = por %p118, %p119
    %p121 = scmp.ne.s32.totalorder %s113, %s115
    %p122 = scmp.eq.s32.totalorder %s21, 1
    %p123 = por %p121, %p122
    %p124 = scmp.ne.s32.totalorder %s115, %s116
    %p125 = scmp.eq.s32.totalorder %s21, 0
    %p126 = por %p124, %p125
    %p127 = scmp.ne.s32.totalorder %s115, %s116
    %p128 = scmp.eq.s32.totalorder %s22, 1
    %p129 = por %p127, %p128
    %p131 = scmp.ne.s32.totalorder %s116, %s130
    %p132 = scmp.eq.s32.totalorder %s22, 0
    %p133 = por %p131, %p132
    %s135 = sadd.s32 %s134, 1
    %p138 = scmp.eq.s32.totalorder %s16, 1
    %p139 = scmp.ne.s32.totalorder %s134, %s136
    %p140 = scmp.eq.s32.totalorder %s16, 0
    %p141 = por %p139, %p140
    %p142 = scmp.ne.s32.totalorder %s134, %s136
    %p143 = scmp.eq.s32.totalorder %s21, 1
    %p144 = por %p142, %p143
    %p145 = scmp.ne.s32.totalorder %s136, %s137
    %p146 = scmp.eq.s32.totalorder %s21, 0
    %p147 = por %p145, %p146
    %p148 = scmp.ne.s32.totalorder %s136, %s137
    %p149 = scmp.eq.s32.totalorder %s22, 1
    %p150 = por %p148, %p149
    %p152 = scmp.ne.s32.totalorder %s137, %s151
    %p153 = scmp.eq.s32.totalorder %s22, 0
    %p154 = por %p152, %p153
    %s156 = sadd.s32 %s155, 1
    %p159 = scmp.eq.s32.totalorder %s16, 1
    %p160 = scmp.ne.s32.totalorder %s155, %s157
    %p161 = scmp.eq.s32.totalorder %s16, 0
    %p162 = por %p160, %p161
    %p163 = scmp.ne.s32.totalorder %s155, %s157
    %p164 = scmp.eq.s32.totalorder %s21, 1
    %p165 = por %p163, %p164
    %p166 = scmp.ne.s32.totalorder %s157, %s158
    %p167 = scmp.eq.s32.totalorder %s21, 0
    %p168 = por %p166, %p167
    %p169 = scmp.ne.s32.totalorder %s157, %s158
    %p170 = scmp.eq.s32.totalorder %s22, 1
    %p171 = por %p169, %p170
    %p173 = scmp.ne.s32.totalorder %s158, %s172
    %p174 = scmp.eq.s32.totalorder %s22, 0
    %p175 = por %p173, %p174
    %s177 = sadd.s32 %s176, 1
    %p180 = scmp.eq.s32.totalorder %s16, 1
    %p181 = scmp.ne.s32.totalorder %s176, %s178
    %p182 = scmp.eq.s32.totalorder %s16, 0
    %p183 = por %p181, %p182
    %p184 = scmp.ne.s32.totalorder %s176, %s178
    %p185 = scmp.eq.s32.totalorder %s21, 1
    %p186 = por %p184, %p185
    %p187 = scmp.ne.s32.totalorder %s178, %s179
    %p188 = scmp.eq.s32.totalorder %s21, 0
    %p189 = por %p187, %p188
    %p190 = scmp.ne.s32.totalorder %s178, %s179
    %p191 = scmp.eq.s32.totalorder %s22, 1
    %p192 = por %p190, %p191
    %p194 = scmp.ne.s32.totalorder %s179, %s193
    %p195 = scmp.eq.s32.totalorder %s22, 0
    %p196 = por %p194, %p195
    %s198 = sadd.s32 %s197, 1
    %p201 = scmp.eq.s32.totalorder %s16, 1
    %p202 = scmp.ne.s32.totalorder %s197, %s199
    %p203 = scmp.eq.s32.totalorder %s16, 0
    %p204 = por %p202, %p203
    %p205 = scmp.ne.s32.totalorder %s197, %s199
    %p206 = scmp.eq.s32.totalorder %s21, 1
    %p207 = por %p205, %p206
    %p208 = scmp.ne.s32.totalorder %s199, %s200
    %p209 = scmp.eq.s32.totalorder %s21, 0
    %p210 = por %p208, %p209
    %p211 = scmp.ne.s32.totalorder %s199, %s200
    %p212 = scmp.eq.s32.totalorder %s22, 1
    %p213 = por %p211, %p212
    %p215 = scmp.ne.s32.totalorder %s200, %s214
    %p216 = scmp.eq.s32.totalorder %s22, 0
    %p217 = por %p215, %p216
    %s219 = sadd.s32 %s218, 1
    %p222 = scmp.eq.s32.totalorder %s16, 1
    %p223 = scmp.ne.s32.totalorder %s218, %s220
    %p224 = scmp.eq.s32.totalorder %s16, 0
    %p225 = por %p223, %p224
    %p226 = scmp.ne.s32.totalorder %s218, %s220
    %p227 = scmp.eq.s32.totalorder %s21, 1
    %p228 = por %p226, %p227
    %p229 = scmp.ne.s32.totalorder %s220, %s221
    %p230 = scmp.eq.s32.totalorder %s21, 0
    %p231 = por %p229, %p230
    %p232 = scmp.ne.s32.totalorder %s220, %s221
    %p233 = scmp.eq.s32.totalorder %s22, 1
    %p234 = por %p232, %p233
    %p236 = scmp.ne.s32.totalorder %s221, %s235
    %p237 = scmp.eq.s32.totalorder %s22, 0
    %p238 = por %p236, %p237
    %s239 = ssub.s32 %s16, %s23
    %p240 = scmp.eq.s32.totalorder %s239, 0
    %s242 = sadd.s32 %s241, 1
    %s243 = scalar_select %p240, %s241, %s242
    %p246 = pneg %p240
    %p247 = scmp.eq.s32.totalorder %s16, 1
    %p248 = por %p246, %p247
    %p249 = scmp.ne.s32.totalorder %s241, %s244
    %p250 = scmp.eq.s32.totalorder %s16, 0
    %p251 = por %p249, %p250
    %p252 = scmp.ne.s32.totalorder %s241, %s244
    %p253 = scmp.eq.s32.totalorder %s21, 1
    %p254 = por %p252, %p253
    %p255 = scmp.ne.s32.totalorder %s244, %s245
    %p256 = scmp.eq.s32.totalorder %s21, 0
    %p257 = por %p255, %p256
    %p258 = scmp.ne.s32.totalorder %s244, %s245
    %p259 = scmp.eq.s32.totalorder %s22, 1
    %p260 = por %p258, %p259
    %p262 = scmp.ne.s32.totalorder %s245, %s261
    %p263 = scmp.eq.s32.totalorder %s22, 0
    %p264 = por %p262, %p263
    %p265 = scmp.le.s32.totalorder 1, %s16
    %p266 = scmp.lt.s32.totalorder %s16, 3
    %p267 = pnand %p265, %p266
    %p268 = pneg %p267
    // Predicated region
    $region9: #{encoder_decoder_forward.1} parent=5 // pred_check
      _
    $region10: #{encoder_decoder_forward.1} parent=5 // pred_check_branch
      %270 = sbr.rel (%p267) target = $region12
    $region11: #{encoder_decoder_forward.1} parent=5 // pred_region
      %s271 = ssub.s32 %s16, 1
      // Predicated region
      $region13: #{encoder_decoder_forward.1} parent=11 // pred_check
        %p272 = pneg %p63
      $region14: #{encoder_decoder_forward.1} parent=11 // pred_check_branch
        %274 = sbr.rel (%p272) target = $region16
      $region15: #{encoder_decoder_forward.1} parent=11 // pred_region
        _
      $region16: #{encoder_decoder_forward.1} parent=11 // pred_fallthru
        _
      // Predicated region
      $region17: #{encoder_decoder_forward.1} parent=11 // pred_check
        %p275 = pneg %p84
      $region18: #{encoder_decoder_forward.1} parent=11 // pred_check_branch
        %277 = sbr.rel (%p275) target = $region20
      $region19: #{encoder_decoder_forward.1} parent=11 // pred_region
        _
      $region20: #{encoder_decoder_forward.1} parent=11 // pred_fallthru
        _
      // Predicated region
      $region21: #{encoder_decoder_forward.1} parent=11 // pred_check
        %p278 = pneg %p105
      $region22: #{encoder_decoder_forward.1} parent=11 // pred_check_branch
        %280 = sbr.rel (%p278) target = $region24
      $region23: #{encoder_decoder_forward.1} parent=11 // pred_region
        _
      $region24: #{encoder_decoder_forward.1} parent=11 // pred_fallthru
        _
      // Predicated region
      $region25: #{encoder_decoder_forward.1} parent=11 // pred_check
        %p281 = pneg %p126
      $region26: #{encoder_decoder_forward.1} parent=11 // pred_check_branch
        %283 = sbr.rel (%p281) target = $region28
      $region27: #{encoder_decoder_forward.1} parent=11 // pred_region
        _
      $region28: #{encoder_decoder_forward.1} parent=11 // pred_fallthru
        _
      // Predicated region
      $region29: #{encoder_decoder_forward.1} parent=11 // pred_check
        %p284 = pneg %p147
      $region30: #{encoder_decoder_forward.1} parent=11 // pred_check_branch
        %286 = sbr.rel (%p284) target = $region32
      $region31: #{encoder_decoder_forward.1} parent=11 // pred_region
        _
      $region32: #{encoder_decoder_forward.1} parent=11 // pred_fallthru
        _
      // Predicated region
      $region33: #{encoder_decoder_forward.1} parent=11 // pred_check
        %p287 = pneg %p168
      $region34: #{encoder_decoder_forward.1} parent=11 // pred_check_branch
        %289 = sbr.rel (%p287) target = $region36
      $region35: #{encoder_decoder_forward.1} parent=11 // pred_region
        _
      $region36: #{encoder_decoder_forward.1} parent=11 // pred_fallthru
        _
      // Predicated region
      $region37: #{encoder_decoder_forward.1} parent=11 // pred_check
        %p290 = pneg %p189
      $region38: #{encoder_decoder_forward.1} parent=11 // pred_check_branch
        %292 = sbr.rel (%p290) target = $region40
      $region39: #{encoder_decoder_forward.1} parent=11 // pred_region
        _
      $region40: #{encoder_decoder_forward.1} parent=11 // pred_fallthru
        _
      // Predicated region
      $region41: #{encoder_decoder_forward.1} parent=11 // pred_check
        %p293 = pneg %p210
      $region42: #{encoder_decoder_forward.1} parent=11 // pred_check_branch
        %295 = sbr.rel (%p293) target = $region44
      $region43: #{encoder_decoder_forward.1} parent=11 // pred_region
        _
      $region44: #{encoder_decoder_forward.1} parent=11 // pred_fallthru
        _
      // Predicated region
      $region45: #{encoder_decoder_forward.1} parent=11 // pred_check
        %p296 = pneg %p231
      $region46: #{encoder_decoder_forward.1} parent=11 // pred_check_branch
        %298 = sbr.rel (%p296) target = $region48
      $region47: #{encoder_decoder_forward.1} parent=11 // pred_region
        _
      $region48: #{encoder_decoder_forward.1} parent=11 // pred_fallthru
        _
    $region12: #{encoder_decoder_forward.1} parent=5 // pred_fallthru
      _
    %p299 = scmp.lt.s32.totalorder %s16, 2
    // Predicated region
    $region49: #{encoder_decoder_forward.1} parent=5 // pred_check
      %p300 = pneg %p299
    $region50: #{encoder_decoder_forward.1} parent=5 // pred_check_branch
      %302 = sbr.rel (%p300) target = $region52
    $region51: #{encoder_decoder_forward.1} parent=5 // pred_region
      // Predicated region
      $region53: #{encoder_decoder_forward.1} parent=51 // pred_check
        %p303 = pneg %p36
      $region54: #{encoder_decoder_forward.1} parent=51 // pred_check_branch
        %305 = sbr.rel (%p303) target = $region56
      $region55: #{encoder_decoder_forward.1} parent=51 // pred_region
        %p306 = scmp.lt.s32.totalorder %s16, 1
        %s307 = scalar_select %p306, %s16, 1
        %s308 = smul.addr %s307, 32
        %s309 = smul.addr %s308, 8
        %s310 = scalar_lea.vmem %s0, %s309
      $region56: #{encoder_decoder_forward.1} parent=51 // pred_fallthru
        _
    $region52: #{encoder_decoder_forward.1} parent=5 // pred_fallthru
      _
    %p311 = scmp.le.s32.totalorder 1, %s16
    %p312 = scmp.lt.s32.totalorder %s16, 3
    %p313 = pnand %p311, %p312
    %p314 = pneg %p313
    // Predicated region
    $region57: #{encoder_decoder_forward.1} parent=5 // pred_check
      _
    $region58: #{encoder_decoder_forward.1} parent=5 // pred_check_branch
      %316 = sbr.rel (%p313) target = $region60
    $region59: #{encoder_decoder_forward.1} parent=5 // pred_region
      %s317 = ssub.s32 %s16, 1
      %p318 = scmp.lt.s32.totalorder %s21, 1
      %s319 = scalar_select %p318, %s21, 1
      %s320 = smul.addr %s319, 32
      %s321 = smul.addr %s320, 8
      %s322 = scalar_lea.vmem %s0, %s321
      %p323 = pneg %p42
      %p324 = pneg %p39
      %p325 = pneg %p63
      %p326 = pneg %p60
      %p327 = pneg %p84
      %p328 = pneg %p81
      %p329 = pneg %p105
      %p330 = pneg %p102
      %p331 = pneg %p126
      %p332 = pneg %p123
      %p333 = pneg %p147
      %p334 = pneg %p144
      %p335 = pneg %p168
      %p336 = pneg %p165
      %p337 = pneg %p189
      %p338 = pneg %p186
      %p339 = pneg %p210
      %p340 = pneg %p207
      %p341 = pneg %p231
      %p342 = pneg %p228
      %p343 = pneg %p257
      %p344 = pneg %p254
      %p345 = scmp.lt.s32.totalorder %s21, 1
      %s346 = scalar_select %p345, %s21, 1
      %s347 = smul.addr %s346, 2
      %s348 = smul.addr %s347, 2
      %s349 = scalar_lea.vmem %s10, %s348
      %p350 = scmp.lt.s32.totalorder %s21, 1
      %s351 = scalar_select %p350, %s21, 1
      %s352 = smul.addr %s351, 32
      %s353 = smul.addr %s352, 8
      %s354 = scalar_lea.vmem %s0, %s353
      %p355 = scmp.lt.s32.totalorder %s21, 1
      %s356 = scalar_select %p355, %s21, 1
      %s357 = smul.addr %s356, 2
      %s358 = smul.addr %s357, 2
      %s359 = scalar_lea.vmem %s10, %s358
      %vm360 = vcmask 31744
      %361 = vst.msk [vmem:[#allocation2] sm:$0xff] %vm360, 0.0
      %362 = vst.msk [vmem:[#allocation2 + $0x8] sm:$0xff] %vm360, 0.0
      %vm363 = vcmask 25600
      %364 = vst.msk [vmem:[#allocation2 + $0x10] sm:$0x3] %vm363, 0.0
      %365 = vst.msk [vmem:[#allocation2 + $0x18] sm:$0xff] %vm360, 0.0
      %366 = vst.msk [vmem:[#allocation2 + $0x20] sm:$0xff] %vm360, 0.0
      %367 = vst.msk [vmem:[#allocation2 + $0x28] sm:$0x3] %vm363, 0.0
      %368 = vst.msk [vmem:[#allocation2 + $0x30] sm:$0xff] %vm360, 0.0
      %369 = vst.msk [vmem:[#allocation2 + $0x38] sm:$0xff] %vm360, 0.0
      %370 = vst.msk [vmem:[#allocation2 + $0x40] sm:$0x3] %vm363, 0.0
      %371 = vst.msk [vmem:[#allocation2 + $0x48] sm:$0xff] %vm360, 0.0
      %372 = vst.msk [vmem:[#allocation2 + $0x50] sm:$0xff] %vm360, 0.0
      %373 = vst.msk [vmem:[#allocation2 + $0x58] sm:$0x3] %vm363, 0.0
      %374 = vst.msk [vmem:[#allocation2 + $0x60] sm:$0xff] %vm360, 0.0
      %375 = vst.msk [vmem:[#allocation2 + $0x68] sm:$0xff] %vm360, 0.0
      %376 = vst.msk [vmem:[#allocation2 + $0x70] sm:$0x3] %vm363, 0.0
      %377 = vst.msk [vmem:[#allocation2 + $0x78] sm:$0xff] %vm360, 0.0
      %378 = vst.msk [vmem:[#allocation2 + $0x80] sm:$0xff] %vm360, 0.0
      %379 = vst.msk [vmem:[#allocation2 + $0x88] sm:$0x3] %vm363, 0.0
      %380 = vst.msk [vmem:[#allocation2 + $0x90] sm:$0xff] %vm360, 0.0
      %381 = vst.msk [vmem:[#allocation2 + $0x98] sm:$0xff] %vm360, 0.0
      %382 = vst.msk [vmem:[#allocation2 + $0xa0] sm:$0x3] %vm363, 0.0
      %383 = vst.msk [vmem:[#allocation2 + $0xa8] sm:$0xff] %vm360, 0.0
      %384 = vst.msk [vmem:[#allocation2 + $0xb0] sm:$0xff] %vm360, 0.0
      %385 = vst.msk [vmem:[#allocation2 + $0xb8] sm:$0x3] %vm363, 0.0
      %386 = vst.msk [vmem:[#allocation2 + $0xc0] sm:$0xff] %vm360, 0.0
      %387 = vst.msk [vmem:[#allocation2 + $0xc8] sm:$0xff] %vm360, 0.0
      %388 = vst.msk [vmem:[#allocation2 + $0xd0] sm:$0x3] %vm363, 0.0
      %389 = vst.msk [vmem:[#allocation2 + $0xd8] sm:$0xff] %vm360, 0.0
      %390 = vst.msk [vmem:[#allocation2 + $0xe0] sm:$0xff] %vm360, 0.0
      %391 = vst.msk [vmem:[#allocation2 + $0xe8] sm:$0x3] %vm363, 0.0
      %392 = vst.msk [vmem:[#allocation2 + $0xf0] sm:$0xff] %vm360, 0.0
      %393 = vst.msk [vmem:[#allocation2 + $0xf8] sm:$0xff] %vm360, 0.0
      %394 = vst.msk [vmem:[#allocation2 + $0x100] sm:$0x3] %vm363, 0.0
      %395 = vst.msk [vmem:[#allocation2 + $0x108] sm:$0xff] %vm360, 0.0
      %396 = vst.msk [vmem:[#allocation2 + $0x110] sm:$0xff] %vm360, 0.0
      %397 = vst.msk [vmem:[#allocation2 + $0x118] sm:$0x3] %vm363, 0.0
      %398 = vst.msk [vmem:[#allocation2 + $0x120] sm:$0xff] %vm360, 0.0
      %399 = vst.msk [vmem:[#allocation2 + $0x128] sm:$0xff] %vm360, 0.0
      %400 = vst.msk [vmem:[#allocation2 + $0x130] sm:$0x3] %vm363, 0.0
      %401 = vst.msk [vmem:[#allocation2 + $0x138] sm:$0xff] %vm360, 0.0
      %402 = vst.msk [vmem:[#allocation2 + $0x140] sm:$0xff] %vm360, 0.0
      %403 = vst.msk [vmem:[#allocation2 + $0x148] sm:$0x3] %vm363, 0.0
      %404 = vst.msk [vmem:[#allocation2 + $0x150] sm:$0xff] %vm360, 0.0
      %405 = vst.msk [vmem:[#allocation2 + $0x158] sm:$0xff] %vm360, 0.0
      %406 = vst.msk [vmem:[#allocation2 + $0x160] sm:$0x3] %vm363, 0.0
      %407 = vst.msk [vmem:[#allocation2 + $0x168] sm:$0xff] %vm360, 0.0
      %408 = vst.msk [vmem:[#allocation2 + $0x170] sm:$0xff] %vm360, 0.0
      %409 = vst.msk [vmem:[#allocation2 + $0x178] sm:$0x3] %vm363, 0.0
      %410 = vst.msk [vmem:[#allocation2 + $0x180] sm:$0xff] %vm360, 0.0
      %411 = vst.msk [vmem:[#allocation2 + $0x188] sm:$0xff] %vm360, 0.0
      %412 = vst.msk [vmem:[#allocation2 + $0x190] sm:$0x3] %vm363, 0.0
      %413 = vst.msk [vmem:[#allocation2 + $0x198] sm:$0xff] %vm360, 0.0
      %414 = vst.msk [vmem:[#allocation2 + $0x1a0] sm:$0xff] %vm360, 0.0
      %415 = vst.msk [vmem:[#allocation2 + $0x1a8] sm:$0x3] %vm363, 0.0
      %vm416 = vcmask 64512
      %417 = vst.msk [vmem:[#allocation3] sm:$0xff] %vm416, 0.0
      %418 = vst.msk [vmem:[#allocation3 + $0x8] sm:$0xff] %vm416, 0.0
      %vm419 = vcmask 58368
      %420 = vst.msk [vmem:[#allocation3 + $0x10] sm:$0x3] %vm419, 0.0
      %421 = vst.msk [vmem:[#allocation3 + $0x18] sm:$0xff] %vm416, 0.0
      %422 = vst.msk [vmem:[#allocation3 + $0x20] sm:$0xff] %vm416, 0.0
      %423 = vst.msk [vmem:[#allocation3 + $0x28] sm:$0x3] %vm419, 0.0
      %424 = vst.msk [vmem:[#allocation3 + $0x30] sm:$0xff] %vm416, 0.0
      %425 = vst.msk [vmem:[#allocation3 + $0x38] sm:$0xff] %vm416, 0.0
      %426 = vst.msk [vmem:[#allocation3 + $0x40] sm:$0x3] %vm419, 0.0
      %427 = vst.msk [vmem:[#allocation3 + $0x48] sm:$0xff] %vm416, 0.0
      %428 = vst.msk [vmem:[#allocation3 + $0x50] sm:$0xff] %vm416, 0.0
      %429 = vst.msk [vmem:[#allocation3 + $0x58] sm:$0x3] %vm419, 0.0
      %430 = vst.msk [vmem:[#allocation3 + $0x60] sm:$0xff] %vm416, 0.0
      %431 = vst.msk [vmem:[#allocation3 + $0x68] sm:$0xff] %vm416, 0.0
      %432 = vst.msk [vmem:[#allocation3 + $0x70] sm:$0x3] %vm419, 0.0
      %433 = vst.msk [vmem:[#allocation3 + $0x78] sm:$0xff] %vm416, 0.0
      %434 = vst.msk [vmem:[#allocation3 + $0x80] sm:$0xff] %vm416, 0.0
      %435 = vst.msk [vmem:[#allocation3 + $0x88] sm:$0x3] %vm419, 0.0
      %436 = vst.msk [vmem:[#allocation3 + $0x90] sm:$0xff] %vm416, 0.0
      %437 = vst.msk [vmem:[#allocation3 + $0x98] sm:$0xff] %vm416, 0.0
      %438 = vst.msk [vmem:[#allocation3 + $0xa0] sm:$0x3] %vm419, 0.0
      %439 = vst.msk [vmem:[#allocation3 + $0xa8] sm:$0xff] %vm416, 0.0
      %440 = vst.msk [vmem:[#allocation3 + $0xb0] sm:$0xff] %vm416, 0.0
      %441 = vst.msk [vmem:[#allocation3 + $0xb8] sm:$0x3] %vm419, 0.0
      %442 = vst.msk [vmem:[#allocation3 + $0xc0] sm:$0xff] %vm416, 0.0
      %443 = vst.msk [vmem:[#allocation3 + $0xc8] sm:$0xff] %vm416, 0.0
      %444 = vst.msk [vmem:[#allocation3 + $0xd0] sm:$0x3] %vm419, 0.0
      %445 = vst.msk [vmem:[#allocation3 + $0xd8] sm:$0xff] %vm416, 0.0
      %446 = vst.msk [vmem:[#allocation3 + $0xe0] sm:$0xff] %vm416, 0.0
      %447 = vst.msk [vmem:[#allocation3 + $0xe8] sm:$0x3] %vm419, 0.0
      %448 = vst.msk [vmem:[#allocation3 + $0xf0] sm:$0xff] %vm416, 0.0
      %449 = vst.msk [vmem:[#allocation3 + $0xf8] sm:$0xff] %vm416, 0.0
      %450 = vst.msk [vmem:[#allocation3 + $0x100] sm:$0x3] %vm419, 0.0
      %451 = vst.msk [vmem:[#allocation3 + $0x108] sm:$0xff] %vm416, 0.0
      %452 = vst.msk [vmem:[#allocation3 + $0x110] sm:$0xff] %vm416, 0.0
      %453 = vst.msk [vmem:[#allocation3 + $0x118] sm:$0x3] %vm419, 0.0
      %454 = vst.msk [vmem:[#allocation3 + $0x120] sm:$0xff] %vm416, 0.0
      %455 = vst.msk [vmem:[#allocation3 + $0x128] sm:$0xff] %vm416, 0.0
      %456 = vst.msk [vmem:[#allocation3 + $0x130] sm:$0x3] %vm419, 0.0
      %457 = vst.msk [vmem:[#allocation3 + $0x138] sm:$0xff] %vm416, 0.0
      %458 = vst.msk [vmem:[#allocation3 + $0x140] sm:$0xff] %vm416, 0.0
      %459 = vst.msk [vmem:[#allocation3 + $0x148] sm:$0x3] %vm419, 0.0
      %460 = vst.msk [vmem:[#allocation3 + $0x150] sm:$0xff] %vm416, 0.0
      %461 = vst.msk [vmem:[#allocation3 + $0x158] sm:$0xff] %vm416, 0.0
      %462 = vst.msk [vmem:[#allocation3 + $0x160] sm:$0x3] %vm419, 0.0
      %463 = vst.msk [vmem:[#allocation3 + $0x168] sm:$0xff] %vm416, 0.0
      %464 = vst.msk [vmem:[#allocation3 + $0x170] sm:$0xff] %vm416, 0.0
      %465 = vst.msk [vmem:[#allocation3 + $0x178] sm:$0x3] %vm419, 0.0
      %466 = vst.msk [vmem:[#allocation3 + $0x180] sm:$0xff] %vm416, 0.0
      %467 = vst.msk [vmem:[#allocation3 + $0x188] sm:$0xff] %vm416, 0.0
      %468 = vst.msk [vmem:[#allocation3 + $0x190] sm:$0x3] %vm419, 0.0
      %469 = vst.msk [vmem:[#allocation3 + $0x198] sm:$0xff] %vm416, 0.0
      %470 = vst.msk [vmem:[#allocation3 + $0x1a0] sm:$0xff] %vm416, 0.0
      %471 = vst.msk [vmem:[#allocation3 + $0x1a8] sm:$0x3] %vm419, 0.0
      %vm472 = vcmask 195584
      %473 = vst.msk [vmem:[#allocation4] sm:$0xff] %vm472, 0.0
      %474 = vst.msk [vmem:[#allocation4 + $0x8] sm:$0xff] %vm472, 0.0
      %vm475 = vcmask 189440
      %476 = vst.msk [vmem:[#allocation4 + $0x10] sm:$0x3] %vm475, 0.0
      %477 = vst.msk [vmem:[#allocation4 + $0x18] sm:$0xff] %vm472, 0.0
      %478 = vst.msk [vmem:[#allocation4 + $0x20] sm:$0xff] %vm472, 0.0
      %479 = vst.msk [vmem:[#allocation4 + $0x28] sm:$0x3] %vm475, 0.0
      %480 = vst.msk [vmem:[#allocation4 + $0x30] sm:$0xff] %vm472, 0.0
      %481 = vst.msk [vmem:[#allocation4 + $0x38] sm:$0xff] %vm472, 0.0
      %482 = vst.msk [vmem:[#allocation4 + $0x40] sm:$0x3] %vm475, 0.0
      %483 = vst.msk [vmem:[#allocation4 + $0x48] sm:$0xff] %vm472, 0.0
      %484 = vst.msk [vmem:[#allocation4 + $0x50] sm:$0xff] %vm472, 0.0
      %485 = vst.msk [vmem:[#allocation4 + $0x58] sm:$0x3] %vm475, 0.0
      %486 = vst.msk [vmem:[#allocation4 + $0x60] sm:$0xff] %vm472, 0.0
      %487 = vst.msk [vmem:[#allocation4 + $0x68] sm:$0xff] %vm472, 0.0
      %488 = vst.msk [vmem:[#allocation4 + $0x70] sm:$0x3] %vm475, 0.0
      %489 = vst.msk [vmem:[#allocation4 + $0x78] sm:$0xff] %vm472, 0.0
      %490 = vst.msk [vmem:[#allocation4 + $0x80] sm:$0xff] %vm472, 0.0
      %491 = vst.msk [vmem:[#allocation4 + $0x88] sm:$0x3] %vm475, 0.0
      %492 = vst.msk [vmem:[#allocation4 + $0x90] sm:$0xff] %vm472, 0.0
      %493 = vst.msk [vmem:[#allocation4 + $0x98] sm:$0xff] %vm472, 0.0
      %494 = vst.msk [vmem:[#allocation4 + $0xa0] sm:$0x3] %vm475, 0.0
      %495 = vst.msk [vmem:[#allocation4 + $0xa8] sm:$0xff] %vm472, 0.0
      %496 = vst.msk [vmem:[#allocation4 + $0xb0] sm:$0xff] %vm472, 0.0
      %497 = vst.msk [vmem:[#allocation4 + $0xb8] sm:$0x3] %vm475, 0.0
      %498 = vst.msk [vmem:[#allocation4 + $0xc0] sm:$0xff] %vm472, 0.0
      %499 = vst.msk [vmem:[#allocation4 + $0xc8] sm:$0xff] %vm472, 0.0
      %500 = vst.msk [vmem:[#allocation4 + $0xd0] sm:$0x3] %vm475, 0.0
      %501 = vst.msk [vmem:[#allocation4 + $0xd8] sm:$0xff] %vm472, 0.0
      %502 = vst.msk [vmem:[#allocation4 + $0xe0] sm:$0xff] %vm472, 0.0
      %503 = vst.msk [vmem:[#allocation4 + $0xe8] sm:$0x3] %vm475, 0.0
      %504 = vst.msk [vmem:[#allocation4 + $0xf0] sm:$0xff] %vm472, 0.0
      %505 = vst.msk [vmem:[#allocation4 + $0xf8] sm:$0xff] %vm472, 0.0
      %506 = vst.msk [vmem:[#allocation4 + $0x100] sm:$0x3] %vm475, 0.0
      %507 = vst.msk [vmem:[#allocation4 + $0x108] sm:$0xff] %vm472, 0.0
      %508 = vst.msk [vmem:[#allocation4 + $0x110] sm:$0xff] %vm472, 0.0
      %509 = vst.msk [vmem:[#allocation4 + $0x118] sm:$0x3] %vm475, 0.0
      %510 = vst.msk [vmem:[#allocation4 + $0x120] sm:$0xff] %vm472, 0.0
      %511 = vst.msk [vmem:[#allocation4 + $0x128] sm:$0xff] %vm472, 0.0
      %512 = vst.msk [vmem:[#allocation4 + $0x130] sm:$0x3] %vm475, 0.0
      %513 = vst.msk [vmem:[#allocation4 + $0x138] sm:$0xff] %vm472, 0.0
      %514 = vst.msk [vmem:[#allocation4 + $0x140] sm:$0xff] %vm472, 0.0
      %515 = vst.msk [vmem:[#allocation4 + $0x148] sm:$0x3] %vm475, 0.0
      %516 = vst.msk [vmem:[#allocation4 + $0x150] sm:$0xff] %vm472, 0.0
      %517 = vst.msk [vmem:[#allocation4 + $0x158] sm:$0xff] %vm472, 0.0
      %518 = vst.msk [vmem:[#allocation4 + $0x160] sm:$0x3] %vm475, 0.0
      %519 = vst.msk [vmem:[#allocation4 + $0x168] sm:$0xff] %vm472, 0.0
      %520 = vst.msk [vmem:[#allocation4 + $0x170] sm:$0xff] %vm472, 0.0
      %521 = vst.msk [vmem:[#allocation4 + $0x178] sm:$0x3] %vm475, 0.0
      %522 = vst.msk [vmem:[#allocation4 + $0x180] sm:$0xff] %vm472, 0.0
      %523 = vst.msk [vmem:[#allocation4 + $0x188] sm:$0xff] %vm472, 0.0
      %524 = vst.msk [vmem:[#allocation4 + $0x190] sm:$0x3] %vm475, 0.0
      %525 = vst.msk [vmem:[#allocation4 + $0x198] sm:$0xff] %vm472, 0.0
      %526 = vst.msk [vmem:[#allocation4 + $0x1a0] sm:$0xff] %vm472, 0.0
      %527 = vst.msk [vmem:[#allocation4 + $0x1a8] sm:$0x3] %vm475, 0.0
      %v528 = vld [vmem:[%s354] sm:$0xff]
      %v529 = vld [vmem:[%s354 + $0x8] sm:$0xff]
      %v530 = vld [vmem:[%s354 + $0x10] sm:$0xff]
      %v531 = vld [vmem:[%s354 + $0x18] sm:$0xff]
      %v532 = vld [vmem:[%s354 + $0x20] sm:$0xff]
      %v533 = vld [vmem:[%s354 + $0x28] sm:$0xff]
      %v534 = vld [vmem:[%s354 + $0x30] sm:$0xff]
      %v535 = vld [vmem:[%s354 + $0x38] sm:$0xff]
      %v536 = vld [vmem:[%s354 + $0x40] sm:$0xff]
      %v537 = vld [vmem:[%s354 + $0x48] sm:$0xff]
      %v538 = vld [vmem:[%s354 + $0x50] sm:$0xff]
      %v539 = vld [vmem:[%s354 + $0x58] sm:$0xff]
      %v540 = vld [vmem:[%s354 + $0x60] sm:$0xff]
      %v541 = vld [vmem:[%s354 + $0x68] sm:$0xff]
      %v542 = vld [vmem:[%s354 + $0x70] sm:$0xff]
      %v543 = vld [vmem:[%s354 + $0x78] sm:$0xff]
      %v544 = vld [vmem:[%s354 + $0x80] sm:$0xff]
      %v545 = vld [vmem:[%s354 + $0x88] sm:$0xff]
      %v546 = vld [vmem:[%s354 + $0x90] sm:$0xff]
      %v547 = vld [vmem:[%s354 + $0x98] sm:$0xff]
      %v548 = vld [vmem:[%s354 + $0xa0] sm:$0xff]
      %v549 = vld [vmem:[%s354 + $0xa8] sm:$0xff]
      %v550 = vld [vmem:[%s354 + $0xb0] sm:$0xff]
      %v551 = vld [vmem:[%s354 + $0xb8] sm:$0xff]
      %v552 = vld [vmem:[%s354 + $0xc0] sm:$0xff]
      %v553 = vld [vmem:[%s354 + $0xc8] sm:$0xff]
      %v554 = vld [vmem:[%s354 + $0xd0] sm:$0xff]
      %v555 = vld [vmem:[%s354 + $0xd8] sm:$0xff]
      %v556 = vld [vmem:[%s354 + $0xe0] sm:$0xff]
      %v557 = vld [vmem:[%s354 + $0xe8] sm:$0xff]
      %v558 = vld [vmem:[%s354 + $0xf0] sm:$0xff]
      %v559 = vld [vmem:[%s354 + $0xf8] sm:$0xff]
      %s560 = scalar_lea.vmem [#allocation2], 24
      %561 = vst.msk [vmem:[%s560 + $0x1] sm:$0xff] %vm360, %v528
      %562 = vst.msk [vmem:[%s560 + $0x9] sm:$0xff] %vm360, %v529
      %563 = vst.msk [vmem:[%s560 + $0x19] sm:$0xff] %vm360, %v530
      %564 = vst.msk [vmem:[%s560 + $0x21] sm:$0xff] %vm360, %v531
      %565 = vst.msk [vmem:[%s560 + $0x31] sm:$0xff] %vm360, %v532
      %566 = vst.msk [vmem:[%s560 + $0x39] sm:$0xff] %vm360, %v533
      %567 = vst.msk [vmem:[%s560 + $0x49] sm:$0xff] %vm360, %v534
      %568 = vst.msk [vmem:[%s560 + $0x51] sm:$0xff] %vm360, %v535
      %569 = vst.msk [vmem:[%s560 + $0x61] sm:$0xff] %vm360, %v536
      %570 = vst.msk [vmem:[%s560 + $0x69] sm:$0xff] %vm360, %v537
      %571 = vst.msk [vmem:[%s560 + $0x79] sm:$0xff] %vm360, %v538
      %572 = vst.msk [vmem:[%s560 + $0x81] sm:$0xff] %vm360, %v539
      %573 = vst.msk [vmem:[%s560 + $0x91] sm:$0xff] %vm360, %v540
      %574 = vst.msk [vmem:[%s560 + $0x99] sm:$0xff] %vm360, %v541
      %575 = vst.msk [vmem:[%s560 + $0xa9] sm:$0xff] %vm360, %v542
      %576 = vst.msk [vmem:[%s560 + $0xb1] sm:$0xff] %vm360, %v543
      %577 = vst.msk [vmem:[%s560 + $0xc1] sm:$0xff] %vm360, %v544
      %578 = vst.msk [vmem:[%s560 + $0xc9] sm:$0xff] %vm360, %v545
      %579 = vst.msk [vmem:[%s560 + $0xd9] sm:$0xff] %vm360, %v546
      %580 = vst.msk [vmem:[%s560 + $0xe1] sm:$0xff] %vm360, %v547
      %581 = vst.msk [vmem:[%s560 + $0xf1] sm:$0xff] %vm360, %v548
      %582 = vst.msk [vmem:[%s560 + $0xf9] sm:$0xff] %vm360, %v549
      %583 = vst.msk [vmem:[%s560 + $0x109] sm:$0xff] %vm360, %v550
      %584 = vst.msk [vmem:[%s560 + $0x111] sm:$0xff] %vm360, %v551
      %585 = vst.msk [vmem:[%s560 + $0x121] sm:$0xff] %vm360, %v552
      %586 = vst.msk [vmem:[%s560 + $0x129] sm:$0xff] %vm360, %v553
      %587 = vst.msk [vmem:[%s560 + $0x139] sm:$0xff] %vm360, %v554
      %588 = vst.msk [vmem:[%s560 + $0x141] sm:$0xff] %vm360, %v555
      %589 = vst.msk [vmem:[%s560 + $0x151] sm:$0xff] %vm360, %v556
      %590 = vst.msk [vmem:[%s560 + $0x159] sm:$0xff] %vm360, %v557
      %591 = vst.msk [vmem:[%s560 + $0x169] sm:$0xff] %vm360, %v558
      %592 = vst.msk [vmem:[%s560 + $0x171] sm:$0xff] %vm360, %v559
      %v593 = vld [vmem:[#allocation2] sm:$0xff]
      %v594 = vld [vmem:[#allocation2 + $0x8] sm:$0xff]
      %v595 = vld [vmem:[#allocation2 + $0x18] sm:$0xff]
      %v596 = vld [vmem:[#allocation2 + $0x20] sm:$0xff]
      %v597 = vld [vmem:[#allocation2 + $0x30] sm:$0xff]
      %v598 = vld [vmem:[#allocation2 + $0x38] sm:$0xff]
      %v599 = vld [vmem:[#allocation2 + $0x48] sm:$0xff]
      %v600 = vld [vmem:[#allocation2 + $0x50] sm:$0xff]
      %v601 = vld [vmem:[#allocation2 + $0x60] sm:$0xff]
      %v602 = vld [vmem:[#allocation2 + $0x68] sm:$0xff]
      %v603 = vld [vmem:[#allocation2 + $0x78] sm:$0xff]
      %v604 = vld [vmem:[#allocation2 + $0x80] sm:$0xff]
      %v605 = vld [vmem:[#allocation2 + $0x90] sm:$0xff]
      %v606 = vld [vmem:[#allocation2 + $0x98] sm:$0xff]
      %v607 = vld [vmem:[#allocation2 + $0xa8] sm:$0xff]
      %v608 = vld [vmem:[#allocation2 + $0xb0] sm:$0xff]
      %v609 = vld [vmem:[#allocation2 + $0xc0] sm:$0xff]
      %v610 = vld [vmem:[#allocation2 + $0xc8] sm:$0xff]
      %v611 = vld [vmem:[#allocation2 + $0xd8] sm:$0xff]
      %v612 = vld [vmem:[#allocation2 + $0xe0] sm:$0xff]
      %v613 = vld [vmem:[#allocation2 + $0xf0] sm:$0xff]
      %v614 = vld [vmem:[#allocation2 + $0xf8] sm:$0xff]
      %v615 = vld [vmem:[#allocation2 + $0x108] sm:$0xff]
      %v616 = vld [vmem:[#allocation2 + $0x110] sm:$0xff]
      %v617 = vld [vmem:[#allocation2 + $0x120] sm:$0xff]
      %v618 = vld [vmem:[#allocation2 + $0x128] sm:$0xff]
      %v619 = vld [vmem:[#allocation2 + $0x138] sm:$0xff]
      %v620 = vld [vmem:[#allocation2 + $0x140] sm:$0xff]
      %v621 = vld [vmem:[#allocation2 + $0x150] sm:$0xff]
      %v622 = vld [vmem:[#allocation2 + $0x158] sm:$0xff]
      %v623 = vld [vmem:[#allocation2 + $0x168] sm:$0xff]
      %v624 = vld [vmem:[#allocation2 + $0x170] sm:$0xff]
      %v625 = vld [vmem:[#allocation2 + $0x1] sm:$0xff]
      %v626 = vld [vmem:[#allocation2 + $0x9] sm:$0xff]
      %v627 = vld [vmem:[#allocation2 + $0x19] sm:$0xff]
      %v628 = vld [vmem:[#allocation2 + $0x21] sm:$0xff]
      %v629 = vld [vmem:[#allocation2 + $0x31] sm:$0xff]
      %v630 = vld [vmem:[#allocation2 + $0x39] sm:$0xff]
      %v631 = vld [vmem:[#allocation2 + $0x49] sm:$0xff]
      %v632 = vld [vmem:[#allocation2 + $0x51] sm:$0xff]
      %v633 = vld [vmem:[#allocation2 + $0x61] sm:$0xff]
      %v634 = vld [vmem:[#allocation2 + $0x69] sm:$0xff]
      %v635 = vld [vmem:[#allocation2 + $0x79] sm:$0xff]
      %v636 = vld [vmem:[#allocation2 + $0x81] sm:$0xff]
      %v637 = vld [vmem:[#allocation2 + $0x91] sm:$0xff]
      %v638 = vld [vmem:[#allocation2 + $0x99] sm:$0xff]
      %v639 = vld [vmem:[#allocation2 + $0xa9] sm:$0xff]
      %v640 = vld [vmem:[#allocation2 + $0xb1] sm:$0xff]
      %v641 = vld [vmem:[#allocation2 + $0xc1] sm:$0xff]
      %v642 = vld [vmem:[#allocation2 + $0xc9] sm:$0xff]
      %v643 = vld [vmem:[#allocation2 + $0xd9] sm:$0xff]
      %v644 = vld [vmem:[#allocation2 + $0xe1] sm:$0xff]
      %v645 = vld [vmem:[#allocation2 + $0xf1] sm:$0xff]
      %v646 = vld [vmem:[#allocation2 + $0xf9] sm:$0xff]
      %v647 = vld [vmem:[#allocation2 + $0x109] sm:$0xff]
      %v648 = vld [vmem:[#allocation2 + $0x111] sm:$0xff]
      %v649 = vld [vmem:[#allocation2 + $0x121] sm:$0xff]
      %v650 = vld [vmem:[#allocation2 + $0x129] sm:$0xff]
      %v651 = vld [vmem:[#allocation2 + $0x139] sm:$0xff]
      %v652 = vld [vmem:[#allocation2 + $0x141] sm:$0xff]
      %v653 = vld [vmem:[#allocation2 + $0x151] sm:$0xff]
      %v654 = vld [vmem:[#allocation2 + $0x159] sm:$0xff]
      %v655 = vld [vmem:[#allocation2 + $0x169] sm:$0xff]
      %v656 = vld [vmem:[#allocation2 + $0x171] sm:$0xff]
      %v657 = vld [vmem:[#allocation2 + $0x2] sm:$0xff]
      %v658 = vld [vmem:[#allocation2 + $0xa] sm:$0xff]
      %v659 = vld [vmem:[#allocation2 + $0x1a] sm:$0xff]
      %v660 = vld [vmem:[#allocation2 + $0x22] sm:$0xff]
      %v661 = vld [vmem:[#allocation2 + $0x32] sm:$0xff]
      %v662 = vld [vmem:[#allocation2 + $0x3a] sm:$0xff]
      %v663 = vld [vmem:[#allocation2 + $0x4a] sm:$0xff]
      %v664 = vld [vmem:[#allocation2 + $0x52] sm:$0xff]
      %v665 = vld [vmem:[#allocation2 + $0x62] sm:$0xff]
      %v666 = vld [vmem:[#allocation2 + $0x6a] sm:$0xff]
      %v667 = vld [vmem:[#allocation2 + $0x7a] sm:$0xff]
      %v668 = vld [vmem:[#allocation2 + $0x82] sm:$0xff]
      %v669 = vld [vmem:[#allocation2 + $0x92] sm:$0xff]
      %v670 = vld [vmem:[#allocation2 + $0x9a] sm:$0xff]
      %v671 = vld [vmem:[#allocation2 + $0xaa] sm:$0xff]
      %v672 = vld [vmem:[#allocation2 + $0xb2] sm:$0xff]
      %v673 = vld [vmem:[#allocation2 + $0xc2] sm:$0xff]
      %v674 = vld [vmem:[#allocation2 + $0xca] sm:$0xff]
      %v675 = vld [vmem:[#allocation2 + $0xda] sm:$0xff]
      %v676 = vld [vmem:[#allocation2 + $0xe2] sm:$0xff]
      %v677 = vld [vmem:[#allocation2 + $0xf2] sm:$0xff]
      %v678 = vld [vmem:[#allocation2 + $0xfa] sm:$0xff]
      %v679 = vld [vmem:[#allocation2 + $0x10a] sm:$0xff]
      %v680 = vld [vmem:[#allocation2 + $0x112] sm:$0xff]
      %v681 = vld [vmem:[#allocation2 + $0x122] sm:$0xff]
      %v682 = vld [vmem:[#allocation2 + $0x12a] sm:$0xff]
      %v683 = vld [vmem:[#allocation2 + $0x13a] sm:$0xff]
      %v684 = vld [vmem:[#allocation2 + $0x142] sm:$0xff]
      %v685 = vld [vmem:[#allocation2 + $0x152] sm:$0xff]
      %v686 = vld [vmem:[#allocation2 + $0x15a] sm:$0xff]
      %v687 = vld [vmem:[#allocation2 + $0x16a] sm:$0xff]
      %v688 = vld [vmem:[#allocation2 + $0x172] sm:$0xff]
      %v689 = vld [vmem:[%s560] sm:$0xff]
      %v690 = vld [vmem:[%s560 + $0x8] sm:$0xff]
      %v691 = vld [vmem:[%s560 + $0x18] sm:$0xff]
      %v692 = vld [vmem:[%s560 + $0x20] sm:$0xff]
      %v693 = vld [vmem:[%s560 + $0x30] sm:$0xff]
      %v694 = vld [vmem:[%s560 + $0x38] sm:$0xff]
      %v695 = vld [vmem:[%s560 + $0x48] sm:$0xff]
      %v696 = vld [vmem:[%s560 + $0x50] sm:$0xff]
      %v697 = vld [vmem:[%s560 + $0x60] sm:$0xff]
      %v698 = vld [vmem:[%s560 + $0x68] sm:$0xff]
      %v699 = vld [vmem:[%s560 + $0x78] sm:$0xff]
      %v700 = vld [vmem:[%s560 + $0x80] sm:$0xff]
      %v701 = vld [vmem:[%s560 + $0x90] sm:$0xff]
      %v702 = vld [vmem:[%s560 + $0x98] sm:$0xff]
      %v703 = vld [vmem:[%s560 + $0xa8] sm:$0xff]
      %v704 = vld [vmem:[%s560 + $0xb0] sm:$0xff]
      %v705 = vld [vmem:[%s560 + $0xc0] sm:$0xff]
      %v706 = vld [vmem:[%s560 + $0xc8] sm:$0xff]
      %v707 = vld [vmem:[%s560 + $0xd8] sm:$0xff]
      %v708 = vld [vmem:[%s560 + $0xe0] sm:$0xff]
      %v709 = vld [vmem:[%s560 + $0xf0] sm:$0xff]
      %v710 = vld [vmem:[%s560 + $0xf8] sm:$0xff]
      %v711 = vld [vmem:[%s560 + $0x108] sm:$0xff]
      %v712 = vld [vmem:[%s560 + $0x110] sm:$0xff]
      %v713 = vld [vmem:[%s560 + $0x120] sm:$0xff]
      %v714 = vld [vmem:[%s560 + $0x128] sm:$0xff]
      %v715 = vld [vmem:[%s560 + $0x138] sm:$0xff]
      %v716 = vld [vmem:[%s560 + $0x140] sm:$0xff]
      %v717 = vld [vmem:[%s560 + $0x150] sm:$0xff]
      %v718 = vld [vmem:[%s560 + $0x158] sm:$0xff]
      %v719 = vld [vmem:[%s560 + $0x168] sm:$0xff]
      %v720 = vld [vmem:[%s560 + $0x170] sm:$0xff]
      %v721 = vld [vmem:[%s560 + $0x1] sm:$0xff]
      %v722 = vld [vmem:[%s560 + $0x9] sm:$0xff]
      %v723 = vld [vmem:[%s560 + $0x19] sm:$0xff]
      %v724 = vld [vmem:[%s560 + $0x21] sm:$0xff]
      %v725 = vld [vmem:[%s560 + $0x31] sm:$0xff]
      %v726 = vld [vmem:[%s560 + $0x39] sm:$0xff]
      %v727 = vld [vmem:[%s560 + $0x49] sm:$0xff]
      %v728 = vld [vmem:[%s560 + $0x51] sm:$0xff]
      %v729 = vld [vmem:[%s560 + $0x61] sm:$0xff]
      %v730 = vld [vmem:[%s560 + $0x69] sm:$0xff]
      %v731 = vld [vmem:[%s560 + $0x79] sm:$0xff]
      %v732 = vld [vmem:[%s560 + $0x81] sm:$0xff]
      %v733 = vld [vmem:[%s560 + $0x91] sm:$0xff]
      %v734 = vld [vmem:[%s560 + $0x99] sm:$0xff]
      %v735 = vld [vmem:[%s560 + $0xa9] sm:$0xff]
      %v736 = vld [vmem:[%s560 + $0xb1] sm:$0xff]
      %v737 = vld [vmem:[%s560 + $0xc1] sm:$0xff]
      %v738 = vld [vmem:[%s560 + $0xc9] sm:$0xff]
      %v739 = vld [vmem:[%s560 + $0xd9] sm:$0xff]
      %v740 = vld [vmem:[%s560 + $0xe1] sm:$0xff]
      %v741 = vld [vmem:[%s560 + $0xf1] sm:$0xff]
      %v742 = vld [vmem:[%s560 + $0xf9] sm:$0xff]
      %v743 = vld [vmem:[%s560 + $0x109] sm:$0xff]
      %v744 = vld [vmem:[%s560 + $0x111] sm:$0xff]
      %v745 = vld [vmem:[%s560 + $0x121] sm:$0xff]
      %v746 = vld [vmem:[%s560 + $0x129] sm:$0xff]
      %v747 = vld [vmem:[%s560 + $0x139] sm:$0xff]
      %v748 = vld [vmem:[%s560 + $0x141] sm:$0xff]
      %v749 = vld [vmem:[%s560 + $0x151] sm:$0xff]
      %v750 = vld [vmem:[%s560 + $0x159] sm:$0xff]
      %v751 = vld [vmem:[%s560 + $0x169] sm:$0xff]
      %v752 = vld [vmem:[%s560 + $0x171] sm:$0xff]
      %v753 = vld [vmem:[%s560 + $0x2] sm:$0xff]
      %v754 = vld [vmem:[%s560 + $0xa] sm:$0xff]
      %v755 = vld [vmem:[%s560 + $0x1a] sm:$0xff]
      %v756 = vld [vmem:[%s560 + $0x22] sm:$0xff]
      %v757 = vld [vmem:[%s560 + $0x32] sm:$0xff]
      %v758 = vld [vmem:[%s560 + $0x3a] sm:$0xff]
      %v759 = vld [vmem:[%s560 + $0x4a] sm:$0xff]
      %v760 = vld [vmem:[%s560 + $0x52] sm:$0xff]
      %v761 = vld [vmem:[%s560 + $0x62] sm:$0xff]
      %v762 = vld [vmem:[%s560 + $0x6a] sm:$0xff]
      %v763 = vld [vmem:[%s560 + $0x7a] sm:$0xff]
      %v764 = vld [vmem:[%s560 + $0x82] sm:$0xff]
      %v765 = vld [vmem:[%s560 + $0x92] sm:$0xff]
      %v766 = vld [vmem:[%s560 + $0x9a] sm:$0xff]
      %v767 = vld [vmem:[%s560 + $0xaa] sm:$0xff]
      %v768 = vld [vmem:[%s560 + $0xb2] sm:$0xff]
      %v769 = vld [vmem:[%s560 + $0xc2] sm:$0xff]
      %v770 = vld [vmem:[%s560 + $0xca] sm:$0xff]
      %v771 = vld [vmem:[%s560 + $0xda] sm:$0xff]
      %v772 = vld [vmem:[%s560 + $0xe2] sm:$0xff]
      %v773 = vld [vmem:[%s560 + $0xf2] sm:$0xff]
      %v774 = vld [vmem:[%s560 + $0xfa] sm:$0xff]
      %v775 = vld [vmem:[%s560 + $0x10a] sm:$0xff]
      %v776 = vld [vmem:[%s560 + $0x112] sm:$0xff]
      %v777 = vld [vmem:[%s560 + $0x122] sm:$0xff]
      %v778 = vld [vmem:[%s560 + $0x12a] sm:$0xff]
      %v779 = vld [vmem:[%s560 + $0x13a] sm:$0xff]
      %v780 = vld [vmem:[%s560 + $0x142] sm:$0xff]
      %v781 = vld [vmem:[%s560 + $0x152] sm:$0xff]
      %v782 = vld [vmem:[%s560 + $0x15a] sm:$0xff]
      %v783 = vld [vmem:[%s560 + $0x16a] sm:$0xff]
      %v784 = vld [vmem:[%s560 + $0x172] sm:$0xff]
      %s785 = scalar_lea.vmem [#allocation2], 48
      %v786 = vld [vmem:[%s785] sm:$0xff]
      %v787 = vld [vmem:[%s785 + $0x8] sm:$0xff]
      %v788 = vld [vmem:[%s785 + $0x18] sm:$0xff]
      %v789 = vld [vmem:[%s785 + $0x20] sm:$0xff]
      %v790 = vld [vmem:[%s785 + $0x30] sm:$0xff]
      %v791 = vld [vmem:[%s785 + $0x38] sm:$0xff]
      %v792 = vld [vmem:[%s785 + $0x48] sm:$0xff]
      %v793 = vld [vmem:[%s785 + $0x50] sm:$0xff]
      %v794 = vld [vmem:[%s785 + $0x60] sm:$0xff]
      %v795 = vld [vmem:[%s785 + $0x68] sm:$0xff]
      %v796 = vld [vmem:[%s785 + $0x78] sm:$0xff]
      %v797 = vld [vmem:[%s785 + $0x80] sm:$0xff]
      %v798 = vld [vmem:[%s785 + $0x90] sm:$0xff]
      %v799 = vld [vmem:[%s785 + $0x98] sm:$0xff]
      %v800 = vld [vmem:[%s785 + $0xa8] sm:$0xff]
      %v801 = vld [vmem:[%s785 + $0xb0] sm:$0xff]
      %v802 = vld [vmem:[%s785 + $0xc0] sm:$0xff]
      %v803 = vld [vmem:[%s785 + $0xc8] sm:$0xff]
      %v804 = vld [vmem:[%s785 + $0xd8] sm:$0xff]
      %v805 = vld [vmem:[%s785 + $0xe0] sm:$0xff]
      %v806 = vld [vmem:[%s785 + $0xf0] sm:$0xff]
      %v807 = vld [vmem:[%s785 + $0xf8] sm:$0xff]
      %v808 = vld [vmem:[%s785 + $0x108] sm:$0xff]
      %v809 = vld [vmem:[%s785 + $0x110] sm:$0xff]
      %v810 = vld [vmem:[%s785 + $0x120] sm:$0xff]
      %v811 = vld [vmem:[%s785 + $0x128] sm:$0xff]
      %v812 = vld [vmem:[%s785 + $0x138] sm:$0xff]
      %v813 = vld [vmem:[%s785 + $0x140] sm:$0xff]
      %v814 = vld [vmem:[%s785 + $0x150] sm:$0xff]
      %v815 = vld [vmem:[%s785 + $0x158] sm:$0xff]
      %v816 = vld [vmem:[%s785 + $0x168] sm:$0xff]
      %v817 = vld [vmem:[%s785 + $0x170] sm:$0xff]
      %v818 = vld [vmem:[%s785 + $0x1] sm:$0xff]
      %v819 = vld [vmem:[%s785 + $0x9] sm:$0xff]
      %v820 = vld [vmem:[%s785 + $0x19] sm:$0xff]
      %v821 = vld [vmem:[%s785 + $0x21] sm:$0xff]
      %v822 = vld [vmem:[%s785 + $0x31] sm:$0xff]
      %v823 = vld [vmem:[%s785 + $0x39] sm:$0xff]
      %v824 = vld [vmem:[%s785 + $0x49] sm:$0xff]
      %v825 = vld [vmem:[%s785 + $0x51] sm:$0xff]
      %v826 = vld [vmem:[%s785 + $0x61] sm:$0xff]
      %v827 = vld [vmem:[%s785 + $0x69] sm:$0xff]
      %v828 = vld [vmem:[%s785 + $0x79] sm:$0xff]
      %v829 = vld [vmem:[%s785 + $0x81] sm:$0xff]
      %v830 = vld [vmem:[%s785 + $0x91] sm:$0xff]
      %v831 = vld [vmem:[%s785 + $0x99] sm:$0xff]
      %v832 = vld [vmem:[%s785 + $0xa9] sm:$0xff]
      %v833 = vld [vmem:[%s785 + $0xb1] sm:$0xff]
      %v834 = vld [vmem:[%s785 + $0xc1] sm:$0xff]
      %v835 = vld [vmem:[%s785 + $0xc9] sm:$0xff]
      %v836 = vld [vmem:[%s785 + $0xd9] sm:$0xff]
      %v837 = vld [vmem:[%s785 + $0xe1] sm:$0xff]
      %v838 = vld [vmem:[%s785 + $0xf1] sm:$0xff]
      %v839 = vld [vmem:[%s785 + $0xf9] sm:$0xff]
      %v840 = vld [vmem:[%s785 + $0x109] sm:$0xff]
      %v841 = vld [vmem:[%s785 + $0x111] sm:$0xff]
      %v842 = vld [vmem:[%s785 + $0x121] sm:$0xff]
      %v843 = vld [vmem:[%s785 + $0x129] sm:$0xff]
      %v844 = vld [vmem:[%s785 + $0x139] sm:$0xff]
      %v845 = vld [vmem:[%s785 + $0x141] sm:$0xff]
      %v846 = vld [vmem:[%s785 + $0x151] sm:$0xff]
      %v847 = vld [vmem:[%s785 + $0x159] sm:$0xff]
      %v848 = vld [vmem:[%s785 + $0x169] sm:$0xff]
      %v849 = vld [vmem:[%s785 + $0x171] sm:$0xff]
      %v850 = vld [vmem:[%s785 + $0x2] sm:$0xff]
      %v851 = vld [vmem:[%s785 + $0xa] sm:$0xff]
      %v852 = vld [vmem:[%s785 + $0x1a] sm:$0xff]
      %v853 = vld [vmem:[%s785 + $0x22] sm:$0xff]
      %v854 = vld [vmem:[%s785 + $0x32] sm:$0xff]
      %v855 = vld [vmem:[%s785 + $0x3a] sm:$0xff]
      %v856 = vld [vmem:[%s785 + $0x4a] sm:$0xff]
      %v857 = vld [vmem:[%s785 + $0x52] sm:$0xff]
      %v858 = vld [vmem:[%s785 + $0x62] sm:$0xff]
      %v859 = vld [vmem:[%s785 + $0x6a] sm:$0xff]
      %v860 = vld [vmem:[%s785 + $0x7a] sm:$0xff]
      %v861 = vld [vmem:[%s785 + $0x82] sm:$0xff]
      %v862 = vld [vmem:[%s785 + $0x92] sm:$0xff]
      %v863 = vld [vmem:[%s785 + $0x9a] sm:$0xff]
      %v864 = vld [vmem:[%s785 + $0xaa] sm:$0xff]
      %v865 = vld [vmem:[%s785 + $0xb2] sm:$0xff]
      %v866 = vld [vmem:[%s785 + $0xc2] sm:$0xff]
      %v867 = vld [vmem:[%s785 + $0xca] sm:$0xff]
      %v868 = vld [vmem:[%s785 + $0xda] sm:$0xff]
      %v869 = vld [vmem:[%s785 + $0xe2] sm:$0xff]
      %v870 = vld [vmem:[%s785 + $0xf2] sm:$0xff]
      %v871 = vld [vmem:[%s785 + $0xfa] sm:$0xff]
      %v872 = vld [vmem:[%s785 + $0x10a] sm:$0xff]
      %v873 = vld [vmem:[%s785 + $0x112] sm:$0xff]
      %v874 = vld [vmem:[%s785 + $0x122] sm:$0xff]
      %v875 = vld [vmem:[%s785 + $0x12a] sm:$0xff]
      %v876 = vld [vmem:[%s785 + $0x13a] sm:$0xff]
      %v877 = vld [vmem:[%s785 + $0x142] sm:$0xff]
      %v878 = vld [vmem:[%s785 + $0x152] sm:$0xff]
      %v879 = vld [vmem:[%s785 + $0x15a] sm:$0xff]
      %v880 = vld [vmem:[%s785 + $0x16a] sm:$0xff]
      %v881 = vld [vmem:[%s785 + $0x172] sm:$0xff]
      %914 = vrot.lane.b32.xlu0 %v625, 4
      %v915 = vpop.permute.xlu0 %914
      %916 = vrot.lane.b32.xlu0 %v626, 4
      %v917 = vpop.permute.xlu0 %916
      %918 = vrot.lane.b32.xlu0 %v627, 4
      %v919 = vpop.permute.xlu0 %918
      %920 = vrot.lane.b32.xlu0 %v628, 4
      %v921 = vpop.permute.xlu0 %920
      %922 = vrot.lane.b32.xlu0 %v629, 4
      %v923 = vpop.permute.xlu0 %922
      %924 = vrot.lane.b32.xlu0 %v630, 4
      %v925 = vpop.permute.xlu0 %924
      %926 = vrot.lane.b32.xlu0 %v631, 4
      %v927 = vpop.permute.xlu0 %926
      %928 = vrot.lane.b32.xlu0 %v632, 4
      %v929 = vpop.permute.xlu0 %928
      %930 = vrot.lane.b32.xlu0 %v633, 4
      %v931 = vpop.permute.xlu0 %930
      %932 = vrot.lane.b32.xlu0 %v634, 4
      %v933 = vpop.permute.xlu0 %932
      %934 = vrot.lane.b32.xlu0 %v635, 4
      %v935 = vpop.permute.xlu0 %934
      %936 = vrot.lane.b32.xlu0 %v636, 4
      %v937 = vpop.permute.xlu0 %936
      %938 = vrot.lane.b32.xlu0 %v637, 4
      %v939 = vpop.permute.xlu0 %938
      %940 = vrot.lane.b32.xlu0 %v638, 4
      %v941 = vpop.permute.xlu0 %940
      %942 = vrot.lane.b32.xlu0 %v639, 4
      %v943 = vpop.permute.xlu0 %942
      %944 = vrot.lane.b32.xlu0 %v640, 4
      %v945 = vpop.permute.xlu0 %944
      %946 = vrot.lane.b32.xlu0 %v641, 4
      %v947 = vpop.permute.xlu0 %946
      %948 = vrot.lane.b32.xlu0 %v642, 4
      %v949 = vpop.permute.xlu0 %948
      %950 = vrot.lane.b32.xlu0 %v643, 4
      %v951 = vpop.permute.xlu0 %950
      %952 = vrot.lane.b32.xlu0 %v644, 4
      %v953 = vpop.permute.xlu0 %952
      %954 = vrot.lane.b32.xlu0 %v645, 4
      %v955 = vpop.permute.xlu0 %954
      %956 = vrot.lane.b32.xlu0 %v646, 4
      %v957 = vpop.permute.xlu0 %956
      %958 = vrot.lane.b32.xlu0 %v647, 4
      %v959 = vpop.permute.xlu0 %958
      %960 = vrot.lane.b32.xlu0 %v648, 4
      %v961 = vpop.permute.xlu0 %960
      %962 = vrot.lane.b32.xlu0 %v649, 4
      %v963 = vpop.permute.xlu0 %962
      %964 = vrot.lane.b32.xlu0 %v650, 4
      %v965 = vpop.permute.xlu0 %964
      %966 = vrot.lane.b32.xlu0 %v651, 4
      %v967 = vpop.permute.xlu0 %966
      %968 = vrot.lane.b32.xlu0 %v652, 4
      %v969 = vpop.permute.xlu0 %968
      %970 = vrot.lane.b32.xlu0 %v653, 4
      %v971 = vpop.permute.xlu0 %970
      %972 = vrot.lane.b32.xlu0 %v654, 4
      %v973 = vpop.permute.xlu0 %972
      %974 = vrot.lane.b32.xlu0 %v655, 4
      %v975 = vpop.permute.xlu0 %974
      %976 = vrot.lane.b32.xlu0 %v656, 4
      %v977 = vpop.permute.xlu0 %976
      %1042 = vrot.lane.b32.xlu0 %v657, 8
      %v1043 = vpop.permute.xlu0 %1042
      %1044 = vrot.lane.b32.xlu0 %v658, 8
      %v1045 = vpop.permute.xlu0 %1044
      %1046 = vrot.lane.b32.xlu0 %v659, 8
      %v1047 = vpop.permute.xlu0 %1046
      %1048 = vrot.lane.b32.xlu0 %v660, 8
      %v1049 = vpop.permute.xlu0 %1048
      %1050 = vrot.lane.b32.xlu0 %v661, 8
      %v1051 = vpop.permute.xlu0 %1050
      %1052 = vrot.lane.b32.xlu0 %v662, 8
      %v1053 = vpop.permute.xlu0 %1052
      %1054 = vrot.lane.b32.xlu0 %v663, 8
      %v1055 = vpop.permute.xlu0 %1054
      %1056 = vrot.lane.b32.xlu0 %v664, 8
      %v1057 = vpop.permute.xlu0 %1056
      %1058 = vrot.lane.b32.xlu0 %v665, 8
      %v1059 = vpop.permute.xlu0 %1058
      %1060 = vrot.lane.b32.xlu0 %v666, 8
      %v1061 = vpop.permute.xlu0 %1060
      %1062 = vrot.lane.b32.xlu0 %v667, 8
      %v1063 = vpop.permute.xlu0 %1062
      %1064 = vrot.lane.b32.xlu0 %v668, 8
      %v1065 = vpop.permute.xlu0 %1064
      %1066 = vrot.lane.b32.xlu0 %v669, 8
      %v1067 = vpop.permute.xlu0 %1066
      %1068 = vrot.lane.b32.xlu0 %v670, 8
      %v1069 = vpop.permute.xlu0 %1068
      %1070 = vrot.lane.b32.xlu0 %v671, 8
      %v1071 = vpop.permute.xlu0 %1070
      %1072 = vrot.lane.b32.xlu0 %v672, 8
      %v1073 = vpop.permute.xlu0 %1072
      %1074 = vrot.lane.b32.xlu0 %v673, 8
      %v1075 = vpop.permute.xlu0 %1074
      %1076 = vrot.lane.b32.xlu0 %v674, 8
      %v1077 = vpop.permute.xlu0 %1076
      %1078 = vrot.lane.b32.xlu0 %v675, 8
      %v1079 = vpop.permute.xlu0 %1078
      %1080 = vrot.lane.b32.xlu0 %v676, 8
      %v1081 = vpop.permute.xlu0 %1080
      %1082 = vrot.lane.b32.xlu0 %v677, 8
      %v1083 = vpop.permute.xlu0 %1082
      %1084 = vrot.lane.b32.xlu0 %v678, 8
      %v1085 = vpop.permute.xlu0 %1084
      %1086 = vrot.lane.b32.xlu0 %v679, 8
      %v1087 = vpop.permute.xlu0 %1086
      %1088 = vrot.lane.b32.xlu0 %v680, 8
      %v1089 = vpop.permute.xlu0 %1088
      %1090 = vrot.lane.b32.xlu0 %v681, 8
      %v1091 = vpop.permute.xlu0 %1090
      %1092 = vrot.lane.b32.xlu0 %v682, 8
      %v1093 = vpop.permute.xlu0 %1092
      %1094 = vrot.lane.b32.xlu0 %v683, 8
      %v1095 = vpop.permute.xlu0 %1094
      %1096 = vrot.lane.b32.xlu0 %v684, 8
      %v1097 = vpop.permute.xlu0 %1096
      %1098 = vrot.lane.b32.xlu0 %v685, 8
      %v1099 = vpop.permute.xlu0 %1098
      %1100 = vrot.lane.b32.xlu0 %v686, 8
      %v1101 = vpop.permute.xlu0 %1100
      %1102 = vrot.lane.b32.xlu0 %v687, 8
      %v1103 = vpop.permute.xlu0 %1102
      %1104 = vrot.lane.b32.xlu0 %v688, 8
      %v1105 = vpop.permute.xlu0 %1104
      %1170 = vrot.lane.b32.xlu0 %v689, 12
      %v1171 = vpop.permute.xlu0 %1170
      %1172 = vrot.lane.b32.xlu0 %v690, 12
      %v1173 = vpop.permute.xlu0 %1172
      %1174 = vrot.lane.b32.xlu0 %v691, 12
      %v1175 = vpop.permute.xlu0 %1174
      %1176 = vrot.lane.b32.xlu0 %v692, 12
      %v1177 = vpop.permute.xlu0 %1176
      %1178 = vrot.lane.b32.xlu0 %v693, 12
      %v1179 = vpop.permute.xlu0 %1178
      %1180 = vrot.lane.b32.xlu0 %v694, 12
      %v1181 = vpop.permute.xlu0 %1180
      %1182 = vrot.lane.b32.xlu0 %v695, 12
      %v1183 = vpop.permute.xlu0 %1182
      %1184 = vrot.lane.b32.xlu0 %v696, 12
      %v1185 = vpop.permute.xlu0 %1184
      %1186 = vrot.lane.b32.xlu0 %v697, 12
      %v1187 = vpop.permute.xlu0 %1186
      %1188 = vrot.lane.b32.xlu0 %v698, 12
      %v1189 = vpop.permute.xlu0 %1188
      %1190 = vrot.lane.b32.xlu0 %v699, 12
      %v1191 = vpop.permute.xlu0 %1190
      %1192 = vrot.lane.b32.xlu0 %v700, 12
      %v1193 = vpop.permute.xlu0 %1192
      %1194 = vrot.lane.b32.xlu0 %v701, 12
      %v1195 = vpop.permute.xlu0 %1194
      %1196 = vrot.lane.b32.xlu0 %v702, 12
      %v1197 = vpop.permute.xlu0 %1196
      %1198 = vrot.lane.b32.xlu0 %v703, 12
      %v1199 = vpop.permute.xlu0 %1198
      %1200 = vrot.lane.b32.xlu0 %v704, 12
      %v1201 = vpop.permute.xlu0 %1200
      %1202 = vrot.lane.b32.xlu0 %v705, 12
      %v1203 = vpop.permute.xlu0 %1202
      %1204 = vrot.lane.b32.xlu0 %v706, 12
      %v1205 = vpop.permute.xlu0 %1204
      %1206 = vrot.lane.b32.xlu0 %v707, 12
      %v1207 = vpop.permute.xlu0 %1206
      %1208 = vrot.lane.b32.xlu0 %v708, 12
      %v1209 = vpop.permute.xlu0 %1208
      %1210 = vrot.lane.b32.xlu0 %v709, 12
      %v1211 = vpop.permute.xlu0 %1210
      %1212 = vrot.lane.b32.xlu0 %v710, 12
      %v1213 = vpop.permute.xlu0 %1212
      %1214 = vrot.lane.b32.xlu0 %v711, 12
      %v1215 = vpop.permute.xlu0 %1214
      %1216 = vrot.lane.b32.xlu0 %v712, 12
      %v1217 = vpop.permute.xlu0 %1216
      %1218 = vrot.lane.b32.xlu0 %v713, 12
      %v1219 = vpop.permute.xlu0 %1218
      %1220 = vrot.lane.b32.xlu0 %v714, 12
      %v1221 = vpop.permute.xlu0 %1220
      %1222 = vrot.lane.b32.xlu0 %v715, 12
      %v1223 = vpop.permute.xlu0 %1222
      %1224 = vrot.lane.b32.xlu0 %v716, 12
      %v1225 = vpop.permute.xlu0 %1224
      %1226 = vrot.lane.b32.xlu0 %v717, 12
      %v1227 = vpop.permute.xlu0 %1226
      %1228 = vrot.lane.b32.xlu0 %v718, 12
      %v1229 = vpop.permute.xlu0 %1228
      %1230 = vrot.lane.b32.xlu0 %v719, 12
      %v1231 = vpop.permute.xlu0 %1230
      %1232 = vrot.lane.b32.xlu0 %v720, 12
      %v1233 = vpop.permute.xlu0 %1232
      %1298 = vrot.lane.b32.xlu0 %v721, 16
      %v1299 = vpop.permute.xlu0 %1298
      %1300 = vrot.lane.b32.xlu0 %v722, 16
      %v1301 = vpop.permute.xlu0 %1300
      %1302 = vrot.lane.b32.xlu0 %v723, 16
      %v1303 = vpop.permute.xlu0 %1302
      %1304 = vrot.lane.b32.xlu0 %v724, 16
      %v1305 = vpop.permute.xlu0 %1304
      %1306 = vrot.lane.b32.xlu0 %v725, 16
      %v1307 = vpop.permute.xlu0 %1306
      %1308 = vrot.lane.b32.xlu0 %v726, 16
      %v1309 = vpop.permute.xlu0 %1308
      %1310 = vrot.lane.b32.xlu0 %v727, 16
      %v1311 = vpop.permute.xlu0 %1310
      %1312 = vrot.lane.b32.xlu0 %v728, 16
      %v1313 = vpop.permute.xlu0 %1312
      %1314 = vrot.lane.b32.xlu0 %v729, 16
      %v1315 = vpop.permute.xlu0 %1314
      %1316 = vrot.lane.b32.xlu0 %v730, 16
      %v1317 = vpop.permute.xlu0 %1316
      %1318 = vrot.lane.b32.xlu0 %v731, 16
      %v1319 = vpop.permute.xlu0 %1318
      %1320 = vrot.lane.b32.xlu0 %v732, 16
      %v1321 = vpop.permute.xlu0 %1320
      %1322 = vrot.lane.b32.xlu0 %v733, 16
      %v1323 = vpop.permute.xlu0 %1322
      %1324 = vrot.lane.b32.xlu0 %v734, 16
      %v1325 = vpop.permute.xlu0 %1324
      %1326 = vrot.lane.b32.xlu0 %v735, 16
      %v1327 = vpop.permute.xlu0 %1326
      %1328 = vrot.lane.b32.xlu0 %v736, 16
      %v1329 = vpop.permute.xlu0 %1328
      %1330 = vrot.lane.b32.xlu0 %v737, 16
      %v1331 = vpop.permute.xlu0 %1330
      %1332 = vrot.lane.b32.xlu0 %v738, 16
      %v1333 = vpop.permute.xlu0 %1332
      %1334 = vrot.lane.b32.xlu0 %v739, 16
      %v1335 = vpop.permute.xlu0 %1334
      %1336 = vrot.lane.b32.xlu0 %v740, 16
      %v1337 = vpop.permute.xlu0 %1336
      %1338 = vrot.lane.b32.xlu0 %v741, 16
      %v1339 = vpop.permute.xlu0 %1338
      %1340 = vrot.lane.b32.xlu0 %v742, 16
      %v1341 = vpop.permute.xlu0 %1340
      %1342 = vrot.lane.b32.xlu0 %v743, 16
      %v1343 = vpop.permute.xlu0 %1342
      %1344 = vrot.lane.b32.xlu0 %v744, 16
      %v1345 = vpop.permute.xlu0 %1344
      %1346 = vrot.lane.b32.xlu0 %v745, 16
      %v1347 = vpop.permute.xlu0 %1346
      %1348 = vrot.lane.b32.xlu0 %v746, 16
      %v1349 = vpop.permute.xlu0 %1348
      %1350 = vrot.lane.b32.xlu0 %v747, 16
      %v1351 = vpop.permute.xlu0 %1350
      %1352 = vrot.lane.b32.xlu0 %v748, 16
      %v1353 = vpop.permute.xlu0 %1352
      %1354 = vrot.lane.b32.xlu0 %v749, 16
      %v1355 = vpop.permute.xlu0 %1354
      %1356 = vrot.lane.b32.xlu0 %v750, 16
      %v1357 = vpop.permute.xlu0 %1356
      %1358 = vrot.lane.b32.xlu0 %v751, 16
      %v1359 = vpop.permute.xlu0 %1358
      %1360 = vrot.lane.b32.xlu0 %v752, 16
      %v1361 = vpop.permute.xlu0 %1360
      %1426 = vrot.lane.b32.xlu0 %v753, 20
      %v1427 = vpop.permute.xlu0 %1426
      %1428 = vrot.lane.b32.xlu0 %v754, 20
      %v1429 = vpop.permute.xlu0 %1428
      %1430 = vrot.lane.b32.xlu0 %v755, 20
      %v1431 = vpop.permute.xlu0 %1430
      %1432 = vrot.lane.b32.xlu0 %v756, 20
      %v1433 = vpop.permute.xlu0 %1432
      %1434 = vrot.lane.b32.xlu0 %v757, 20
      %v1435 = vpop.permute.xlu0 %1434
      %1436 = vrot.lane.b32.xlu0 %v758, 20
      %v1437 = vpop.permute.xlu0 %1436
      %1438 = vrot.lane.b32.xlu0 %v759, 20
      %v1439 = vpop.permute.xlu0 %1438
      %1440 = vrot.lane.b32.xlu0 %v760, 20
      %v1441 = vpop.permute.xlu0 %1440
      %1442 = vrot.lane.b32.xlu0 %v761, 20
      %v1443 = vpop.permute.xlu0 %1442
      %1444 = vrot.lane.b32.xlu0 %v762, 20
      %v1445 = vpop.permute.xlu0 %1444
      %1446 = vrot.lane.b32.xlu0 %v763, 20
      %v1447 = vpop.permute.xlu0 %1446
      %1448 = vrot.lane.b32.xlu0 %v764, 20
      %v1449 = vpop.permute.xlu0 %1448
      %1450 = vrot.lane.b32.xlu0 %v765, 20
      %v1451 = vpop.permute.xlu0 %1450
      %1452 = vrot.lane.b32.xlu0 %v766, 20
      %v1453 = vpop.permute.xlu0 %1452
      %1454 = vrot.lane.b32.xlu0 %v767, 20
      %v1455 = vpop.permute.xlu0 %1454
      %1456 = vrot.lane.b32.xlu0 %v768, 20
      %v1457 = vpop.permute.xlu0 %1456
      %1458 = vrot.lane.b32.xlu0 %v769, 20
      %v1459 = vpop.permute.xlu0 %1458
      %1460 = vrot.lane.b32.xlu0 %v770, 20
      %v1461 = vpop.permute.xlu0 %1460
      %1462 = vrot.lane.b32.xlu0 %v771, 20
      %v1463 = vpop.permute.xlu0 %1462
      %1464 = vrot.lane.b32.xlu0 %v772, 20
      %v1465 = vpop.permute.xlu0 %1464
      %1466 = vrot.lane.b32.xlu0 %v773, 20
      %v1467 = vpop.permute.xlu0 %1466
      %1468 = vrot.lane.b32.xlu0 %v774, 20
      %v1469 = vpop.permute.xlu0 %1468
      %1470 = vrot.lane.b32.xlu0 %v775, 20
      %v1471 = vpop.permute.xlu0 %1470
      %1472 = vrot.lane.b32.xlu0 %v776, 20
      %v1473 = vpop.permute.xlu0 %1472
      %1474 = vrot.lane.b32.xlu0 %v777, 20
      %v1475 = vpop.permute.xlu0 %1474
      %1476 = vrot.lane.b32.xlu0 %v778, 20
      %v1477 = vpop.permute.xlu0 %1476
      %1478 = vrot.lane.b32.xlu0 %v779, 20
      %v1479 = vpop.permute.xlu0 %1478
      %1480 = vrot.lane.b32.xlu0 %v780, 20
      %v1481 = vpop.permute.xlu0 %1480
      %1482 = vrot.lane.b32.xlu0 %v781, 20
      %v1483 = vpop.permute.xlu0 %1482
      %1484 = vrot.lane.b32.xlu0 %v782, 20
      %v1485 = vpop.permute.xlu0 %1484
      %1486 = vrot.lane.b32.xlu0 %v783, 20
      %v1487 = vpop.permute.xlu0 %1486
      %1488 = vrot.lane.b32.xlu0 %v784, 20
      %v1489 = vpop.permute.xlu0 %1488
      %1554 = vrot.lane.b32.xlu0 %v786, 24
      %v1555 = vpop.permute.xlu0 %1554
      %1556 = vrot.lane.b32.xlu0 %v787, 24
      %v1557 = vpop.permute.xlu0 %1556
      %1558 = vrot.lane.b32.xlu0 %v788, 24
      %v1559 = vpop.permute.xlu0 %1558
      %1560 = vrot.lane.b32.xlu0 %v789, 24
      %v1561 = vpop.permute.xlu0 %1560
      %1562 = vrot.lane.b32.xlu0 %v790, 24
      %v1563 = vpop.permute.xlu0 %1562
      %1564 = vrot.lane.b32.xlu0 %v791, 24
      %v1565 = vpop.permute.xlu0 %1564
      %1566 = vrot.lane.b32.xlu0 %v792, 24
      %v1567 = vpop.permute.xlu0 %1566
      %1568 = vrot.lane.b32.xlu0 %v793, 24
      %v1569 = vpop.permute.xlu0 %1568
      %1570 = vrot.lane.b32.xlu0 %v794, 24
      %v1571 = vpop.permute.xlu0 %1570
      %1572 = vrot.lane.b32.xlu0 %v795, 24
      %v1573 = vpop.permute.xlu0 %1572
      %1574 = vrot.lane.b32.xlu0 %v796, 24
      %v1575 = vpop.permute.xlu0 %1574
      %1576 = vrot.lane.b32.xlu0 %v797, 24
      %v1577 = vpop.permute.xlu0 %1576
      %1578 = vrot.lane.b32.xlu0 %v798, 24
      %v1579 = vpop.permute.xlu0 %1578
      %1580 = vrot.lane.b32.xlu0 %v799, 24
      %v1581 = vpop.permute.xlu0 %1580
      %1582 = vrot.lane.b32.xlu0 %v800, 24
      %v1583 = vpop.permute.xlu0 %1582
      %1584 = vrot.lane.b32.xlu0 %v801, 24
      %v1585 = vpop.permute.xlu0 %1584
      %1586 = vrot.lane.b32.xlu0 %v802, 24
      %v1587 = vpop.permute.xlu0 %1586
      %1588 = vrot.lane.b32.xlu0 %v803, 24
      %v1589 = vpop.permute.xlu0 %1588
      %1590 = vrot.lane.b32.xlu0 %v804, 24
      %v1591 = vpop.permute.xlu0 %1590
      %1592 = vrot.lane.b32.xlu0 %v805, 24
      %v1593 = vpop.permute.xlu0 %1592
      %1594 = vrot.lane.b32.xlu0 %v806, 24
      %v1595 = vpop.permute.xlu0 %1594
      %1596 = vrot.lane.b32.xlu0 %v807, 24
      %v1597 = vpop.permute.xlu0 %1596
      %1598 = vrot.lane.b32.xlu0 %v808, 24
      %v1599 = vpop.permute.xlu0 %1598
      %1600 = vrot.lane.b32.xlu0 %v809, 24
      %v1601 = vpop.permute.xlu0 %1600
      %1602 = vrot.lane.b32.xlu0 %v810, 24
      %v1603 = vpop.permute.xlu0 %1602
      %1604 = vrot.lane.b32.xlu0 %v811, 24
      %v1605 = vpop.permute.xlu0 %1604
      %1606 = vrot.lane.b32.xlu0 %v812, 24
      %v1607 = vpop.permute.xlu0 %1606
      %1608 = vrot.lane.b32.xlu0 %v813, 24
      %v1609 = vpop.permute.xlu0 %1608
      %1610 = vrot.lane.b32.xlu0 %v814, 24
      %v1611 = vpop.permute.xlu0 %1610
      %1612 = vrot.lane.b32.xlu0 %v815, 24
      %v1613 = vpop.permute.xlu0 %1612
      %1614 = vrot.lane.b32.xlu0 %v816, 24
      %v1615 = vpop.permute.xlu0 %1614
      %1616 = vrot.lane.b32.xlu0 %v817, 24
      %v1617 = vpop.permute.xlu0 %1616
      %1682 = vrot.lane.b32.xlu0 %v818, 28
      %v1683 = vpop.permute.xlu0 %1682
      %1684 = vrot.lane.b32.xlu0 %v819, 28
      %v1685 = vpop.permute.xlu0 %1684
      %1686 = vrot.lane.b32.xlu0 %v820, 28
      %v1687 = vpop.permute.xlu0 %1686
      %1688 = vrot.lane.b32.xlu0 %v821, 28
      %v1689 = vpop.permute.xlu0 %1688
      %1690 = vrot.lane.b32.xlu0 %v822, 28
      %v1691 = vpop.permute.xlu0 %1690
      %1692 = vrot.lane.b32.xlu0 %v823, 28
      %v1693 = vpop.permute.xlu0 %1692
      %1694 = vrot.lane.b32.xlu0 %v824, 28
      %v1695 = vpop.permute.xlu0 %1694
      %1696 = vrot.lane.b32.xlu0 %v825, 28
      %v1697 = vpop.permute.xlu0 %1696
      %1698 = vrot.lane.b32.xlu0 %v826, 28
      %v1699 = vpop.permute.xlu0 %1698
      %1700 = vrot.lane.b32.xlu0 %v827, 28
      %v1701 = vpop.permute.xlu0 %1700
      %1702 = vrot.lane.b32.xlu0 %v828, 28
      %v1703 = vpop.permute.xlu0 %1702
      %1704 = vrot.lane.b32.xlu0 %v829, 28
      %v1705 = vpop.permute.xlu0 %1704
      %1706 = vrot.lane.b32.xlu0 %v830, 28
      %v1707 = vpop.permute.xlu0 %1706
      %1708 = vrot.lane.b32.xlu0 %v831, 28
      %v1709 = vpop.permute.xlu0 %1708
      %1710 = vrot.lane.b32.xlu0 %v832, 28
      %v1711 = vpop.permute.xlu0 %1710
      %1712 = vrot.lane.b32.xlu0 %v833, 28
      %v1713 = vpop.permute.xlu0 %1712
      %1714 = vrot.lane.b32.xlu0 %v834, 28
      %v1715 = vpop.permute.xlu0 %1714
      %1716 = vrot.lane.b32.xlu0 %v835, 28
      %v1717 = vpop.permute.xlu0 %1716
      %1718 = vrot.lane.b32.xlu0 %v836, 28
      %v1719 = vpop.permute.xlu0 %1718
      %1720 = vrot.lane.b32.xlu0 %v837, 28
      %v1721 = vpop.permute.xlu0 %1720
      %1722 = vrot.lane.b32.xlu0 %v838, 28
      %v1723 = vpop.permute.xlu0 %1722
      %1724 = vrot.lane.b32.xlu0 %v839, 28
      %v1725 = vpop.permute.xlu0 %1724
      %1726 = vrot.lane.b32.xlu0 %v840, 28
      %v1727 = vpop.permute.xlu0 %1726
      %1728 = vrot.lane.b32.xlu0 %v841, 28
      %v1729 = vpop.permute.xlu0 %1728
      %1730 = vrot.lane.b32.xlu0 %v842, 28
      %v1731 = vpop.permute.xlu0 %1730
      %1732 = vrot.lane.b32.xlu0 %v843, 28
      %v1733 = vpop.permute.xlu0 %1732
      %1734 = vrot.lane.b32.xlu0 %v844, 28
      %v1735 = vpop.permute.xlu0 %1734
      %1736 = vrot.lane.b32.xlu0 %v845, 28
      %v1737 = vpop.permute.xlu0 %1736
      %1738 = vrot.lane.b32.xlu0 %v846, 28
      %v1739 = vpop.permute.xlu0 %1738
      %1740 = vrot.lane.b32.xlu0 %v847, 28
      %v1741 = vpop.permute.xlu0 %1740
      %1742 = vrot.lane.b32.xlu0 %v848, 28
      %v1743 = vpop.permute.xlu0 %1742
      %1744 = vrot.lane.b32.xlu0 %v849, 28
      %v1745 = vpop.permute.xlu0 %1744
      %1810 = vrot.lane.b32.xlu0 %v850, 32
      %v1811 = vpop.permute.xlu0 %1810
      %1812 = vrot.lane.b32.xlu0 %v851, 32
      %v1813 = vpop.permute.xlu0 %1812
      %1814 = vrot.lane.b32.xlu0 %v852, 32
      %v1815 = vpop.permute.xlu0 %1814
      %1816 = vrot.lane.b32.xlu0 %v853, 32
      %v1817 = vpop.permute.xlu0 %1816
      %1818 = vrot.lane.b32.xlu0 %v854, 32
      %v1819 = vpop.permute.xlu0 %1818
      %1820 = vrot.lane.b32.xlu0 %v855, 32
      %v1821 = vpop.permute.xlu0 %1820
      %1822 = vrot.lane.b32.xlu0 %v856, 32
      %v1823 = vpop.permute.xlu0 %1822
      %1824 = vrot.lane.b32.xlu0 %v857, 32
      %v1825 = vpop.permute.xlu0 %1824
      %1826 = vrot.lane.b32.xlu0 %v858, 32
      %v1827 = vpop.permute.xlu0 %1826
      %1828 = vrot.lane.b32.xlu0 %v859, 32
      %v1829 = vpop.permute.xlu0 %1828
      %1830 = vrot.lane.b32.xlu0 %v860, 32
      %v1831 = vpop.permute.xlu0 %1830
      %1832 = vrot.lane.b32.xlu0 %v861, 32
      %v1833 = vpop.permute.xlu0 %1832
      %1834 = vrot.lane.b32.xlu0 %v862, 32
      %v1835 = vpop.permute.xlu0 %1834
      %1836 = vrot.lane.b32.xlu0 %v863, 32
      %v1837 = vpop.permute.xlu0 %1836
      %1838 = vrot.lane.b32.xlu0 %v864, 32
      %v1839 = vpop.permute.xlu0 %1838
      %1840 = vrot.lane.b32.xlu0 %v865, 32
      %v1841 = vpop.permute.xlu0 %1840
      %1842 = vrot.lane.b32.xlu0 %v866, 32
      %v1843 = vpop.permute.xlu0 %1842
      %1844 = vrot.lane.b32.xlu0 %v867, 32
      %v1845 = vpop.permute.xlu0 %1844
      %1846 = vrot.lane.b32.xlu0 %v868, 32
      %v1847 = vpop.permute.xlu0 %1846
      %1848 = vrot.lane.b32.xlu0 %v869, 32
      %v1849 = vpop.permute.xlu0 %1848
      %1850 = vrot.lane.b32.xlu0 %v870, 32
      %v1851 = vpop.permute.xlu0 %1850
      %1852 = vrot.lane.b32.xlu0 %v871, 32
      %v1853 = vpop.permute.xlu0 %1852
      %1854 = vrot.lane.b32.xlu0 %v872, 32
      %v1855 = vpop.permute.xlu0 %1854
      %1856 = vrot.lane.b32.xlu0 %v873, 32
      %v1857 = vpop.permute.xlu0 %1856
      %1858 = vrot.lane.b32.xlu0 %v874, 32
      %v1859 = vpop.permute.xlu0 %1858
      %1860 = vrot.lane.b32.xlu0 %v875, 32
      %v1861 = vpop.permute.xlu0 %1860
      %1862 = vrot.lane.b32.xlu0 %v876, 32
      %v1863 = vpop.permute.xlu0 %1862
      %1864 = vrot.lane.b32.xlu0 %v877, 32
      %v1865 = vpop.permute.xlu0 %1864
      %1866 = vrot.lane.b32.xlu0 %v878, 32
      %v1867 = vpop.permute.xlu0 %1866
      %1868 = vrot.lane.b32.xlu0 %v879, 32
      %v1869 = vpop.permute.xlu0 %1868
      %1870 = vrot.lane.b32.xlu0 %v880, 32
      %v1871 = vpop.permute.xlu0 %1870
      %1872 = vrot.lane.b32.xlu0 %v881, 32
      %v1873 = vpop.permute.xlu0 %1872
      %v1906 = vsel %vm360, %v593, %v915
      %v1907 = vsel %vm360, %v594, %v917
      %v1908 = vsel %vm360, %v595, %v919
      %v1909 = vsel %vm360, %v596, %v921
      %v1910 = vsel %vm360, %v597, %v923
      %v1911 = vsel %vm360, %v598, %v925
      %v1912 = vsel %vm360, %v599, %v927
      %v1913 = vsel %vm360, %v600, %v929
      %v1914 = vsel %vm360, %v601, %v931
      %v1915 = vsel %vm360, %v602, %v933
      %v1916 = vsel %vm360, %v603, %v935
      %v1917 = vsel %vm360, %v604, %v937
      %v1918 = vsel %vm360, %v605, %v939
      %v1919 = vsel %vm360, %v606, %v941
      %v1920 = vsel %vm360, %v607, %v943
      %v1921 = vsel %vm360, %v608, %v945
      %v1922 = vsel %vm360, %v609, %v947
      %v1923 = vsel %vm360, %v610, %v949
      %v1924 = vsel %vm360, %v611, %v951
      %v1925 = vsel %vm360, %v612, %v953
      %v1926 = vsel %vm360, %v613, %v955
      %v1927 = vsel %vm360, %v614, %v957
      %v1928 = vsel %vm360, %v615, %v959
      %v1929 = vsel %vm360, %v616, %v961
      %v1930 = vsel %vm360, %v617, %v963
      %v1931 = vsel %vm360, %v618, %v965
      %v1932 = vsel %vm360, %v619, %v967
      %v1933 = vsel %vm360, %v620, %v969
      %v1934 = vsel %vm360, %v621, %v971
      %v1935 = vsel %vm360, %v622, %v973
      %v1936 = vsel %vm360, %v623, %v975
      %v1937 = vsel %vm360, %v624, %v977
      %v1938 = vsel %vm416, %v1906, %v1043
      %v1939 = vsel %vm416, %v1907, %v1045
      %v1940 = vsel %vm416, %v1908, %v1047
      %v1941 = vsel %vm416, %v1909, %v1049
      %v1942 = vsel %vm416, %v1910, %v1051
      %v1943 = vsel %vm416, %v1911, %v1053
      %v1944 = vsel %vm416, %v1912, %v1055
      %v1945 = vsel %vm416, %v1913, %v1057
      %v1946 = vsel %vm416, %v1914, %v1059
      %v1947 = vsel %vm416, %v1915, %v1061
      %v1948 = vsel %vm416, %v1916, %v1063
      %v1949 = vsel %vm416, %v1917, %v1065
      %v1950 = vsel %vm416, %v1918, %v1067
      %v1951 = vsel %vm416, %v1919, %v1069
      %v1952 = vsel %vm416, %v1920, %v1071
      %v1953 = vsel %vm416, %v1921, %v1073
      %v1954 = vsel %vm416, %v1922, %v1075
      %v1955 = vsel %vm416, %v1923, %v1077
      %v1956 = vsel %vm416, %v1924, %v1079
      %v1957 = vsel %vm416, %v1925, %v1081
      %v1958 = vsel %vm416, %v1926, %v1083
      %v1959 = vsel %vm416, %v1927, %v1085
      %v1960 = vsel %vm416, %v1928, %v1087
      %v1961 = vsel %vm416, %v1929, %v1089
      %v1962 = vsel %vm416, %v1930, %v1091
      %v1963 = vsel %vm416, %v1931, %v1093
      %v1964 = vsel %vm416, %v1932, %v1095
      %v1965 = vsel %vm416, %v1933, %v1097
      %v1966 = vsel %vm416, %v1934, %v1099
      %v1967 = vsel %vm416, %v1935, %v1101
      %v1968 = vsel %vm416, %v1936, %v1103
      %v1969 = vsel %vm416, %v1937, %v1105
      %vm1970 = vcmask 97280
      %v1971 = vsel %vm1970, %v1938, %v1171
      %v1972 = vsel %vm1970, %v1939, %v1173
      %v1973 = vsel %vm1970, %v1940, %v1175
      %v1974 = vsel %vm1970, %v1941, %v1177
      %v1975 = vsel %vm1970, %v1942, %v1179
      %v1976 = vsel %vm1970, %v1943, %v1181
      %v1977 = vsel %vm1970, %v1944, %v1183
      %v1978 = vsel %vm1970, %v1945, %v1185
      %v1979 = vsel %vm1970, %v1946, %v1187
      %v1980 = vsel %vm1970, %v1947, %v1189
      %v1981 = vsel %vm1970, %v1948, %v1191
      %v1982 = vsel %vm1970, %v1949, %v1193
      %v1983 = vsel %vm1970, %v1950, %v1195
      %v1984 = vsel %vm1970, %v1951, %v1197
      %v1985 = vsel %vm1970, %v1952, %v1199
      %v1986 = vsel %vm1970, %v1953, %v1201
      %v1987 = vsel %vm1970, %v1954, %v1203
      %v1988 = vsel %vm1970, %v1955, %v1205
      %v1989 = vsel %vm1970, %v1956, %v1207
      %v1990 = vsel %vm1970, %v1957, %v1209
      %v1991 = vsel %vm1970, %v1958, %v1211
      %v1992 = vsel %vm1970, %v1959, %v1213
      %v1993 = vsel %vm1970, %v1960, %v1215
      %v1994 = vsel %vm1970, %v1961, %v1217
      %v1995 = vsel %vm1970, %v1962, %v1219
      %v1996 = vsel %vm1970, %v1963, %v1221
      %v1997 = vsel %vm1970, %v1964, %v1223
      %v1998 = vsel %vm1970, %v1965, %v1225
      %v1999 = vsel %vm1970, %v1966, %v1227
      %v2000 = vsel %vm1970, %v1967, %v1229
      %v2001 = vsel %vm1970, %v1968, %v1231
      %v2002 = vsel %vm1970, %v1969, %v1233
      %vm2003 = vcmask 130048
      %v2004 = vsel %vm2003, %v1971, %v1299
      %v2005 = vsel %vm2003, %v1972, %v1301
      %v2006 = vsel %vm2003, %v1973, %v1303
      %v2007 = vsel %vm2003, %v1974, %v1305
      %v2008 = vsel %vm2003, %v1975, %v1307
      %v2009 = vsel %vm2003, %v1976, %v1309
      %v2010 = vsel %vm2003, %v1977, %v1311
      %v2011 = vsel %vm2003, %v1978, %v1313
      %v2012 = vsel %vm2003, %v1979, %v1315
      %v2013 = vsel %vm2003, %v1980, %v1317
      %v2014 = vsel %vm2003, %v1981, %v1319
      %v2015 = vsel %vm2003, %v1982, %v1321
      %v2016 = vsel %vm2003, %v1983, %v1323
      %v2017 = vsel %vm2003, %v1984, %v1325
      %v2018 = vsel %vm2003, %v1985, %v1327
      %v2019 = vsel %vm2003, %v1986, %v1329
      %v2020 = vsel %vm2003, %v1987, %v1331
      %v2021 = vsel %vm2003, %v1988, %v1333
      %v2022 = vsel %vm2003, %v1989, %v1335
      %v2023 = vsel %vm2003, %v1990, %v1337
      %v2024 = vsel %vm2003, %v1991, %v1339
      %v2025 = vsel %vm2003, %v1992, %v1341
      %v2026 = vsel %vm2003, %v1993, %v1343
      %v2027 = vsel %vm2003, %v1994, %v1345
      %v2028 = vsel %vm2003, %v1995, %v1347
      %v2029 = vsel %vm2003, %v1996, %v1349
      %v2030 = vsel %vm2003, %v1997, %v1351
      %v2031 = vsel %vm2003, %v1998, %v1353
      %v2032 = vsel %vm2003, %v1999, %v1355
      %v2033 = vsel %vm2003, %v2000, %v1357
      %v2034 = vsel %vm2003, %v2001, %v1359
      %v2035 = vsel %vm2003, %v2002, %v1361
      %vm2036 = vcmask 162816
      %v2037 = vsel %vm2036, %v2004, %v1427
      %v2038 = vsel %vm2036, %v2005, %v1429
      %v2039 = vsel %vm2036, %v2006, %v1431
      %v2040 = vsel %vm2036, %v2007, %v1433
      %v2041 = vsel %vm2036, %v2008, %v1435
      %v2042 = vsel %vm2036, %v2009, %v1437
      %v2043 = vsel %vm2036, %v2010, %v1439
      %v2044 = vsel %vm2036, %v2011, %v1441
      %v2045 = vsel %vm2036, %v2012, %v1443
      %v2046 = vsel %vm2036, %v2013, %v1445
      %v2047 = vsel %vm2036, %v2014, %v1447
      %v2048 = vsel %vm2036, %v2015, %v1449
      %v2049 = vsel %vm2036, %v2016, %v1451
      %v2050 = vsel %vm2036, %v2017, %v1453
      %v2051 = vsel %vm2036, %v2018, %v1455
      %v2052 = vsel %vm2036, %v2019, %v1457
      %v2053 = vsel %vm2036, %v2020, %v1459
      %v2054 = vsel %vm2036, %v2021, %v1461
      %v2055 = vsel %vm2036, %v2022, %v1463
      %v2056 = vsel %vm2036, %v2023, %v1465
      %v2057 = vsel %vm2036, %v2024, %v1467
      %v2058 = vsel %vm2036, %v2025, %v1469
      %v2059 = vsel %vm2036, %v2026, %v1471
      %v2060 = vsel %vm2036, %v2027, %v1473
      %v2061 = vsel %vm2036, %v2028, %v1475
      %v2062 = vsel %vm2036, %v2029, %v1477
      %v2063 = vsel %vm2036, %v2030, %v1479
      %v2064 = vsel %vm2036, %v2031, %v1481
      %v2065 = vsel %vm2036, %v2032, %v1483
      %v2066 = vsel %vm2036, %v2033, %v1485
      %v2067 = vsel %vm2036, %v2034, %v1487
      %v2068 = vsel %vm2036, %v2035, %v1489
      %v2069 = vsel %vm472, %v2037, %v1555
      %v2070 = vsel %vm472, %v2038, %v1557
      %v2071 = vsel %vm472, %v2039, %v1559
      %v2072 = vsel %vm472, %v2040, %v1561
      %v2073 = vsel %vm472, %v2041, %v1563
      %v2074 = vsel %vm472, %v2042, %v1565
      %v2075 = vsel %vm472, %v2043, %v1567
      %v2076 = vsel %vm472, %v2044, %v1569
      %v2077 = vsel %vm472, %v2045, %v1571
      %v2078 = vsel %vm472, %v2046, %v1573
      %v2079 = vsel %vm472, %v2047, %v1575
      %v2080 = vsel %vm472, %v2048, %v1577
      %v2081 = vsel %vm472, %v2049, %v1579
      %v2082 = vsel %vm472, %v2050, %v1581
      %v2083 = vsel %vm472, %v2051, %v1583
      %v2084 = vsel %vm472, %v2052, %v1585
      %v2085 = vsel %vm472, %v2053, %v1587
      %v2086 = vsel %vm472, %v2054, %v1589
      %v2087 = vsel %vm472, %v2055, %v1591
      %v2088 = vsel %vm472, %v2056, %v1593
      %v2089 = vsel %vm472, %v2057, %v1595
      %v2090 = vsel %vm472, %v2058, %v1597
      %v2091 = vsel %vm472, %v2059, %v1599
      %v2092 = vsel %vm472, %v2060, %v1601
      %v2093 = vsel %vm472, %v2061, %v1603
      %v2094 = vsel %vm472, %v2062, %v1605
      %v2095 = vsel %vm472, %v2063, %v1607
      %v2096 = vsel %vm472, %v2064, %v1609
      %v2097 = vsel %vm472, %v2065, %v1611
      %v2098 = vsel %vm472, %v2066, %v1613
      %v2099 = vsel %vm472, %v2067, %v1615
      %v2100 = vsel %vm472, %v2068, %v1617
      %vm2101 = vcmask 228352
      %v2102 = vsel %vm2101, %v2069, %v1683
      %v2103 = vsel %vm2101, %v2070, %v1685
      %v2104 = vsel %vm2101, %v2071, %v1687
      %v2105 = vsel %vm2101, %v2072, %v1689
      %v2106 = vsel %vm2101, %v2073, %v1691
      %v2107 = vsel %vm2101, %v2074, %v1693
      %v2108 = vsel %vm2101, %v2075, %v1695
      %v2109 = vsel %vm2101, %v2076, %v1697
      %v2110 = vsel %vm2101, %v2077, %v1699
      %v2111 = vsel %vm2101, %v2078, %v1701
      %v2112 = vsel %vm2101, %v2079, %v1703
      %v2113 = vsel %vm2101, %v2080, %v1705
      %v2114 = vsel %vm2101, %v2081, %v1707
      %v2115 = vsel %vm2101, %v2082, %v1709
      %v2116 = vsel %vm2101, %v2083, %v1711
      %v2117 = vsel %vm2101, %v2084, %v1713
      %v2118 = vsel %vm2101, %v2085, %v1715
      %v2119 = vsel %vm2101, %v2086, %v1717
      %v2120 = vsel %vm2101, %v2087, %v1719
      %v2121 = vsel %vm2101, %v2088, %v1721
      %v2122 = vsel %vm2101, %v2089, %v1723
      %v2123 = vsel %vm2101, %v2090, %v1725
      %v2124 = vsel %vm2101, %v2091, %v1727
      %v2125 = vsel %vm2101, %v2092, %v1729
      %v2126 = vsel %vm2101, %v2093, %v1731
      %v2127 = vsel %vm2101, %v2094, %v1733
      %v2128 = vsel %vm2101, %v2095, %v1735
      %v2129 = vsel %vm2101, %v2096, %v1737
      %v2130 = vsel %vm2101, %v2097, %v1739
      %v2131 = vsel %vm2101, %v2098, %v1741
      %v2132 = vsel %vm2101, %v2099, %v1743
      %v2133 = vsel %vm2101, %v2100, %v1745
      %vm2134 = vcmask 261120
      %v2135 = vsel %vm2134, %v2102, %v1811
      %v2136 = vsel %vm2134, %v2103, %v1813
      %v2137 = vsel %vm2134, %v2104, %v1815
      %v2138 = vsel %vm2134, %v2105, %v1817
      %v2139 = vsel %vm2134, %v2106, %v1819
      %v2140 = vsel %vm2134, %v2107, %v1821
      %v2141 = vsel %vm2134, %v2108, %v1823
      %v2142 = vsel %vm2134, %v2109, %v1825
      %v2143 = vsel %vm2134, %v2110, %v1827
      %v2144 = vsel %vm2134, %v2111, %v1829
      %v2145 = vsel %vm2134, %v2112, %v1831
      %v2146 = vsel %vm2134, %v2113, %v1833
      %v2147 = vsel %vm2134, %v2114, %v1835
      %v2148 = vsel %vm2134, %v2115, %v1837
      %v2149 = vsel %vm2134, %v2116, %v1839
      %v2150 = vsel %vm2134, %v2117, %v1841
      %v2151 = vsel %vm2134, %v2118, %v1843
      %v2152 = vsel %vm2134, %v2119, %v1845
      %v2153 = vsel %vm2134, %v2120, %v1847
      %v2154 = vsel %vm2134, %v2121, %v1849
      %v2155 = vsel %vm2134, %v2122, %v1851
      %v2156 = vsel %vm2134, %v2123, %v1853
      %v2157 = vsel %vm2134, %v2124, %v1855
      %v2158 = vsel %vm2134, %v2125, %v1857
      %v2159 = vsel %vm2134, %v2126, %v1859
      %v2160 = vsel %vm2134, %v2127, %v1861
      %v2161 = vsel %vm2134, %v2128, %v1863
      %v2162 = vsel %vm2134, %v2129, %v1865
      %v2163 = vsel %vm2134, %v2130, %v1867
      %v2164 = vsel %vm2134, %v2131, %v1869
      %v2165 = vsel %vm2134, %v2132, %v1871
      %v2166 = vsel %vm2134, %v2133, %v1873
      %v2167 = vld [vmem:[%s1] sm:$0xff]
      %v2168 = vld [vmem:[%s1 + $0x8] sm:$0xff]
      %v2169 = vld [vmem:[%s1 + $0x10] sm:$0xff]
      %v2170 = vld [vmem:[%s1 + $0x18] sm:$0xff]
      %v2171 = vld [vmem:[%s1 + $0x20] sm:$0xf]
      %v2172 = vld [vmem:[%s2] sm:$0x1]
      %v2174 = vperm.slane %v2172, 0
      %vm2176 = vcmask 293888
      %v2178 = vsel %vm2176, %v2135, 0
      %v2181 = vsel %vm2176, %v2136, 0
      %v2184 = vsel %vm2176, %v2137, 0
      %v2187 = vsel %vm2176, %v2138, 0
      %v2190 = vsel %vm2176, %v2139, 0
      %v2193 = vsel %vm2176, %v2140, 0
      %v2196 = vsel %vm2176, %v2141, 0
      %v2199 = vsel %vm2176, %v2142, 0
      %v2202 = vsel %vm2176, %v2143, 0
      %v2205 = vsel %vm2176, %v2144, 0
      %v2208 = vsel %vm2176, %v2145, 0
      %v2211 = vsel %vm2176, %v2146, 0
      %v2214 = vsel %vm2176, %v2147, 0
      %v2217 = vsel %vm2176, %v2148, 0
      %v2220 = vsel %vm2176, %v2149, 0
      %v2223 = vsel %vm2176, %v2150, 0
      %v2226 = vsel %vm2176, %v2151, 0
      %v2229 = vsel %vm2176, %v2152, 0
      %v2232 = vsel %vm2176, %v2153, 0
      %v2235 = vsel %vm2176, %v2154, 0
      %v2238 = vsel %vm2176, %v2155, 0
      %v2241 = vsel %vm2176, %v2156, 0
      %v2244 = vsel %vm2176, %v2157, 0
      %v2247 = vsel %vm2176, %v2158, 0
      %v2250 = vsel %vm2176, %v2159, 0
      %v2253 = vsel %vm2176, %v2160, 0
      %v2256 = vsel %vm2176, %v2161, 0
      %v2259 = vsel %vm2176, %v2162, 0
      %v2262 = vsel %vm2176, %v2163, 0
      %v2265 = vsel %vm2176, %v2164, 0
      %v2268 = vsel %vm2176, %v2165, 0
      %v2271 = vsel %vm2176, %v2166, 0
      %vm2273 = vcmask 1043456
      %v2275 = vsel %vm2273, %v2171, 0
      %2277 = vmatpush.msra.mxu0 0.0
      %2278 = vmatpush.msra.mxu0 0.0
      %2279 = vmatpush.msra.mxu0 0.0
      %2280 = vmatpush.msra.mxu0 0.0
      %2281 = vmatpush.msra.mxu0 0.0
      %2282 = vmatpush.msra.mxu0 0.0
      %2283 = vmatpush.msra.mxu0 0.0
      %2284 = vmatpush.msra.mxu0 0.0
      %2285 = vmatpush.msra.mxu0 0.0
      %2286 = vmatpush.msra.mxu0 0.0
      %2287 = vmatpush.msra.mxu0 0.0
      %2288 = vmatpush.msra.mxu0 %v2275
      %2289 = vmatpush.msra.mxu0 %v2170
      %2290 = vmatpush.msra.mxu0 %v2169
      %2291 = vmatpush.msra.mxu0 %v2168
      %2292 = vmatpush.msra.mxu0 %v2167
      %2293 = vmatmul.f32.gmra.mxu0 %v2178
      %v2294 = vpop.f32.mrf.mxu0
      %v2295 = vadd.f32 %v2174, %v2294
      %2296 = vmatmul.f32.gmra.mxu0 %v2181
      %v2297 = vpop.f32.mrf.mxu0
      %v2298 = vadd.f32 %v2174, %v2297
      %2299 = vmatmul.f32.gmra.mxu0 %v2184
      %v2300 = vpop.f32.mrf.mxu0
      %v2301 = vadd.f32 %v2174, %v2300
      %2302 = vmatmul.f32.gmra.mxu0 %v2187
      %v2303 = vpop.f32.mrf.mxu0
      %v2304 = vadd.f32 %v2174, %v2303
      %2305 = vmatmul.f32.gmra.mxu0 %v2190
      %v2306 = vpop.f32.mrf.mxu0
      %v2307 = vadd.f32 %v2174, %v2306
      %2308 = vmatmul.f32.gmra.mxu0 %v2193
      %v2309 = vpop.f32.mrf.mxu0
      %v2310 = vadd.f32 %v2174, %v2309
      %2311 = vmatmul.f32.gmra.mxu0 %v2196
      %v2312 = vpop.f32.mrf.mxu0
      %v2313 = vadd.f32 %v2174, %v2312
      %2314 = vmatmul.f32.gmra.mxu0 %v2199
      %v2315 = vpop.f32.mrf.mxu0
      %v2316 = vadd.f32 %v2174, %v2315
      %2317 = vmatmul.f32.gmra.mxu0 %v2202
      %v2318 = vpop.f32.mrf.mxu0
      %v2319 = vadd.f32 %v2174, %v2318
      %2320 = vmatmul.f32.gmra.mxu0 %v2205
      %v2321 = vpop.f32.mrf.mxu0
      %v2322 = vadd.f32 %v2174, %v2321
      %2323 = vmatmul.f32.gmra.mxu0 %v2208
      %v2324 = vpop.f32.mrf.mxu0
      %v2325 = vadd.f32 %v2174, %v2324
      %2326 = vmatmul.f32.gmra.mxu0 %v2211
      %v2327 = vpop.f32.mrf.mxu0
      %v2328 = vadd.f32 %v2174, %v2327
      %2329 = vmatmul.f32.gmra.mxu0 %v2214
      %v2330 = vpop.f32.mrf.mxu0
      %v2331 = vadd.f32 %v2174, %v2330
      %2332 = vmatmul.f32.gmra.mxu0 %v2217
      %v2333 = vpop.f32.mrf.mxu0
      %v2334 = vadd.f32 %v2174, %v2333
      %2335 = vmatmul.f32.gmra.mxu0 %v2220
      %v2336 = vpop.f32.mrf.mxu0
      %v2337 = vadd.f32 %v2174, %v2336
      %2338 = vmatmul.f32.gmra.mxu0 %v2223
      %v2339 = vpop.f32.mrf.mxu0
      %v2340 = vadd.f32 %v2174, %v2339
      %2341 = vmatmul.f32.gmra.mxu0 %v2226
      %v2342 = vpop.f32.mrf.mxu0
      %v2343 = vadd.f32 %v2174, %v2342
      %2344 = vmatmul.f32.gmra.mxu0 %v2229
      %v2345 = vpop.f32.mrf.mxu0
      %v2346 = vadd.f32 %v2174, %v2345
      %2347 = vmatmul.f32.gmra.mxu0 %v2232
      %v2348 = vpop.f32.mrf.mxu0
      %v2349 = vadd.f32 %v2174, %v2348
      %2350 = vmatmul.f32.gmra.mxu0 %v2235
      %v2351 = vpop.f32.mrf.mxu0
      %v2352 = vadd.f32 %v2174, %v2351
      %2353 = vmatmul.f32.gmra.mxu0 %v2238
      %v2354 = vpop.f32.mrf.mxu0
      %v2355 = vadd.f32 %v2174, %v2354
      %2356 = vmatmul.f32.gmra.mxu0 %v2241
      %v2357 = vpop.f32.mrf.mxu0
      %v2358 = vadd.f32 %v2174, %v2357
      %2359 = vmatmul.f32.gmra.mxu0 %v2244
      %v2360 = vpop.f32.mrf.mxu0
      %v2361 = vadd.f32 %v2174, %v2360
      %2362 = vmatmul.f32.gmra.mxu0 %v2247
      %v2363 = vpop.f32.mrf.mxu0
      %v2364 = vadd.f32 %v2174, %v2363
      %2365 = vmatmul.f32.gmra.mxu0 %v2250
      %v2366 = vpop.f32.mrf.mxu0
      %v2367 = vadd.f32 %v2174, %v2366
      %2368 = vmatmul.f32.gmra.mxu0 %v2253
      %v2369 = vpop.f32.mrf.mxu0
      %v2370 = vadd.f32 %v2174, %v2369
      %2371 = vmatmul.f32.gmra.mxu0 %v2256
      %v2372 = vpop.f32.mrf.mxu0
      %v2373 = vadd.f32 %v2174, %v2372
      %2374 = vmatmul.f32.gmra.mxu0 %v2259
      %v2375 = vpop.f32.mrf.mxu0
      %v2376 = vadd.f32 %v2174, %v2375
      %2377 = vmatmul.f32.gmra.mxu0 %v2262
      %v2378 = vpop.f32.mrf.mxu0
      %v2379 = vadd.f32 %v2174, %v2378
      %2380 = vmatmul.f32.gmra.mxu0 %v2265
      %v2381 = vpop.f32.mrf.mxu0
      %v2382 = vadd.f32 %v2174, %v2381
      %2383 = vmatmul.f32.gmra.mxu0 %v2268
      %v2384 = vpop.f32.mrf.mxu0
      %v2385 = vadd.f32 %v2174, %v2384
      %2386 = vmatmul.f32.gmra.mxu0 %v2271
      %v2387 = vpop.f32.mrf.mxu0
      %v2388 = vadd.f32 %v2174, %v2387
      %2389 = vdwg.mxu0
      %v2390 = vmax.f32 %v2295, 0.0
      %v2391 = vmax.f32 %v2298, 0.0
      %v2392 = vmax.f32 %v2301, 0.0
      %v2393 = vmax.f32 %v2304, 0.0
      %v2394 = vmax.f32 %v2307, 0.0
      %v2395 = vmax.f32 %v2310, 0.0
      %v2396 = vmax.f32 %v2313, 0.0
      %v2397 = vmax.f32 %v2316, 0.0
      %v2398 = vmax.f32 %v2319, 0.0
      %v2399 = vmax.f32 %v2322, 0.0
      %v2400 = vmax.f32 %v2325, 0.0
      %v2401 = vmax.f32 %v2328, 0.0
      %v2402 = vmax.f32 %v2331, 0.0
      %v2403 = vmax.f32 %v2334, 0.0
      %v2404 = vmax.f32 %v2337, 0.0
      %v2405 = vmax.f32 %v2340, 0.0
      %v2406 = vmax.f32 %v2343, 0.0
      %v2407 = vmax.f32 %v2346, 0.0
      %v2408 = vmax.f32 %v2349, 0.0
      %v2409 = vmax.f32 %v2352, 0.0
      %v2410 = vmax.f32 %v2355, 0.0
      %v2411 = vmax.f32 %v2358, 0.0
      %v2412 = vmax.f32 %v2361, 0.0
      %v2413 = vmax.f32 %v2364, 0.0
      %v2414 = vmax.f32 %v2367, 0.0
      %v2415 = vmax.f32 %v2370, 0.0
      %v2416 = vmax.f32 %v2373, 0.0
      %v2417 = vmax.f32 %v2376, 0.0
      %v2418 = vmax.f32 %v2379, 0.0
      %v2419 = vmax.f32 %v2382, 0.0
      %v2420 = vmax.f32 %v2385, 0.0
      %v2421 = vmax.f32 %v2388, 0.0
      %s2422 = scalar_lea.vmem [#allocation3], 24
      %2423 = vst.msk [vmem:[%s2422 + $0x1] sm:$0xff] %vm416, %v2390
      %2424 = vst.msk [vmem:[%s2422 + $0x9] sm:$0xff] %vm416, %v2391
      %2425 = vst.msk [vmem:[%s2422 + $0x19] sm:$0xff] %vm416, %v2392
      %2426 = vst.msk [vmem:[%s2422 + $0x21] sm:$0xff] %vm416, %v2393
      %2427 = vst.msk [vmem:[%s2422 + $0x31] sm:$0xff] %vm416, %v2394
      %2428 = vst.msk [vmem:[%s2422 + $0x39] sm:$0xff] %vm416, %v2395
      %2429 = vst.msk [vmem:[%s2422 + $0x49] sm:$0xff] %vm416, %v2396
      %2430 = vst.msk [vmem:[%s2422 + $0x51] sm:$0xff] %vm416, %v2397
      %2431 = vst.msk [vmem:[%s2422 + $0x61] sm:$0xff] %vm416, %v2398
      %2432 = vst.msk [vmem:[%s2422 + $0x69] sm:$0xff] %vm416, %v2399
      %2433 = vst.msk [vmem:[%s2422 + $0x79] sm:$0xff] %vm416, %v2400
      %2434 = vst.msk [vmem:[%s2422 + $0x81] sm:$0xff] %vm416, %v2401
      %2435 = vst.msk [vmem:[%s2422 + $0x91] sm:$0xff] %vm416, %v2402
      %2436 = vst.msk [vmem:[%s2422 + $0x99] sm:$0xff] %vm416, %v2403
      %2437 = vst.msk [vmem:[%s2422 + $0xa9] sm:$0xff] %vm416, %v2404
      %2438 = vst.msk [vmem:[%s2422 + $0xb1] sm:$0xff] %vm416, %v2405
      %2439 = vst.msk [vmem:[%s2422 + $0xc1] sm:$0xff] %vm416, %v2406
      %2440 = vst.msk [vmem:[%s2422 + $0xc9] sm:$0xff] %vm416, %v2407
      %2441 = vst.msk [vmem:[%s2422 + $0xd9] sm:$0xff] %vm416, %v2408
      %2442 = vst.msk [vmem:[%s2422 + $0xe1] sm:$0xff] %vm416, %v2409
      %2443 = vst.msk [vmem:[%s2422 + $0xf1] sm:$0xff] %vm416, %v2410
      %2444 = vst.msk [vmem:[%s2422 + $0xf9] sm:$0xff] %vm416, %v2411
      %2445 = vst.msk [vmem:[%s2422 + $0x109] sm:$0xff] %vm416, %v2412
      %2446 = vst.msk [vmem:[%s2422 + $0x111] sm:$0xff] %vm416, %v2413
      %2447 = vst.msk [vmem:[%s2422 + $0x121] sm:$0xff] %vm416, %v2414
      %2448 = vst.msk [vmem:[%s2422 + $0x129] sm:$0xff] %vm416, %v2415
      %2449 = vst.msk [vmem:[%s2422 + $0x139] sm:$0xff] %vm416, %v2416
      %2450 = vst.msk [vmem:[%s2422 + $0x141] sm:$0xff] %vm416, %v2417
      %2451 = vst.msk [vmem:[%s2422 + $0x151] sm:$0xff] %vm416, %v2418
      %2452 = vst.msk [vmem:[%s2422 + $0x159] sm:$0xff] %vm416, %v2419
      %2453 = vst.msk [vmem:[%s2422 + $0x169] sm:$0xff] %vm416, %v2420
      %2454 = vst.msk [vmem:[%s2422 + $0x171] sm:$0xff] %vm416, %v2421
      %v2455 = vld [vmem:[#allocation3] ss:$2 sm:$0xff]
      %s2456 = scalar_lea.vmem [#allocation3], 48
      %v2457 = vld [vmem:[%s2456] ss:$2 sm:$0xff]
      %s2458 = scalar_lea.vmem [#allocation3], 96
      %v2459 = vld [vmem:[%s2458] ss:$2 sm:$0xff]
      %s2460 = scalar_lea.vmem [#allocation3], 144
      %v2461 = vld [vmem:[%s2460] ss:$2 sm:$0xff]
      %s2462 = scalar_lea.vmem [#allocation3], 192
      %v2463 = vld [vmem:[%s2462] ss:$2 sm:$0xff]
      %s2464 = scalar_lea.vmem [#allocation3], 240
      %v2465 = vld [vmem:[%s2464] ss:$2 sm:$0xff]
      %s2466 = scalar_lea.vmem [#allocation3], 288
      %v2467 = vld [vmem:[%s2466] ss:$2 sm:$0xff]
      %s2468 = scalar_lea.vmem [#allocation3], 336
      %v2469 = vld [vmem:[%s2468] ss:$2 sm:$0xff]
      %s2470 = scalar_lea.vmem [#allocation3], 1
      %v2471 = vld [vmem:[%s2470] ss:$2 sm:$0xff]
      %s2472 = scalar_lea.vmem [#allocation3], 49
      %v2473 = vld [vmem:[%s2472] ss:$2 sm:$0xff]
      %s2474 = scalar_lea.vmem [#allocation3], 97
      %v2475 = vld [vmem:[%s2474] ss:$2 sm:$0xff]
      %s2476 = scalar_lea.vmem [#allocation3], 145
      %v2477 = vld [vmem:[%s2476] ss:$2 sm:$0xff]
      %s2478 = scalar_lea.vmem [#allocation3], 193
      %v2479 = vld [vmem:[%s2478] ss:$2 sm:$0xff]
      %s2480 = scalar_lea.vmem [#allocation3], 241
      %v2481 = vld [vmem:[%s2480] ss:$2 sm:$0xff]
      %s2482 = scalar_lea.vmem [#allocation3], 289
      %v2483 = vld [vmem:[%s2482] ss:$2 sm:$0xff]
      %s2484 = scalar_lea.vmem [#allocation3], 337
      %v2485 = vld [vmem:[%s2484] ss:$2 sm:$0xff]
      %s2486 = scalar_lea.vmem [#allocation3], 2
      %v2487 = vld [vmem:[%s2486] ss:$2 sm:$0xff]
      %s2488 = scalar_lea.vmem [#allocation3], 50
      %v2489 = vld [vmem:[%s2488] ss:$2 sm:$0xff]
      %s2490 = scalar_lea.vmem [#allocation3], 98
      %v2491 = vld [vmem:[%s2490] ss:$2 sm:$0xff]
      %s2492 = scalar_lea.vmem [#allocation3], 146
      %v2493 = vld [vmem:[%s2492] ss:$2 sm:$0xff]
      %s2494 = scalar_lea.vmem [#allocation3], 194
      %v2495 = vld [vmem:[%s2494] ss:$2 sm:$0xff]
      %s2496 = scalar_lea.vmem [#allocation3], 242
      %v2497 = vld [vmem:[%s2496] ss:$2 sm:$0xff]
      %s2498 = scalar_lea.vmem [#allocation3], 290
      %v2499 = vld [vmem:[%s2498] ss:$2 sm:$0xff]
      %s2500 = scalar_lea.vmem [#allocation3], 338
      %v2501 = vld [vmem:[%s2500] ss:$2 sm:$0xff]
      %v2502 = vld [vmem:[%s2422] ss:$2 sm:$0xff]
      %s2503 = scalar_lea.vmem %s2422, 48 [#allocation3]
      %v2504 = vld [vmem:[%s2503] ss:$2 sm:$0xff]
      %s2505 = scalar_lea.vmem %s2422, 96 [#allocation3]
      %v2506 = vld [vmem:[%s2505] ss:$2 sm:$0xff]
      %s2507 = scalar_lea.vmem %s2422, 144 [#allocation3]
      %v2508 = vld [vmem:[%s2507] ss:$2 sm:$0xff]
      %s2509 = scalar_lea.vmem %s2422, 192 [#allocation3]
      %v2510 = vld [vmem:[%s2509] ss:$2 sm:$0xff]
      %s2511 = scalar_lea.vmem %s2422, 240 [#allocation3]
      %v2512 = vld [vmem:[%s2511] ss:$2 sm:$0xff]
      %s2513 = scalar_lea.vmem %s2422, 288 [#allocation3]
      %v2514 = vld [vmem:[%s2513] ss:$2 sm:$0xff]
      %s2515 = scalar_lea.vmem %s2422, 336 [#allocation3]
      %v2516 = vld [vmem:[%s2515] ss:$2 sm:$0xff]
      %s2517 = scalar_lea.vmem %s2422, 1 [#allocation3]
      %v2518 = vld [vmem:[%s2517] ss:$2 sm:$0xff]
      %s2519 = scalar_lea.vmem %s2422, 49 [#allocation3]
      %v2520 = vld [vmem:[%s2519] ss:$2 sm:$0xff]
      %s2521 = scalar_lea.vmem %s2422, 97 [#allocation3]
      %v2522 = vld [vmem:[%s2521] ss:$2 sm:$0xff]
      %s2523 = scalar_lea.vmem %s2422, 145 [#allocation3]
      %v2524 = vld [vmem:[%s2523] ss:$2 sm:$0xff]
      %s2525 = scalar_lea.vmem %s2422, 193 [#allocation3]
      %v2526 = vld [vmem:[%s2525] ss:$2 sm:$0xff]
      %s2527 = scalar_lea.vmem %s2422, 241 [#allocation3]
      %v2528 = vld [vmem:[%s2527] ss:$2 sm:$0xff]
      %s2529 = scalar_lea.vmem %s2422, 289 [#allocation3]
      %v2530 = vld [vmem:[%s2529] ss:$2 sm:$0xff]
      %s2531 = scalar_lea.vmem %s2422, 337 [#allocation3]
      %v2532 = vld [vmem:[%s2531] ss:$2 sm:$0xff]
      %s2533 = scalar_lea.vmem %s2422, 2 [#allocation3]
      %v2534 = vld [vmem:[%s2533] ss:$2 sm:$0xff]
      %s2535 = scalar_lea.vmem %s2422, 50 [#allocation3]
      %v2536 = vld [vmem:[%s2535] ss:$2 sm:$0xff]
      %s2537 = scalar_lea.vmem %s2422, 98 [#allocation3]
      %v2538 = vld [vmem:[%s2537] ss:$2 sm:$0xff]
      %s2539 = scalar_lea.vmem %s2422, 146 [#allocation3]
      %v2540 = vld [vmem:[%s2539] ss:$2 sm:$0xff]
      %s2541 = scalar_lea.vmem %s2422, 194 [#allocation3]
      %v2542 = vld [vmem:[%s2541] ss:$2 sm:$0xff]
      %s2543 = scalar_lea.vmem %s2422, 242 [#allocation3]
      %v2544 = vld [vmem:[%s2543] ss:$2 sm:$0xff]
      %s2545 = scalar_lea.vmem %s2422, 290 [#allocation3]
      %v2546 = vld [vmem:[%s2545] ss:$2 sm:$0xff]
      %s2547 = scalar_lea.vmem %s2422, 338 [#allocation3]
      %v2548 = vld [vmem:[%s2547] ss:$2 sm:$0xff]
      %s2549 = scalar_lea.vmem [#allocation3], 48
      %v2550 = vld [vmem:[%s2549] ss:$2 sm:$0xff]
      %s2551 = scalar_lea.vmem %s2549, 48 [#allocation3]
      %v2552 = vld [vmem:[%s2551] ss:$2 sm:$0xff]
      %s2553 = scalar_lea.vmem %s2549, 96 [#allocation3]
      %v2554 = vld [vmem:[%s2553] ss:$2 sm:$0xff]
      %s2555 = scalar_lea.vmem %s2549, 144 [#allocation3]
      %v2556 = vld [vmem:[%s2555] ss:$2 sm:$0xff]
      %s2557 = scalar_lea.vmem %s2549, 192 [#allocation3]
      %v2558 = vld [vmem:[%s2557] ss:$2 sm:$0xff]
      %s2559 = scalar_lea.vmem %s2549, 240 [#allocation3]
      %v2560 = vld [vmem:[%s2559] ss:$2 sm:$0xff]
      %s2561 = scalar_lea.vmem %s2549, 288 [#allocation3]
      %v2562 = vld [vmem:[%s2561] ss:$2 sm:$0xff]
      %s2563 = scalar_lea.vmem %s2549, 336 [#allocation3]
      %v2564 = vld [vmem:[%s2563] ss:$2 sm:$0xff]
      %s2565 = scalar_lea.vmem %s2549, 1 [#allocation3]
      %v2566 = vld [vmem:[%s2565] ss:$2 sm:$0xff]
      %s2567 = scalar_lea.vmem %s2549, 49 [#allocation3]
      %v2568 = vld [vmem:[%s2567] ss:$2 sm:$0xff]
      %s2569 = scalar_lea.vmem %s2549, 97 [#allocation3]
      %v2570 = vld [vmem:[%s2569] ss:$2 sm:$0xff]
      %s2571 = scalar_lea.vmem %s2549, 145 [#allocation3]
      %v2572 = vld [vmem:[%s2571] ss:$2 sm:$0xff]
      %s2573 = scalar_lea.vmem %s2549, 193 [#allocation3]
      %v2574 = vld [vmem:[%s2573] ss:$2 sm:$0xff]
      %s2575 = scalar_lea.vmem %s2549, 241 [#allocation3]
      %v2576 = vld [vmem:[%s2575] ss:$2 sm:$0xff]
      %s2577 = scalar_lea.vmem %s2549, 289 [#allocation3]
      %v2578 = vld [vmem:[%s2577] ss:$2 sm:$0xff]
      %s2579 = scalar_lea.vmem %s2549, 337 [#allocation3]
      %v2580 = vld [vmem:[%s2579] ss:$2 sm:$0xff]
      %s2581 = scalar_lea.vmem %s2549, 2 [#allocation3]
      %v2582 = vld [vmem:[%s2581] ss:$2 sm:$0xff]
      %s2583 = scalar_lea.vmem %s2549, 50 [#allocation3]
      %v2584 = vld [vmem:[%s2583] ss:$2 sm:$0xff]
      %s2585 = scalar_lea.vmem %s2549, 98 [#allocation3]
      %v2586 = vld [vmem:[%s2585] ss:$2 sm:$0xff]
      %s2587 = scalar_lea.vmem %s2549, 146 [#allocation3]
      %v2588 = vld [vmem:[%s2587] ss:$2 sm:$0xff]
      %s2589 = scalar_lea.vmem %s2549, 194 [#allocation3]
      %v2590 = vld [vmem:[%s2589] ss:$2 sm:$0xff]
      %s2591 = scalar_lea.vmem %s2549, 242 [#allocation3]
      %v2592 = vld [vmem:[%s2591] ss:$2 sm:$0xff]
      %s2593 = scalar_lea.vmem %s2549, 290 [#allocation3]
      %v2594 = vld [vmem:[%s2593] ss:$2 sm:$0xff]
      %s2595 = scalar_lea.vmem %s2549, 338 [#allocation3]
      %v2596 = vld [vmem:[%s2595] ss:$2 sm:$0xff]
      %2605 = vrot.lane.b32.xlu0 %v2471, 8
      %v2606 = vpop.permute.xlu0 %2605
      %2607 = vrot.lane.b32.xlu0 %v2473, 8
      %v2608 = vpop.permute.xlu0 %2607
      %2609 = vrot.lane.b32.xlu0 %v2475, 8
      %v2610 = vpop.permute.xlu0 %2609
      %2611 = vrot.lane.b32.xlu0 %v2477, 8
      %v2612 = vpop.permute.xlu0 %2611
      %2613 = vrot.lane.b32.xlu0 %v2479, 8
      %v2614 = vpop.permute.xlu0 %2613
      %2615 = vrot.lane.b32.xlu0 %v2481, 8
      %v2616 = vpop.permute.xlu0 %2615
      %2617 = vrot.lane.b32.xlu0 %v2483, 8
      %v2618 = vpop.permute.xlu0 %2617
      %2619 = vrot.lane.b32.xlu0 %v2485, 8
      %v2620 = vpop.permute.xlu0 %2619
      %2637 = vrot.lane.b32.xlu0 %v2487, 16
      %v2638 = vpop.permute.xlu0 %2637
      %2639 = vrot.lane.b32.xlu0 %v2489, 16
      %v2640 = vpop.permute.xlu0 %2639
      %2641 = vrot.lane.b32.xlu0 %v2491, 16
      %v2642 = vpop.permute.xlu0 %2641
      %2643 = vrot.lane.b32.xlu0 %v2493, 16
      %v2644 = vpop.permute.xlu0 %2643
      %2645 = vrot.lane.b32.xlu0 %v2495, 16
      %v2646 = vpop.permute.xlu0 %2645
      %2647 = vrot.lane.b32.xlu0 %v2497, 16
      %v2648 = vpop.permute.xlu0 %2647
      %2649 = vrot.lane.b32.xlu0 %v2499, 16
      %v2650 = vpop.permute.xlu0 %2649
      %2651 = vrot.lane.b32.xlu0 %v2501, 16
      %v2652 = vpop.permute.xlu0 %2651
      %2669 = vrot.lane.b32.xlu0 %v2502, 24
      %v2670 = vpop.permute.xlu0 %2669
      %2671 = vrot.lane.b32.xlu0 %v2504, 24
      %v2672 = vpop.permute.xlu0 %2671
      %2673 = vrot.lane.b32.xlu0 %v2506, 24
      %v2674 = vpop.permute.xlu0 %2673
      %2675 = vrot.lane.b32.xlu0 %v2508, 24
      %v2676 = vpop.permute.xlu0 %2675
      %2677 = vrot.lane.b32.xlu0 %v2510, 24
      %v2678 = vpop.permute.xlu0 %2677
      %2679 = vrot.lane.b32.xlu0 %v2512, 24
      %v2680 = vpop.permute.xlu0 %2679
      %2681 = vrot.lane.b32.xlu0 %v2514, 24
      %v2682 = vpop.permute.xlu0 %2681
      %2683 = vrot.lane.b32.xlu0 %v2516, 24
      %v2684 = vpop.permute.xlu0 %2683
      %2701 = vrot.lane.b32.xlu0 %v2518, 32
      %v2702 = vpop.permute.xlu0 %2701
      %2703 = vrot.lane.b32.xlu0 %v2520, 32
      %v2704 = vpop.permute.xlu0 %2703
      %2705 = vrot.lane.b32.xlu0 %v2522, 32
      %v2706 = vpop.permute.xlu0 %2705
      %2707 = vrot.lane.b32.xlu0 %v2524, 32
      %v2708 = vpop.permute.xlu0 %2707
      %2709 = vrot.lane.b32.xlu0 %v2526, 32
      %v2710 = vpop.permute.xlu0 %2709
      %2711 = vrot.lane.b32.xlu0 %v2528, 32
      %v2712 = vpop.permute.xlu0 %2711
      %2713 = vrot.lane.b32.xlu0 %v2530, 32
      %v2714 = vpop.permute.xlu0 %2713
      %2715 = vrot.lane.b32.xlu0 %v2532, 32
      %v2716 = vpop.permute.xlu0 %2715
      %2733 = vrot.lane.b32.xlu0 %v2534, 40
      %v2734 = vpop.permute.xlu0 %2733
      %2735 = vrot.lane.b32.xlu0 %v2536, 40
      %v2736 = vpop.permute.xlu0 %2735
      %2737 = vrot.lane.b32.xlu0 %v2538, 40
      %v2738 = vpop.permute.xlu0 %2737
      %2739 = vrot.lane.b32.xlu0 %v2540, 40
      %v2740 = vpop.permute.xlu0 %2739
      %2741 = vrot.lane.b32.xlu0 %v2542, 40
      %v2742 = vpop.permute.xlu0 %2741
      %2743 = vrot.lane.b32.xlu0 %v2544, 40
      %v2744 = vpop.permute.xlu0 %2743
      %2745 = vrot.lane.b32.xlu0 %v2546, 40
      %v2746 = vpop.permute.xlu0 %2745
      %2747 = vrot.lane.b32.xlu0 %v2548, 40
      %v2748 = vpop.permute.xlu0 %2747
      %2765 = vrot.lane.b32.xlu0 %v2550, 48
      %v2766 = vpop.permute.xlu0 %2765
      %2767 = vrot.lane.b32.xlu0 %v2552, 48
      %v2768 = vpop.permute.xlu0 %2767
      %2769 = vrot.lane.b32.xlu0 %v2554, 48
      %v2770 = vpop.permute.xlu0 %2769
      %2771 = vrot.lane.b32.xlu0 %v2556, 48
      %v2772 = vpop.permute.xlu0 %2771
      %2773 = vrot.lane.b32.xlu0 %v2558, 48
      %v2774 = vpop.permute.xlu0 %2773
      %2775 = vrot.lane.b32.xlu0 %v2560, 48
      %v2776 = vpop.permute.xlu0 %2775
      %2777 = vrot.lane.b32.xlu0 %v2562, 48
      %v2778 = vpop.permute.xlu0 %2777
      %2779 = vrot.lane.b32.xlu0 %v2564, 48
      %v2780 = vpop.permute.xlu0 %2779
      %2797 = vrot.lane.b32.xlu0 %v2566, 56
      %v2798 = vpop.permute.xlu0 %2797
      %2799 = vrot.lane.b32.xlu0 %v2568, 56
      %v2800 = vpop.permute.xlu0 %2799
      %2801 = vrot.lane.b32.xlu0 %v2570, 56
      %v2802 = vpop.permute.xlu0 %2801
      %2803 = vrot.lane.b32.xlu0 %v2572, 56
      %v2804 = vpop.permute.xlu0 %2803
      %2805 = vrot.lane.b32.xlu0 %v2574, 56
      %v2806 = vpop.permute.xlu0 %2805
      %2807 = vrot.lane.b32.xlu0 %v2576, 56
      %v2808 = vpop.permute.xlu0 %2807
      %2809 = vrot.lane.b32.xlu0 %v2578, 56
      %v2810 = vpop.permute.xlu0 %2809
      %2811 = vrot.lane.b32.xlu0 %v2580, 56
      %v2812 = vpop.permute.xlu0 %2811
      %2829 = vrot.lane.b32.xlu0 %v2582, 64
      %v2830 = vpop.permute.xlu0 %2829
      %2831 = vrot.lane.b32.xlu0 %v2584, 64
      %v2832 = vpop.permute.xlu0 %2831
      %2833 = vrot.lane.b32.xlu0 %v2586, 64
      %v2834 = vpop.permute.xlu0 %2833
      %2835 = vrot.lane.b32.xlu0 %v2588, 64
      %v2836 = vpop.permute.xlu0 %2835
      %2837 = vrot.lane.b32.xlu0 %v2590, 64
      %v2838 = vpop.permute.xlu0 %2837
      %2839 = vrot.lane.b32.xlu0 %v2592, 64
      %v2840 = vpop.permute.xlu0 %2839
      %2841 = vrot.lane.b32.xlu0 %v2594, 64
      %v2842 = vpop.permute.xlu0 %2841
      %2843 = vrot.lane.b32.xlu0 %v2596, 64
      %v2844 = vpop.permute.xlu0 %2843
      %v2853 = vsel %vm416, %v2455, %v2606
      %v2854 = vsel %vm416, %v2457, %v2608
      %v2855 = vsel %vm416, %v2459, %v2610
      %v2856 = vsel %vm416, %v2461, %v2612
      %v2857 = vsel %vm416, %v2463, %v2614
      %v2858 = vsel %vm416, %v2465, %v2616
      %v2859 = vsel %vm416, %v2467, %v2618
      %v2860 = vsel %vm416, %v2469, %v2620
      %v2861 = vsel %vm2003, %v2853, %v2638
      %v2862 = vsel %vm2003, %v2854, %v2640
      %v2863 = vsel %vm2003, %v2855, %v2642
      %v2864 = vsel %vm2003, %v2856, %v2644
      %v2865 = vsel %vm2003, %v2857, %v2646
      %v2866 = vsel %vm2003, %v2858, %v2648
      %v2867 = vsel %vm2003, %v2859, %v2650
      %v2868 = vsel %vm2003, %v2860, %v2652
      %v2869 = vsel %vm472, %v2861, %v2670
      %v2870 = vsel %vm472, %v2862, %v2672
      %v2871 = vsel %vm472, %v2863, %v2674
      %v2872 = vsel %vm472, %v2864, %v2676
      %v2873 = vsel %vm472, %v2865, %v2678
      %v2874 = vsel %vm472, %v2866, %v2680
      %v2875 = vsel %vm472, %v2867, %v2682
      %v2876 = vsel %vm472, %v2868, %v2684
      %v2877 = vsel %vm2134, %v2869, %v2702
      %v2878 = vsel %vm2134, %v2870, %v2704
      %v2879 = vsel %vm2134, %v2871, %v2706
      %v2880 = vsel %vm2134, %v2872, %v2708
      %v2881 = vsel %vm2134, %v2873, %v2710
      %v2882 = vsel %vm2134, %v2874, %v2712
      %v2883 = vsel %vm2134, %v2875, %v2714
      %v2884 = vsel %vm2134, %v2876, %v2716
      %vm2885 = vcmask 326656
      %v2886 = vsel %vm2885, %v2877, %v2734
      %v2887 = vsel %vm2885, %v2878, %v2736
      %v2888 = vsel %vm2885, %v2879, %v2738
      %v2889 = vsel %vm2885, %v2880, %v2740
      %v2890 = vsel %vm2885, %v2881, %v2742
      %v2891 = vsel %vm2885, %v2882, %v2744
      %v2892 = vsel %vm2885, %v2883, %v2746
      %v2893 = vsel %vm2885, %v2884, %v2748
      %vm2894 = vcmask 392192
      %v2895 = vsel %vm2894, %v2886, %v2766
      %v2896 = vsel %vm2894, %v2887, %v2768
      %v2897 = vsel %vm2894, %v2888, %v2770
      %v2898 = vsel %vm2894, %v2889, %v2772
      %v2899 = vsel %vm2894, %v2890, %v2774
      %v2900 = vsel %vm2894, %v2891, %v2776
      %v2901 = vsel %vm2894, %v2892, %v2778
      %v2902 = vsel %vm2894, %v2893, %v2780
      %vm2903 = vcmask 457728
      %v2904 = vsel %vm2903, %v2895, %v2798
      %v2905 = vsel %vm2903, %v2896, %v2800
      %v2906 = vsel %vm2903, %v2897, %v2802
      %v2907 = vsel %vm2903, %v2898, %v2804
      %v2908 = vsel %vm2903, %v2899, %v2806
      %v2909 = vsel %vm2903, %v2900, %v2808
      %v2910 = vsel %vm2903, %v2901, %v2810
      %v2911 = vsel %vm2903, %v2902, %v2812
      %vm2912 = vcmask 523264
      %v2913 = vsel %vm2912, %v2904, %v2830
      %v2914 = vsel %vm2912, %v2905, %v2832
      %v2915 = vsel %vm2912, %v2906, %v2834
      %v2916 = vsel %vm2912, %v2907, %v2836
      %v2917 = vsel %vm2912, %v2908, %v2838
      %v2918 = vsel %vm2912, %v2909, %v2840
      %v2919 = vsel %vm2912, %v2910, %v2842
      %v2920 = vsel %vm2912, %v2911, %v2844
      %v2921 = vld [vmem:[%s3] sm:$0xff]
      %v2922 = vld [vmem:[%s3 + $0x8] sm:$0xff]
      %v2923 = vld [vmem:[%s3 + $0x10] sm:$0xff]
      %v2924 = vld [vmem:[%s3 + $0x18] sm:$0xff]
      %v2925 = vld [vmem:[%s3 + $0x20] sm:$0xff]
      %v2926 = vld [vmem:[%s3 + $0x28] sm:$0xff]
      %v2927 = vld [vmem:[%s3 + $0x30] sm:$0xff]
      %v2928 = vld [vmem:[%s3 + $0x38] sm:$0xff]
      %v2929 = vld [vmem:[%s3 + $0x40] sm:$0xff]
      %v2930 = vld [vmem:[%s4] sm:$0x1]
      %v2932 = vperm.slane %v2930, 0
      %vm2934 = vcmask 588800
      %v2936 = vsel %vm2934, %v2913, 0
      %v2939 = vsel %vm2934, %v2914, 0
      %v2942 = vsel %vm2934, %v2915, 0
      %v2945 = vsel %vm2934, %v2916, 0
      %v2948 = vsel %vm2934, %v2917, 0
      %v2951 = vsel %vm2934, %v2918, 0
      %v2954 = vsel %vm2934, %v2919, 0
      %v2957 = vsel %vm2934, %v2920, 0
      %2959 = vmatpush.msra.mxu0 0.0
      %2960 = vmatpush.msra.mxu0 0.0
      %2961 = vmatpush.msra.mxu0 0.0
      %2962 = vmatpush.msra.mxu0 0.0
      %2963 = vmatpush.msra.mxu0 0.0
      %2964 = vmatpush.msra.mxu0 0.0
      %2965 = vmatpush.msra.mxu0 0.0
      %2966 = vmatpush.msra.mxu0 %v2929
      %2967 = vmatpush.msra.mxu0 %v2928
      %2968 = vmatpush.msra.mxu0 %v2927
      %2969 = vmatpush.msra.mxu0 %v2926
      %2970 = vmatpush.msra.mxu0 %v2925
      %2971 = vmatpush.msra.mxu0 %v2924
      %2972 = vmatpush.msra.mxu0 %v2923
      %2973 = vmatpush.msra.mxu0 %v2922
      %2974 = vmatpush.msra.mxu0 %v2921
      %2975 = vmatmul.f32.gmra.mxu0 %v2936
      %v2976 = vpop.f32.mrf.mxu0
      %v2977 = vadd.f32 %v2932, %v2976
      %2978 = vmatmul.f32.gmra.mxu0 %v2939
      %v2979 = vpop.f32.mrf.mxu0
      %v2980 = vadd.f32 %v2932, %v2979
      %2981 = vmatmul.f32.gmra.mxu0 %v2942
      %v2982 = vpop.f32.mrf.mxu0
      %v2983 = vadd.f32 %v2932, %v2982
      %2984 = vmatmul.f32.gmra.mxu0 %v2945
      %v2985 = vpop.f32.mrf.mxu0
      %v2986 = vadd.f32 %v2932, %v2985
      %2987 = vmatmul.f32.gmra.mxu0 %v2948
      %v2988 = vpop.f32.mrf.mxu0
      %v2989 = vadd.f32 %v2932, %v2988
      %2990 = vmatmul.f32.gmra.mxu0 %v2951
      %v2991 = vpop.f32.mrf.mxu0
      %v2992 = vadd.f32 %v2932, %v2991
      %2993 = vmatmul.f32.gmra.mxu0 %v2954
      %v2994 = vpop.f32.mrf.mxu0
      %v2995 = vadd.f32 %v2932, %v2994
      %2996 = vmatmul.f32.gmra.mxu0 %v2957
      %v2997 = vpop.f32.mrf.mxu0
      %v2998 = vadd.f32 %v2932, %v2997
      %2999 = vdwg.mxu0
      %v3000 = vmax.f32 %v2977, 0.0
      %v3001 = vmax.f32 %v2980, 0.0
      %v3002 = vmax.f32 %v2983, 0.0
      %v3003 = vmax.f32 %v2986, 0.0
      %v3004 = vmax.f32 %v2989, 0.0
      %v3005 = vmax.f32 %v2992, 0.0
      %v3006 = vmax.f32 %v2995, 0.0
      %v3007 = vmax.f32 %v2998, 0.0
      %v3008 = vld [vmem:[%s5] sm:$0xff]
      %v3009 = vld [vmem:[%s5 + $0x8] sm:$0xff]
      %v3010 = vld [vmem:[%s5 + $0x10] sm:$0xff]
      %v3011 = vld [vmem:[%s5 + $0x18] sm:$0xff]
      %v3012 = vld [vmem:[%s5 + $0x20] sm:$0xff]
      %v3013 = vld [vmem:[%s5 + $0x28] sm:$0xff]
      %v3014 = vld [vmem:[%s5 + $0x30] sm:$0xff]
      %v3015 = vld [vmem:[%s5 + $0x38] sm:$0xff]
      %v3016 = vld [vmem:[%s5 + $0x40] sm:$0xff]
      %v3017 = vld [vmem:[%s5 + $0x48] sm:$0xff]
      %v3018 = vld [vmem:[%s5 + $0x50] sm:$0xff]
      %v3019 = vld [vmem:[%s5 + $0x58] sm:$0xff]
      %v3020 = vld [vmem:[%s5 + $0x60] sm:$0xff]
      %v3021 = vld [vmem:[%s5 + $0x68] sm:$0xff]
      %v3022 = vld [vmem:[%s5 + $0x70] sm:$0xff]
      %v3023 = vld [vmem:[%s5 + $0x78] sm:$0xff]
      %v3024 = vld [vmem:[%s5 + $0x80] sm:$0xff]
      %v3025 = vld [vmem:[%s5 + $0x88] sm:$0xff]
      %v3026 = vld [vmem:[%s5 + $0x90] sm:$0xff]
      %v3027 = vld [vmem:[%s5 + $0x98] sm:$0xff]
      %v3028 = vld [vmem:[%s5 + $0xa0] sm:$0xff]
      %v3029 = vld [vmem:[%s5 + $0xa8] sm:$0xff]
      %v3030 = vld [vmem:[%s5 + $0xb0] sm:$0xff]
      %v3031 = vld [vmem:[%s5 + $0xb8] sm:$0xff]
      %v3032 = vld [vmem:[%s5 + $0xc0] sm:$0xff]
      %v3033 = vld [vmem:[%s5 + $0xc8] sm:$0xff]
      %v3034 = vld [vmem:[%s5 + $0xd0] sm:$0xff]
      %v3035 = vld [vmem:[%s5 + $0xd8] sm:$0xff]
      %v3036 = vld [vmem:[%s5 + $0xe0] sm:$0xff]
      %v3037 = vld [vmem:[%s5 + $0xe8] sm:$0xff]
      %v3038 = vld [vmem:[%s5 + $0xf0] sm:$0xff]
      %v3039 = vld [vmem:[%s5 + $0xf8] sm:$0xff]
      %v3041 = vsel %vm2912, %v3008, 0
      %v3044 = vsel %vm2912, %v3009, 0
      %v3047 = vsel %vm2912, %v3010, 0
      %v3050 = vsel %vm2912, %v3011, 0
      %v3053 = vsel %vm2912, %v3012, 0
      %v3056 = vsel %vm2912, %v3013, 0
      %v3059 = vsel %vm2912, %v3014, 0
      %v3062 = vsel %vm2912, %v3015, 0
      %v3065 = vsel %vm2912, %v3016, 0
      %v3068 = vsel %vm2912, %v3017, 0
      %v3071 = vsel %vm2912, %v3018, 0
      %v3074 = vsel %vm2912, %v3019, 0
      %v3077 = vsel %vm2912, %v3020, 0
      %v3080 = vsel %vm2912, %v3021, 0
      %v3083 = vsel %vm2912, %v3022, 0
      %v3086 = vsel %vm2912, %v3023, 0
      %v3089 = vsel %vm2912, %v3024, 0
      %v3092 = vsel %vm2912, %v3025, 0
      %v3095 = vsel %vm2912, %v3026, 0
      %v3098 = vsel %vm2912, %v3027, 0
      %v3101 = vsel %vm2912, %v3028, 0
      %v3104 = vsel %vm2912, %v3029, 0
      %v3107 = vsel %vm2912, %v3030, 0
      %v3110 = vsel %vm2912, %v3031, 0
      %v3113 = vsel %vm2912, %v3032, 0
      %v3116 = vsel %vm2912, %v3033, 0
      %v3119 = vsel %vm2912, %v3034, 0
      %v3122 = vsel %vm2912, %v3035, 0
      %v3125 = vsel %vm2912, %v3036, 0
      %v3128 = vsel %vm2912, %v3037, 0
      %v3131 = vsel %vm2912, %v3038, 0
      %v3134 = vsel %vm2912, %v3039, 0
      %3136 = vmatpush.msra.mxu0 0.0
      %3137 = vmatpush.msra.mxu0 0.0
      %3138 = vmatpush.msra.mxu0 0.0
      %3139 = vmatpush.msra.mxu0 0.0
      %3140 = vmatpush.msra.mxu0 0.0
      %3141 = vmatpush.msra.mxu0 0.0
      %3142 = vmatpush.msra.mxu0 0.0
      %3143 = vmatpush.msra.mxu0 0.0
      %3144 = vmatpush.msra.mxu0 %v3007
      %3145 = vmatpush.msra.mxu0 %v3006
      %3146 = vmatpush.msra.mxu0 %v3005
      %3147 = vmatpush.msra.mxu0 %v3004
      %3148 = vmatpush.msra.mxu0 %v3003
      %3149 = vmatpush.msra.mxu0 %v3002
      %3150 = vmatpush.msra.mxu0 %v3001
      %3151 = vmatpush.msra.mxu0 %v3000
      %3152 = vmatmul.f32.gmra.mxu0 %v3041
      %v3153 = vpop.f32.mrf.mxu0
      %v3154 = vadd.f32 0.0, %v3153
      %3155 = vmatmul.f32.gmra.mxu0 %v3044
      %v3156 = vpop.f32.mrf.mxu0
      %v3157 = vadd.f32 0.0, %v3156
      %3158 = vmatmul.f32.gmra.mxu0 %v3047
      %v3159 = vpop.f32.mrf.mxu0
      %v3160 = vadd.f32 0.0, %v3159
      %3161 = vmatmul.f32.gmra.mxu0 %v3050
      %v3162 = vpop.f32.mrf.mxu0
      %v3163 = vadd.f32 0.0, %v3162
      %3164 = vmatmul.f32.gmra.mxu0 %v3053
      %v3165 = vpop.f32.mrf.mxu0
      %v3166 = vadd.f32 0.0, %v3165
      %3167 = vmatmul.f32.gmra.mxu0 %v3056
      %v3168 = vpop.f32.mrf.mxu0
      %v3169 = vadd.f32 0.0, %v3168
      %3170 = vmatmul.f32.gmra.mxu0 %v3059
      %v3171 = vpop.f32.mrf.mxu0
      %v3172 = vadd.f32 0.0, %v3171
      %3173 = vmatmul.f32.gmra.mxu0 %v3062
      %v3174 = vpop.f32.mrf.mxu0
      %v3175 = vadd.f32 0.0, %v3174
      %3176 = vmatmul.f32.gmra.mxu0 %v3065
      %v3177 = vpop.f32.mrf.mxu0
      %v3178 = vadd.f32 0.0, %v3177
      %3179 = vmatmul.f32.gmra.mxu0 %v3068
      %v3180 = vpop.f32.mrf.mxu0
      %v3181 = vadd.f32 0.0, %v3180
      %3182 = vmatmul.f32.gmra.mxu0 %v3071
      %v3183 = vpop.f32.mrf.mxu0
      %v3184 = vadd.f32 0.0, %v3183
      %3185 = vmatmul.f32.gmra.mxu0 %v3074
      %v3186 = vpop.f32.mrf.mxu0
      %v3187 = vadd.f32 0.0, %v3186
      %3188 = vmatmul.f32.gmra.mxu0 %v3077
      %v3189 = vpop.f32.mrf.mxu0
      %v3190 = vadd.f32 0.0, %v3189
      %3191 = vmatmul.f32.gmra.mxu0 %v3080
      %v3192 = vpop.f32.mrf.mxu0
      %v3193 = vadd.f32 0.0, %v3192
      %3194 = vmatmul.f32.gmra.mxu0 %v3083
      %v3195 = vpop.f32.mrf.mxu0
      %v3196 = vadd.f32 0.0, %v3195
      %3197 = vmatmul.f32.gmra.mxu0 %v3086
      %v3198 = vpop.f32.mrf.mxu0
      %v3199 = vadd.f32 0.0, %v3198
      %3200 = vmatmul.f32.gmra.mxu0 %v3089
      %v3201 = vpop.f32.mrf.mxu0
      %v3202 = vadd.f32 0.0, %v3201
      %3203 = vmatmul.f32.gmra.mxu0 %v3092
      %v3204 = vpop.f32.mrf.mxu0
      %v3205 = vadd.f32 0.0, %v3204
      %3206 = vmatmul.f32.gmra.mxu0 %v3095
      %v3207 = vpop.f32.mrf.mxu0
      %v3208 = vadd.f32 0.0, %v3207
      %3209 = vmatmul.f32.gmra.mxu0 %v3098
      %v3210 = vpop.f32.mrf.mxu0
      %v3211 = vadd.f32 0.0, %v3210
      %3212 = vmatmul.f32.gmra.mxu0 %v3101
      %v3213 = vpop.f32.mrf.mxu0
      %v3214 = vadd.f32 0.0, %v3213
      %3215 = vmatmul.f32.gmra.mxu0 %v3104
      %v3216 = vpop.f32.mrf.mxu0
      %v3217 = vadd.f32 0.0, %v3216
      %3218 = vmatmul.f32.gmra.mxu0 %v3107
      %v3219 = vpop.f32.mrf.mxu0
      %v3220 = vadd.f32 0.0, %v3219
      %3221 = vmatmul.f32.gmra.mxu0 %v3110
      %v3222 = vpop.f32.mrf.mxu0
      %v3223 = vadd.f32 0.0, %v3222
      %3224 = vmatmul.f32.gmra.mxu0 %v3113
      %v3225 = vpop.f32.mrf.mxu0
      %v3226 = vadd.f32 0.0, %v3225
      %3227 = vmatmul.f32.gmra.mxu0 %v3116
      %v3228 = vpop.f32.mrf.mxu0
      %v3229 = vadd.f32 0.0, %v3228
      %3230 = vmatmul.f32.gmra.mxu0 %v3119
      %v3231 = vpop.f32.mrf.mxu0
      %v3232 = vadd.f32 0.0, %v3231
      %3233 = vmatmul.f32.gmra.mxu0 %v3122
      %v3234 = vpop.f32.mrf.mxu0
      %v3235 = vadd.f32 0.0, %v3234
      %3236 = vmatmul.f32.gmra.mxu0 %v3125
      %v3237 = vpop.f32.mrf.mxu0
      %v3238 = vadd.f32 0.0, %v3237
      %3239 = vmatmul.f32.gmra.mxu0 %v3128
      %v3240 = vpop.f32.mrf.mxu0
      %v3241 = vadd.f32 0.0, %v3240
      %3242 = vmatmul.f32.gmra.mxu0 %v3131
      %v3243 = vpop.f32.mrf.mxu0
      %v3244 = vadd.f32 0.0, %v3243
      %3245 = vmatmul.f32.gmra.mxu0 %v3134
      %v3246 = vpop.f32.mrf.mxu0
      %v3247 = vadd.f32 0.0, %v3246
      %3248 = vdwg.mxu0
      %s3249 = scalar_lea.vmem [#allocation4], 24
      %3250 = vst.msk [vmem:[%s3249 + $0x1] sm:$0xff] %vm2003, %v3154
      %3251 = vst.msk [vmem:[%s3249 + $0x9] sm:$0xff] %vm2003, %v3157
      %3252 = vst.msk [vmem:[%s3249 + $0x19] sm:$0xff] %vm2003, %v3160
      %3253 = vst.msk [vmem:[%s3249 + $0x21] sm:$0xff] %vm2003, %v3163
      %3254 = vst.msk [vmem:[%s3249 + $0x31] sm:$0xff] %vm2003, %v3166
      %3255 = vst.msk [vmem:[%s3249 + $0x39] sm:$0xff] %vm2003, %v3169
      %3256 = vst.msk [vmem:[%s3249 + $0x49] sm:$0xff] %vm2003, %v3172
      %3257 = vst.msk [vmem:[%s3249 + $0x51] sm:$0xff] %vm2003, %v3175
      %3258 = vst.msk [vmem:[%s3249 + $0x61] sm:$0xff] %vm2003, %v3178
      %3259 = vst.msk [vmem:[%s3249 + $0x69] sm:$0xff] %vm2003, %v3181
      %3260 = vst.msk [vmem:[%s3249 + $0x79] sm:$0xff] %vm2003, %v3184
      %3261 = vst.msk [vmem:[%s3249 + $0x81] sm:$0xff] %vm2003, %v3187
      %3262 = vst.msk [vmem:[%s3249 + $0x91] sm:$0xff] %vm2003, %v3190
      %3263 = vst.msk [vmem:[%s3249 + $0x99] sm:$0xff] %vm2003, %v3193
      %3264 = vst.msk [vmem:[%s3249 + $0xa9] sm:$0xff] %vm2003, %v3196
      %3265 = vst.msk [vmem:[%s3249 + $0xb1] sm:$0xff] %vm2003, %v3199
      %3266 = vst.msk [vmem:[%s3249 + $0xc1] sm:$0xff] %vm2003, %v3202
      %3267 = vst.msk [vmem:[%s3249 + $0xc9] sm:$0xff] %vm2003, %v3205
      %3268 = vst.msk [vmem:[%s3249 + $0xd9] sm:$0xff] %vm2003, %v3208
      %3269 = vst.msk [vmem:[%s3249 + $0xe1] sm:$0xff] %vm2003, %v3211
      %3270 = vst.msk [vmem:[%s3249 + $0xf1] sm:$0xff] %vm2003, %v3214
      %3271 = vst.msk [vmem:[%s3249 + $0xf9] sm:$0xff] %vm2003, %v3217
      %3272 = vst.msk [vmem:[%s3249 + $0x109] sm:$0xff] %vm2003, %v3220
      %3273 = vst.msk [vmem:[%s3249 + $0x111] sm:$0xff] %vm2003, %v3223
      %3274 = vst.msk [vmem:[%s3249 + $0x121] sm:$0xff] %vm2003, %v3226
      %3275 = vst.msk [vmem:[%s3249 + $0x129] sm:$0xff] %vm2003, %v3229
      %3276 = vst.msk [vmem:[%s3249 + $0x139] sm:$0xff] %vm2003, %v3232
      %3277 = vst.msk [vmem:[%s3249 + $0x141] sm:$0xff] %vm2003, %v3235
      %3278 = vst.msk [vmem:[%s3249 + $0x151] sm:$0xff] %vm2003, %v3238
      %3279 = vst.msk [vmem:[%s3249 + $0x159] sm:$0xff] %vm2003, %v3241
      %3280 = vst.msk [vmem:[%s3249 + $0x169] sm:$0xff] %vm2003, %v3244
      %3281 = vst.msk [vmem:[%s3249 + $0x171] sm:$0xff] %vm2003, %v3247
      %3314 = vrot.lane.b32.xlu0 %v2390, 16
      %v3315 = vpop.permute.xlu0 %3314
      %3316 = vrot.lane.b32.xlu0 %v2391, 16
      %v3317 = vpop.permute.xlu0 %3316
      %3318 = vrot.lane.b32.xlu0 %v2392, 16
      %v3319 = vpop.permute.xlu0 %3318
      %3320 = vrot.lane.b32.xlu0 %v2393, 16
      %v3321 = vpop.permute.xlu0 %3320
      %3322 = vrot.lane.b32.xlu0 %v2394, 16
      %v3323 = vpop.permute.xlu0 %3322
      %3324 = vrot.lane.b32.xlu0 %v2395, 16
      %v3325 = vpop.permute.xlu0 %3324
      %3326 = vrot.lane.b32.xlu0 %v2396, 16
      %v3327 = vpop.permute.xlu0 %3326
      %3328 = vrot.lane.b32.xlu0 %v2397, 16
      %v3329 = vpop.permute.xlu0 %3328
      %3330 = vrot.lane.b32.xlu0 %v2398, 16
      %v3331 = vpop.permute.xlu0 %3330
      %3332 = vrot.lane.b32.xlu0 %v2399, 16
      %v3333 = vpop.permute.xlu0 %3332
      %3334 = vrot.lane.b32.xlu0 %v2400, 16
      %v3335 = vpop.permute.xlu0 %3334
      %3336 = vrot.lane.b32.xlu0 %v2401, 16
      %v3337 = vpop.permute.xlu0 %3336
      %3338 = vrot.lane.b32.xlu0 %v2402, 16
      %v3339 = vpop.permute.xlu0 %3338
      %3340 = vrot.lane.b32.xlu0 %v2403, 16
      %v3341 = vpop.permute.xlu0 %3340
      %3342 = vrot.lane.b32.xlu0 %v2404, 16
      %v3343 = vpop.permute.xlu0 %3342
      %3344 = vrot.lane.b32.xlu0 %v2405, 16
      %v3345 = vpop.permute.xlu0 %3344
      %3346 = vrot.lane.b32.xlu0 %v2406, 16
      %v3347 = vpop.permute.xlu0 %3346
      %3348 = vrot.lane.b32.xlu0 %v2407, 16
      %v3349 = vpop.permute.xlu0 %3348
      %3350 = vrot.lane.b32.xlu0 %v2408, 16
      %v3351 = vpop.permute.xlu0 %3350
      %3352 = vrot.lane.b32.xlu0 %v2409, 16
      %v3353 = vpop.permute.xlu0 %3352
      %3354 = vrot.lane.b32.xlu0 %v2410, 16
      %v3355 = vpop.permute.xlu0 %3354
      %3356 = vrot.lane.b32.xlu0 %v2411, 16
      %v3357 = vpop.permute.xlu0 %3356
      %3358 = vrot.lane.b32.xlu0 %v2412, 16
      %v3359 = vpop.permute.xlu0 %3358
      %3360 = vrot.lane.b32.xlu0 %v2413, 16
      %v3361 = vpop.permute.xlu0 %3360
      %3362 = vrot.lane.b32.xlu0 %v2414, 16
      %v3363 = vpop.permute.xlu0 %3362
      %3364 = vrot.lane.b32.xlu0 %v2415, 16
      %v3365 = vpop.permute.xlu0 %3364
      %3366 = vrot.lane.b32.xlu0 %v2416, 16
      %v3367 = vpop.permute.xlu0 %3366
      %3368 = vrot.lane.b32.xlu0 %v2417, 16
      %v3369 = vpop.permute.xlu0 %3368
      %3370 = vrot.lane.b32.xlu0 %v2418, 16
      %v3371 = vpop.permute.xlu0 %3370
      %3372 = vrot.lane.b32.xlu0 %v2419, 16
      %v3373 = vpop.permute.xlu0 %3372
      %3374 = vrot.lane.b32.xlu0 %v2420, 16
      %v3375 = vpop.permute.xlu0 %3374
      %3376 = vrot.lane.b32.xlu0 %v2421, 16
      %v3377 = vpop.permute.xlu0 %3376
      %vm3410 = vcmask 195712
      %3411 = vst.msk [vmem:[%s3249 + $0x1] sm:$0xff] %vm3410, %v3315
      %3412 = vst.msk [vmem:[%s3249 + $0x9] sm:$0xff] %vm3410, %v3317
      %3413 = vst.msk [vmem:[%s3249 + $0x19] sm:$0xff] %vm3410, %v3319
      %3414 = vst.msk [vmem:[%s3249 + $0x21] sm:$0xff] %vm3410, %v3321
      %3415 = vst.msk [vmem:[%s3249 + $0x31] sm:$0xff] %vm3410, %v3323
      %3416 = vst.msk [vmem:[%s3249 + $0x39] sm:$0xff] %vm3410, %v3325
      %3417 = vst.msk [vmem:[%s3249 + $0x49] sm:$0xff] %vm3410, %v3327
      %3418 = vst.msk [vmem:[%s3249 + $0x51] sm:$0xff] %vm3410, %v3329
      %3419 = vst.msk [vmem:[%s3249 + $0x61] sm:$0xff] %vm3410, %v3331
      %3420 = vst.msk [vmem:[%s3249 + $0x69] sm:$0xff] %vm3410, %v3333
      %3421 = vst.msk [vmem:[%s3249 + $0x79] sm:$0xff] %vm3410, %v3335
      %3422 = vst.msk [vmem:[%s3249 + $0x81] sm:$0xff] %vm3410, %v3337
      %3423 = vst.msk [vmem:[%s3249 + $0x91] sm:$0xff] %vm3410, %v3339
      %3424 = vst.msk [vmem:[%s3249 + $0x99] sm:$0xff] %vm3410, %v3341
      %3425 = vst.msk [vmem:[%s3249 + $0xa9] sm:$0xff] %vm3410, %v3343
      %3426 = vst.msk [vmem:[%s3249 + $0xb1] sm:$0xff] %vm3410, %v3345
      %3427 = vst.msk [vmem:[%s3249 + $0xc1] sm:$0xff] %vm3410, %v3347
      %3428 = vst.msk [vmem:[%s3249 + $0xc9] sm:$0xff] %vm3410, %v3349
      %3429 = vst.msk [vmem:[%s3249 + $0xd9] sm:$0xff] %vm3410, %v3351
      %3430 = vst.msk [vmem:[%s3249 + $0xe1] sm:$0xff] %vm3410, %v3353
      %3431 = vst.msk [vmem:[%s3249 + $0xf1] sm:$0xff] %vm3410, %v3355
      %3432 = vst.msk [vmem:[%s3249 + $0xf9] sm:$0xff] %vm3410, %v3357
      %3433 = vst.msk [vmem:[%s3249 + $0x109] sm:$0xff] %vm3410, %v3359
      %3434 = vst.msk [vmem:[%s3249 + $0x111] sm:$0xff] %vm3410, %v3361
      %3435 = vst.msk [vmem:[%s3249 + $0x121] sm:$0xff] %vm3410, %v3363
      %3436 = vst.msk [vmem:[%s3249 + $0x129] sm:$0xff] %vm3410, %v3365
      %3437 = vst.msk [vmem:[%s3249 + $0x139] sm:$0xff] %vm3410, %v3367
      %3438 = vst.msk [vmem:[%s3249 + $0x141] sm:$0xff] %vm3410, %v3369
      %3439 = vst.msk [vmem:[%s3249 + $0x151] sm:$0xff] %vm3410, %v3371
      %3440 = vst.msk [vmem:[%s3249 + $0x159] sm:$0xff] %vm3410, %v3373
      %3441 = vst.msk [vmem:[%s3249 + $0x169] sm:$0xff] %vm3410, %v3375
      %3442 = vst.msk [vmem:[%s3249 + $0x171] sm:$0xff] %vm3410, %v3377
      %v3443 = vld [vmem:[#allocation4] sm:$0xff]
      %v3444 = vld [vmem:[#allocation4 + $0x8] sm:$0xff]
      %v3445 = vld [vmem:[#allocation4 + $0x18] sm:$0xff]
      %v3446 = vld [vmem:[#allocation4 + $0x20] sm:$0xff]
      %v3447 = vld [vmem:[#allocation4 + $0x30] sm:$0xff]
      %v3448 = vld [vmem:[#allocation4 + $0x38] sm:$0xff]
      %v3449 = vld [vmem:[#allocation4 + $0x48] sm:$0xff]
      %v3450 = vld [vmem:[#allocation4 + $0x50] sm:$0xff]
      %v3451 = vld [vmem:[#allocation4 + $0x60] sm:$0xff]
      %v3452 = vld [vmem:[#allocation4 + $0x68] sm:$0xff]
      %v3453 = vld [vmem:[#allocation4 + $0x78] sm:$0xff]
      %v3454 = vld [vmem:[#allocation4 + $0x80] sm:$0xff]
      %v3455 = vld [vmem:[#allocation4 + $0x90] sm:$0xff]
      %v3456 = vld [vmem:[#allocation4 + $0x98] sm:$0xff]
      %v3457 = vld [vmem:[#allocation4 + $0xa8] sm:$0xff]
      %v3458 = vld [vmem:[#allocation4 + $0xb0] sm:$0xff]
      %v3459 = vld [vmem:[#allocation4 + $0xc0] sm:$0xff]
      %v3460 = vld [vmem:[#allocation4 + $0xc8] sm:$0xff]
      %v3461 = vld [vmem:[#allocation4 + $0xd8] sm:$0xff]
      %v3462 = vld [vmem:[#allocation4 + $0xe0] sm:$0xff]
      %v3463 = vld [vmem:[#allocation4 + $0xf0] sm:$0xff]
      %v3464 = vld [vmem:[#allocation4 + $0xf8] sm:$0xff]
      %v3465 = vld [vmem:[#allocation4 + $0x108] sm:$0xff]
      %v3466 = vld [vmem:[#allocation4 + $0x110] sm:$0xff]
      %v3467 = vld [vmem:[#allocation4 + $0x120] sm:$0xff]
      %v3468 = vld [vmem:[#allocation4 + $0x128] sm:$0xff]
      %v3469 = vld [vmem:[#allocation4 + $0x138] sm:$0xff]
      %v3470 = vld [vmem:[#allocation4 + $0x140] sm:$0xff]
      %v3471 = vld [vmem:[#allocation4 + $0x150] sm:$0xff]
      %v3472 = vld [vmem:[#allocation4 + $0x158] sm:$0xff]
      %v3473 = vld [vmem:[#allocation4 + $0x168] sm:$0xff]
      %v3474 = vld [vmem:[#allocation4 + $0x170] sm:$0xff]
      %v3475 = vld [vmem:[#allocation4 + $0x1] sm:$0xff]
      %v3476 = vld [vmem:[#allocation4 + $0x9] sm:$0xff]
      %v3477 = vld [vmem:[#allocation4 + $0x19] sm:$0xff]
      %v3478 = vld [vmem:[#allocation4 + $0x21] sm:$0xff]
      %v3479 = vld [vmem:[#allocation4 + $0x31] sm:$0xff]
      %v3480 = vld [vmem:[#allocation4 + $0x39] sm:$0xff]
      %v3481 = vld [vmem:[#allocation4 + $0x49] sm:$0xff]
      %v3482 = vld [vmem:[#allocation4 + $0x51] sm:$0xff]
      %v3483 = vld [vmem:[#allocation4 + $0x61] sm:$0xff]
      %v3484 = vld [vmem:[#allocation4 + $0x69] sm:$0xff]
      %v3485 = vld [vmem:[#allocation4 + $0x79] sm:$0xff]
      %v3486 = vld [vmem:[#allocation4 + $0x81] sm:$0xff]
      %v3487 = vld [vmem:[#allocation4 + $0x91] sm:$0xff]
      %v3488 = vld [vmem:[#allocation4 + $0x99] sm:$0xff]
      %v3489 = vld [vmem:[#allocation4 + $0xa9] sm:$0xff]
      %v3490 = vld [vmem:[#allocation4 + $0xb1] sm:$0xff]
      %v3491 = vld [vmem:[#allocation4 + $0xc1] sm:$0xff]
      %v3492 = vld [vmem:[#allocation4 + $0xc9] sm:$0xff]
      %v3493 = vld [vmem:[#allocation4 + $0xd9] sm:$0xff]
      %v3494 = vld [vmem:[#allocation4 + $0xe1] sm:$0xff]
      %v3495 = vld [vmem:[#allocation4 + $0xf1] sm:$0xff]
      %v3496 = vld [vmem:[#allocation4 + $0xf9] sm:$0xff]
      %v3497 = vld [vmem:[#allocation4 + $0x109] sm:$0xff]
      %v3498 = vld [vmem:[#allocation4 + $0x111] sm:$0xff]
      %v3499 = vld [vmem:[#allocation4 + $0x121] sm:$0xff]
      %v3500 = vld [vmem:[#allocation4 + $0x129] sm:$0xff]
      %v3501 = vld [vmem:[#allocation4 + $0x139] sm:$0xff]
      %v3502 = vld [vmem:[#allocation4 + $0x141] sm:$0xff]
      %v3503 = vld [vmem:[#allocation4 + $0x151] sm:$0xff]
      %v3504 = vld [vmem:[#allocation4 + $0x159] sm:$0xff]
      %v3505 = vld [vmem:[#allocation4 + $0x169] sm:$0xff]
      %v3506 = vld [vmem:[#allocation4 + $0x171] sm:$0xff]
      %v3507 = vld [vmem:[#allocation4 + $0x2] sm:$0xff]
      %v3508 = vld [vmem:[#allocation4 + $0xa] sm:$0xff]
      %v3509 = vld [vmem:[#allocation4 + $0x1a] sm:$0xff]
      %v3510 = vld [vmem:[#allocation4 + $0x22] sm:$0xff]
      %v3511 = vld [vmem:[#allocation4 + $0x32] sm:$0xff]
      %v3512 = vld [vmem:[#allocation4 + $0x3a] sm:$0xff]
      %v3513 = vld [vmem:[#allocation4 + $0x4a] sm:$0xff]
      %v3514 = vld [vmem:[#allocation4 + $0x52] sm:$0xff]
      %v3515 = vld [vmem:[#allocation4 + $0x62] sm:$0xff]
      %v3516 = vld [vmem:[#allocation4 + $0x6a] sm:$0xff]
      %v3517 = vld [vmem:[#allocation4 + $0x7a] sm:$0xff]
      %v3518 = vld [vmem:[#allocation4 + $0x82] sm:$0xff]
      %v3519 = vld [vmem:[#allocation4 + $0x92] sm:$0xff]
      %v3520 = vld [vmem:[#allocation4 + $0x9a] sm:$0xff]
      %v3521 = vld [vmem:[#allocation4 + $0xaa] sm:$0xff]
      %v3522 = vld [vmem:[#allocation4 + $0xb2] sm:$0xff]
      %v3523 = vld [vmem:[#allocation4 + $0xc2] sm:$0xff]
      %v3524 = vld [vmem:[#allocation4 + $0xca] sm:$0xff]
      %v3525 = vld [vmem:[#allocation4 + $0xda] sm:$0xff]
      %v3526 = vld [vmem:[#allocation4 + $0xe2] sm:$0xff]
      %v3527 = vld [vmem:[#allocation4 + $0xf2] sm:$0xff]
      %v3528 = vld [vmem:[#allocation4 + $0xfa] sm:$0xff]
      %v3529 = vld [vmem:[#allocation4 + $0x10a] sm:$0xff]
      %v3530 = vld [vmem:[#allocation4 + $0x112] sm:$0xff]
      %v3531 = vld [vmem:[#allocation4 + $0x122] sm:$0xff]
      %v3532 = vld [vmem:[#allocation4 + $0x12a] sm:$0xff]
      %v3533 = vld [vmem:[#allocation4 + $0x13a] sm:$0xff]
      %v3534 = vld [vmem:[#allocation4 + $0x142] sm:$0xff]
      %v3535 = vld [vmem:[#allocation4 + $0x152] sm:$0xff]
      %v3536 = vld [vmem:[#allocation4 + $0x15a] sm:$0xff]
      %v3537 = vld [vmem:[#allocation4 + $0x16a] sm:$0xff]
      %v3538 = vld [vmem:[#allocation4 + $0x172] sm:$0xff]
      %v3539 = vld [vmem:[%s3249] sm:$0xff]
      %v3540 = vld [vmem:[%s3249 + $0x8] sm:$0xff]
      %v3541 = vld [vmem:[%s3249 + $0x18] sm:$0xff]
      %v3542 = vld [vmem:[%s3249 + $0x20] sm:$0xff]
      %v3543 = vld [vmem:[%s3249 + $0x30] sm:$0xff]
      %v3544 = vld [vmem:[%s3249 + $0x38] sm:$0xff]
      %v3545 = vld [vmem:[%s3249 + $0x48] sm:$0xff]
      %v3546 = vld [vmem:[%s3249 + $0x50] sm:$0xff]
      %v3547 = vld [vmem:[%s3249 + $0x60] sm:$0xff]
      %v3548 = vld [vmem:[%s3249 + $0x68] sm:$0xff]
      %v3549 = vld [vmem:[%s3249 + $0x78] sm:$0xff]
      %v3550 = vld [vmem:[%s3249 + $0x80] sm:$0xff]
      %v3551 = vld [vmem:[%s3249 + $0x90] sm:$0xff]
      %v3552 = vld [vmem:[%s3249 + $0x98] sm:$0xff]
      %v3553 = vld [vmem:[%s3249 + $0xa8] sm:$0xff]
      %v3554 = vld [vmem:[%s3249 + $0xb0] sm:$0xff]
      %v3555 = vld [vmem:[%s3249 + $0xc0] sm:$0xff]
      %v3556 = vld [vmem:[%s3249 + $0xc8] sm:$0xff]
      %v3557 = vld [vmem:[%s3249 + $0xd8] sm:$0xff]
      %v3558 = vld [vmem:[%s3249 + $0xe0] sm:$0xff]
      %v3559 = vld [vmem:[%s3249 + $0xf0] sm:$0xff]
      %v3560 = vld [vmem:[%s3249 + $0xf8] sm:$0xff]
      %v3561 = vld [vmem:[%s3249 + $0x108] sm:$0xff]
      %v3562 = vld [vmem:[%s3249 + $0x110] sm:$0xff]
      %v3563 = vld [vmem:[%s3249 + $0x120] sm:$0xff]
      %v3564 = vld [vmem:[%s3249 + $0x128] sm:$0xff]
      %v3565 = vld [vmem:[%s3249 + $0x138] sm:$0xff]
      %v3566 = vld [vmem:[%s3249 + $0x140] sm:$0xff]
      %v3567 = vld [vmem:[%s3249 + $0x150] sm:$0xff]
      %v3568 = vld [vmem:[%s3249 + $0x158] sm:$0xff]
      %v3569 = vld [vmem:[%s3249 + $0x168] sm:$0xff]
      %v3570 = vld [vmem:[%s3249 + $0x170] sm:$0xff]
      %v3571 = vld [vmem:[%s3249 + $0x1] sm:$0xff]
      %v3572 = vld [vmem:[%s3249 + $0x9] sm:$0xff]
      %v3573 = vld [vmem:[%s3249 + $0x19] sm:$0xff]
      %v3574 = vld [vmem:[%s3249 + $0x21] sm:$0xff]
      %v3575 = vld [vmem:[%s3249 + $0x31] sm:$0xff]
      %v3576 = vld [vmem:[%s3249 + $0x39] sm:$0xff]
      %v3577 = vld [vmem:[%s3249 + $0x49] sm:$0xff]
      %v3578 = vld [vmem:[%s3249 + $0x51] sm:$0xff]
      %v3579 = vld [vmem:[%s3249 + $0x61] sm:$0xff]
      %v3580 = vld [vmem:[%s3249 + $0x69] sm:$0xff]
      %v3581 = vld [vmem:[%s3249 + $0x79] sm:$0xff]
      %v3582 = vld [vmem:[%s3249 + $0x81] sm:$0xff]
      %v3583 = vld [vmem:[%s3249 + $0x91] sm:$0xff]
      %v3584 = vld [vmem:[%s3249 + $0x99] sm:$0xff]
      %v3585 = vld [vmem:[%s3249 + $0xa9] sm:$0xff]
      %v3586 = vld [vmem:[%s3249 + $0xb1] sm:$0xff]
      %v3587 = vld [vmem:[%s3249 + $0xc1] sm:$0xff]
      %v3588 = vld [vmem:[%s3249 + $0xc9] sm:$0xff]
      %v3589 = vld [vmem:[%s3249 + $0xd9] sm:$0xff]
      %v3590 = vld [vmem:[%s3249 + $0xe1] sm:$0xff]
      %v3591 = vld [vmem:[%s3249 + $0xf1] sm:$0xff]
      %v3592 = vld [vmem:[%s3249 + $0xf9] sm:$0xff]
      %v3593 = vld [vmem:[%s3249 + $0x109] sm:$0xff]
      %v3594 = vld [vmem:[%s3249 + $0x111] sm:$0xff]
      %v3595 = vld [vmem:[%s3249 + $0x121] sm:$0xff]
      %v3596 = vld [vmem:[%s3249 + $0x129] sm:$0xff]
      %v3597 = vld [vmem:[%s3249 + $0x139] sm:$0xff]
      %v3598 = vld [vmem:[%s3249 + $0x141] sm:$0xff]
      %v3599 = vld [vmem:[%s3249 + $0x151] sm:$0xff]
      %v3600 = vld [vmem:[%s3249 + $0x159] sm:$0xff]
      %v3601 = vld [vmem:[%s3249 + $0x169] sm:$0xff]
      %v3602 = vld [vmem:[%s3249 + $0x171] sm:$0xff]
      %v3603 = vld [vmem:[%s3249 + $0x2] sm:$0xff]
      %v3604 = vld [vmem:[%s3249 + $0xa] sm:$0xff]
      %v3605 = vld [vmem:[%s3249 + $0x1a] sm:$0xff]
      %v3606 = vld [vmem:[%s3249 + $0x22] sm:$0xff]
      %v3607 = vld [vmem:[%s3249 + $0x32] sm:$0xff]
      %v3608 = vld [vmem:[%s3249 + $0x3a] sm:$0xff]
      %v3609 = vld [vmem:[%s3249 + $0x4a] sm:$0xff]
      %v3610 = vld [vmem:[%s3249 + $0x52] sm:$0xff]
      %v3611 = vld [vmem:[%s3249 + $0x62] sm:$0xff]
      %v3612 = vld [vmem:[%s3249 + $0x6a] sm:$0xff]
      %v3613 = vld [vmem:[%s3249 + $0x7a] sm:$0xff]
      %v3614 = vld [vmem:[%s3249 + $0x82] sm:$0xff]
      %v3615 = vld [vmem:[%s3249 + $0x92] sm:$0xff]
      %v3616 = vld [vmem:[%s3249 + $0x9a] sm:$0xff]
      %v3617 = vld [vmem:[%s3249 + $0xaa] sm:$0xff]
      %v3618 = vld [vmem:[%s3249 + $0xb2] sm:$0xff]
      %v3619 = vld [vmem:[%s3249 + $0xc2] sm:$0xff]
      %v3620 = vld [vmem:[%s3249 + $0xca] sm:$0xff]
      %v3621 = vld [vmem:[%s3249 + $0xda] sm:$0xff]
      %v3622 = vld [vmem:[%s3249 + $0xe2] sm:$0xff]
      %v3623 = vld [vmem:[%s3249 + $0xf2] sm:$0xff]
      %v3624 = vld [vmem:[%s3249 + $0xfa] sm:$0xff]
      %v3625 = vld [vmem:[%s3249 + $0x10a] sm:$0xff]
      %v3626 = vld [vmem:[%s3249 + $0x112] sm:$0xff]
      %v3627 = vld [vmem:[%s3249 + $0x122] sm:$0xff]
      %v3628 = vld [vmem:[%s3249 + $0x12a] sm:$0xff]
      %v3629 = vld [vmem:[%s3249 + $0x13a] sm:$0xff]
      %v3630 = vld [vmem:[%s3249 + $0x142] sm:$0xff]
      %v3631 = vld [vmem:[%s3249 + $0x152] sm:$0xff]
      %v3632 = vld [vmem:[%s3249 + $0x15a] sm:$0xff]
      %v3633 = vld [vmem:[%s3249 + $0x16a] sm:$0xff]
      %v3634 = vld [vmem:[%s3249 + $0x172] sm:$0xff]
      %s3635 = scalar_lea.vmem [#allocation4], 48
      %v3636 = vld [vmem:[%s3635] sm:$0xff]
      %v3637 = vld [vmem:[%s3635 + $0x8] sm:$0xff]
      %v3638 = vld [vmem:[%s3635 + $0x18] sm:$0xff]
      %v3639 = vld [vmem:[%s3635 + $0x20] sm:$0xff]
      %v3640 = vld [vmem:[%s3635 + $0x30] sm:$0xff]
      %v3641 = vld [vmem:[%s3635 + $0x38] sm:$0xff]
      %v3642 = vld [vmem:[%s3635 + $0x48] sm:$0xff]
      %v3643 = vld [vmem:[%s3635 + $0x50] sm:$0xff]
      %v3644 = vld [vmem:[%s3635 + $0x60] sm:$0xff]
      %v3645 = vld [vmem:[%s3635 + $0x68] sm:$0xff]
      %v3646 = vld [vmem:[%s3635 + $0x78] sm:$0xff]
      %v3647 = vld [vmem:[%s3635 + $0x80] sm:$0xff]
      %v3648 = vld [vmem:[%s3635 + $0x90] sm:$0xff]
      %v3649 = vld [vmem:[%s3635 + $0x98] sm:$0xff]
      %v3650 = vld [vmem:[%s3635 + $0xa8] sm:$0xff]
      %v3651 = vld [vmem:[%s3635 + $0xb0] sm:$0xff]
      %v3652 = vld [vmem:[%s3635 + $0xc0] sm:$0xff]
      %v3653 = vld [vmem:[%s3635 + $0xc8] sm:$0xff]
      %v3654 = vld [vmem:[%s3635 + $0xd8] sm:$0xff]
      %v3655 = vld [vmem:[%s3635 + $0xe0] sm:$0xff]
      %v3656 = vld [vmem:[%s3635 + $0xf0] sm:$0xff]
      %v3657 = vld [vmem:[%s3635 + $0xf8] sm:$0xff]
      %v3658 = vld [vmem:[%s3635 + $0x108] sm:$0xff]
      %v3659 = vld [vmem:[%s3635 + $0x110] sm:$0xff]
      %v3660 = vld [vmem:[%s3635 + $0x120] sm:$0xff]
      %v3661 = vld [vmem:[%s3635 + $0x128] sm:$0xff]
      %v3662 = vld [vmem:[%s3635 + $0x138] sm:$0xff]
      %v3663 = vld [vmem:[%s3635 + $0x140] sm:$0xff]
      %v3664 = vld [vmem:[%s3635 + $0x150] sm:$0xff]
      %v3665 = vld [vmem:[%s3635 + $0x158] sm:$0xff]
      %v3666 = vld [vmem:[%s3635 + $0x168] sm:$0xff]
      %v3667 = vld [vmem:[%s3635 + $0x170] sm:$0xff]
      %v3668 = vld [vmem:[%s3635 + $0x1] sm:$0xff]
      %v3669 = vld [vmem:[%s3635 + $0x9] sm:$0xff]
      %v3670 = vld [vmem:[%s3635 + $0x19] sm:$0xff]
      %v3671 = vld [vmem:[%s3635 + $0x21] sm:$0xff]
      %v3672 = vld [vmem:[%s3635 + $0x31] sm:$0xff]
      %v3673 = vld [vmem:[%s3635 + $0x39] sm:$0xff]
      %v3674 = vld [vmem:[%s3635 + $0x49] sm:$0xff]
      %v3675 = vld [vmem:[%s3635 + $0x51] sm:$0xff]
      %v3676 = vld [vmem:[%s3635 + $0x61] sm:$0xff]
      %v3677 = vld [vmem:[%s3635 + $0x69] sm:$0xff]
      %v3678 = vld [vmem:[%s3635 + $0x79] sm:$0xff]
      %v3679 = vld [vmem:[%s3635 + $0x81] sm:$0xff]
      %v3680 = vld [vmem:[%s3635 + $0x91] sm:$0xff]
      %v3681 = vld [vmem:[%s3635 + $0x99] sm:$0xff]
      %v3682 = vld [vmem:[%s3635 + $0xa9] sm:$0xff]
      %v3683 = vld [vmem:[%s3635 + $0xb1] sm:$0xff]
      %v3684 = vld [vmem:[%s3635 + $0xc1] sm:$0xff]
      %v3685 = vld [vmem:[%s3635 + $0xc9] sm:$0xff]
      %v3686 = vld [vmem:[%s3635 + $0xd9] sm:$0xff]
      %v3687 = vld [vmem:[%s3635 + $0xe1] sm:$0xff]
      %v3688 = vld [vmem:[%s3635 + $0xf1] sm:$0xff]
      %v3689 = vld [vmem:[%s3635 + $0xf9] sm:$0xff]
      %v3690 = vld [vmem:[%s3635 + $0x109] sm:$0xff]
      %v3691 = vld [vmem:[%s3635 + $0x111] sm:$0xff]
      %v3692 = vld [vmem:[%s3635 + $0x121] sm:$0xff]
      %v3693 = vld [vmem:[%s3635 + $0x129] sm:$0xff]
      %v3694 = vld [vmem:[%s3635 + $0x139] sm:$0xff]
      %v3695 = vld [vmem:[%s3635 + $0x141] sm:$0xff]
      %v3696 = vld [vmem:[%s3635 + $0x151] sm:$0xff]
      %v3697 = vld [vmem:[%s3635 + $0x159] sm:$0xff]
      %v3698 = vld [vmem:[%s3635 + $0x169] sm:$0xff]
      %v3699 = vld [vmem:[%s3635 + $0x171] sm:$0xff]
      %v3700 = vld [vmem:[%s3635 + $0x2] sm:$0xff]
      %v3701 = vld [vmem:[%s3635 + $0xa] sm:$0xff]
      %v3702 = vld [vmem:[%s3635 + $0x1a] sm:$0xff]
      %v3703 = vld [vmem:[%s3635 + $0x22] sm:$0xff]
      %v3704 = vld [vmem:[%s3635 + $0x32] sm:$0xff]
      %v3705 = vld [vmem:[%s3635 + $0x3a] sm:$0xff]
      %v3706 = vld [vmem:[%s3635 + $0x4a] sm:$0xff]
      %v3707 = vld [vmem:[%s3635 + $0x52] sm:$0xff]
      %v3708 = vld [vmem:[%s3635 + $0x62] sm:$0xff]
      %v3709 = vld [vmem:[%s3635 + $0x6a] sm:$0xff]
      %v3710 = vld [vmem:[%s3635 + $0x7a] sm:$0xff]
      %v3711 = vld [vmem:[%s3635 + $0x82] sm:$0xff]
      %v3712 = vld [vmem:[%s3635 + $0x92] sm:$0xff]
      %v3713 = vld [vmem:[%s3635 + $0x9a] sm:$0xff]
      %v3714 = vld [vmem:[%s3635 + $0xaa] sm:$0xff]
      %v3715 = vld [vmem:[%s3635 + $0xb2] sm:$0xff]
      %v3716 = vld [vmem:[%s3635 + $0xc2] sm:$0xff]
      %v3717 = vld [vmem:[%s3635 + $0xca] sm:$0xff]
      %v3718 = vld [vmem:[%s3635 + $0xda] sm:$0xff]
      %v3719 = vld [vmem:[%s3635 + $0xe2] sm:$0xff]
      %v3720 = vld [vmem:[%s3635 + $0xf2] sm:$0xff]
      %v3721 = vld [vmem:[%s3635 + $0xfa] sm:$0xff]
      %v3722 = vld [vmem:[%s3635 + $0x10a] sm:$0xff]
      %v3723 = vld [vmem:[%s3635 + $0x112] sm:$0xff]
      %v3724 = vld [vmem:[%s3635 + $0x122] sm:$0xff]
      %v3725 = vld [vmem:[%s3635 + $0x12a] sm:$0xff]
      %v3726 = vld [vmem:[%s3635 + $0x13a] sm:$0xff]
      %v3727 = vld [vmem:[%s3635 + $0x142] sm:$0xff]
      %v3728 = vld [vmem:[%s3635 + $0x152] sm:$0xff]
      %v3729 = vld [vmem:[%s3635 + $0x15a] sm:$0xff]
      %v3730 = vld [vmem:[%s3635 + $0x16a] sm:$0xff]
      %v3731 = vld [vmem:[%s3635 + $0x172] sm:$0xff]
      %3764 = vrot.lane.b32.xlu0 %v3475, 24
      %v3765 = vpop.permute.xlu0 %3764
      %3766 = vrot.lane.b32.xlu0 %v3476, 24
      %v3767 = vpop.permute.xlu0 %3766
      %3768 = vrot.lane.b32.xlu0 %v3477, 24
      %v3769 = vpop.permute.xlu0 %3768
      %3770 = vrot.lane.b32.xlu0 %v3478, 24
      %v3771 = vpop.permute.xlu0 %3770
      %3772 = vrot.lane.b32.xlu0 %v3479, 24
      %v3773 = vpop.permute.xlu0 %3772
      %3774 = vrot.lane.b32.xlu0 %v3480, 24
      %v3775 = vpop.permute.xlu0 %3774
      %3776 = vrot.lane.b32.xlu0 %v3481, 24
      %v3777 = vpop.permute.xlu0 %3776
      %3778 = vrot.lane.b32.xlu0 %v3482, 24
      %v3779 = vpop.permute.xlu0 %3778
      %3780 = vrot.lane.b32.xlu0 %v3483, 24
      %v3781 = vpop.permute.xlu0 %3780
      %3782 = vrot.lane.b32.xlu0 %v3484, 24
      %v3783 = vpop.permute.xlu0 %3782
      %3784 = vrot.lane.b32.xlu0 %v3485, 24
      %v3785 = vpop.permute.xlu0 %3784
      %3786 = vrot.lane.b32.xlu0 %v3486, 24
      %v3787 = vpop.permute.xlu0 %3786
      %3788 = vrot.lane.b32.xlu0 %v3487, 24
      %v3789 = vpop.permute.xlu0 %3788
      %3790 = vrot.lane.b32.xlu0 %v3488, 24
      %v3791 = vpop.permute.xlu0 %3790
      %3792 = vrot.lane.b32.xlu0 %v3489, 24
      %v3793 = vpop.permute.xlu0 %3792
      %3794 = vrot.lane.b32.xlu0 %v3490, 24
      %v3795 = vpop.permute.xlu0 %3794
      %3796 = vrot.lane.b32.xlu0 %v3491, 24
      %v3797 = vpop.permute.xlu0 %3796
      %3798 = vrot.lane.b32.xlu0 %v3492, 24
      %v3799 = vpop.permute.xlu0 %3798
      %3800 = vrot.lane.b32.xlu0 %v3493, 24
      %v3801 = vpop.permute.xlu0 %3800
      %3802 = vrot.lane.b32.xlu0 %v3494, 24
      %v3803 = vpop.permute.xlu0 %3802
      %3804 = vrot.lane.b32.xlu0 %v3495, 24
      %v3805 = vpop.permute.xlu0 %3804
      %3806 = vrot.lane.b32.xlu0 %v3496, 24
      %v3807 = vpop.permute.xlu0 %3806
      %3808 = vrot.lane.b32.xlu0 %v3497, 24
      %v3809 = vpop.permute.xlu0 %3808
      %3810 = vrot.lane.b32.xlu0 %v3498, 24
      %v3811 = vpop.permute.xlu0 %3810
      %3812 = vrot.lane.b32.xlu0 %v3499, 24
      %v3813 = vpop.permute.xlu0 %3812
      %3814 = vrot.lane.b32.xlu0 %v3500, 24
      %v3815 = vpop.permute.xlu0 %3814
      %3816 = vrot.lane.b32.xlu0 %v3501, 24
      %v3817 = vpop.permute.xlu0 %3816
      %3818 = vrot.lane.b32.xlu0 %v3502, 24
      %v3819 = vpop.permute.xlu0 %3818
      %3820 = vrot.lane.b32.xlu0 %v3503, 24
      %v3821 = vpop.permute.xlu0 %3820
      %3822 = vrot.lane.b32.xlu0 %v3504, 24
      %v3823 = vpop.permute.xlu0 %3822
      %3824 = vrot.lane.b32.xlu0 %v3505, 24
      %v3825 = vpop.permute.xlu0 %3824
      %3826 = vrot.lane.b32.xlu0 %v3506, 24
      %v3827 = vpop.permute.xlu0 %3826
      %3892 = vrot.lane.b32.xlu0 %v3507, 48
      %v3893 = vpop.permute.xlu0 %3892
      %3894 = vrot.lane.b32.xlu0 %v3508, 48
      %v3895 = vpop.permute.xlu0 %3894
      %3896 = vrot.lane.b32.xlu0 %v3509, 48
      %v3897 = vpop.permute.xlu0 %3896
      %3898 = vrot.lane.b32.xlu0 %v3510, 48
      %v3899 = vpop.permute.xlu0 %3898
      %3900 = vrot.lane.b32.xlu0 %v3511, 48
      %v3901 = vpop.permute.xlu0 %3900
      %3902 = vrot.lane.b32.xlu0 %v3512, 48
      %v3903 = vpop.permute.xlu0 %3902
      %3904 = vrot.lane.b32.xlu0 %v3513, 48
      %v3905 = vpop.permute.xlu0 %3904
      %3906 = vrot.lane.b32.xlu0 %v3514, 48
      %v3907 = vpop.permute.xlu0 %3906
      %3908 = vrot.lane.b32.xlu0 %v3515, 48
      %v3909 = vpop.permute.xlu0 %3908
      %3910 = vrot.lane.b32.xlu0 %v3516, 48
      %v3911 = vpop.permute.xlu0 %3910
      %3912 = vrot.lane.b32.xlu0 %v3517, 48
      %v3913 = vpop.permute.xlu0 %3912
      %3914 = vrot.lane.b32.xlu0 %v3518, 48
      %v3915 = vpop.permute.xlu0 %3914
      %3916 = vrot.lane.b32.xlu0 %v3519, 48
      %v3917 = vpop.permute.xlu0 %3916
      %3918 = vrot.lane.b32.xlu0 %v3520, 48
      %v3919 = vpop.permute.xlu0 %3918
      %3920 = vrot.lane.b32.xlu0 %v3521, 48
      %v3921 = vpop.permute.xlu0 %3920
      %3922 = vrot.lane.b32.xlu0 %v3522, 48
      %v3923 = vpop.permute.xlu0 %3922
      %3924 = vrot.lane.b32.xlu0 %v3523, 48
      %v3925 = vpop.permute.xlu0 %3924
      %3926 = vrot.lane.b32.xlu0 %v3524, 48
      %v3927 = vpop.permute.xlu0 %3926
      %3928 = vrot.lane.b32.xlu0 %v3525, 48
      %v3929 = vpop.permute.xlu0 %3928
      %3930 = vrot.lane.b32.xlu0 %v3526, 48
      %v3931 = vpop.permute.xlu0 %3930
      %3932 = vrot.lane.b32.xlu0 %v3527, 48
      %v3933 = vpop.permute.xlu0 %3932
      %3934 = vrot.lane.b32.xlu0 %v3528, 48
      %v3935 = vpop.permute.xlu0 %3934
      %3936 = vrot.lane.b32.xlu0 %v3529, 48
      %v3937 = vpop.permute.xlu0 %3936
      %3938 = vrot.lane.b32.xlu0 %v3530, 48
      %v3939 = vpop.permute.xlu0 %3938
      %3940 = vrot.lane.b32.xlu0 %v3531, 48
      %v3941 = vpop.permute.xlu0 %3940
      %3942 = vrot.lane.b32.xlu0 %v3532, 48
      %v3943 = vpop.permute.xlu0 %3942
      %3944 = vrot.lane.b32.xlu0 %v3533, 48
      %v3945 = vpop.permute.xlu0 %3944
      %3946 = vrot.lane.b32.xlu0 %v3534, 48
      %v3947 = vpop.permute.xlu0 %3946
      %3948 = vrot.lane.b32.xlu0 %v3535, 48
      %v3949 = vpop.permute.xlu0 %3948
      %3950 = vrot.lane.b32.xlu0 %v3536, 48
      %v3951 = vpop.permute.xlu0 %3950
      %3952 = vrot.lane.b32.xlu0 %v3537, 48
      %v3953 = vpop.permute.xlu0 %3952
      %3954 = vrot.lane.b32.xlu0 %v3538, 48
      %v3955 = vpop.permute.xlu0 %3954
      %4020 = vrot.lane.b32.xlu0 %v3539, 72
      %v4021 = vpop.permute.xlu0 %4020
      %4022 = vrot.lane.b32.xlu0 %v3540, 72
      %v4023 = vpop.permute.xlu0 %4022
      %4024 = vrot.lane.b32.xlu0 %v3541, 72
      %v4025 = vpop.permute.xlu0 %4024
      %4026 = vrot.lane.b32.xlu0 %v3542, 72
      %v4027 = vpop.permute.xlu0 %4026
      %4028 = vrot.lane.b32.xlu0 %v3543, 72
      %v4029 = vpop.permute.xlu0 %4028
      %4030 = vrot.lane.b32.xlu0 %v3544, 72
      %v4031 = vpop.permute.xlu0 %4030
      %4032 = vrot.lane.b32.xlu0 %v3545, 72
      %v4033 = vpop.permute.xlu0 %4032
      %4034 = vrot.lane.b32.xlu0 %v3546, 72
      %v4035 = vpop.permute.xlu0 %4034
      %4036 = vrot.lane.b32.xlu0 %v3547, 72
      %v4037 = vpop.permute.xlu0 %4036
      %4038 = vrot.lane.b32.xlu0 %v3548, 72
      %v4039 = vpop.permute.xlu0 %4038
      %4040 = vrot.lane.b32.xlu0 %v3549, 72
      %v4041 = vpop.permute.xlu0 %4040
      %4042 = vrot.lane.b32.xlu0 %v3550, 72
      %v4043 = vpop.permute.xlu0 %4042
      %4044 = vrot.lane.b32.xlu0 %v3551, 72
      %v4045 = vpop.permute.xlu0 %4044
      %4046 = vrot.lane.b32.xlu0 %v3552, 72
      %v4047 = vpop.permute.xlu0 %4046
      %4048 = vrot.lane.b32.xlu0 %v3553, 72
      %v4049 = vpop.permute.xlu0 %4048
      %4050 = vrot.lane.b32.xlu0 %v3554, 72
      %v4051 = vpop.permute.xlu0 %4050
      %4052 = vrot.lane.b32.xlu0 %v3555, 72
      %v4053 = vpop.permute.xlu0 %4052
      %4054 = vrot.lane.b32.xlu0 %v3556, 72
      %v4055 = vpop.permute.xlu0 %4054
      %4056 = vrot.lane.b32.xlu0 %v3557, 72
      %v4057 = vpop.permute.xlu0 %4056
      %4058 = vrot.lane.b32.xlu0 %v3558, 72
      %v4059 = vpop.permute.xlu0 %4058
      %4060 = vrot.lane.b32.xlu0 %v3559, 72
      %v4061 = vpop.permute.xlu0 %4060
      %4062 = vrot.lane.b32.xlu0 %v3560, 72
      %v4063 = vpop.permute.xlu0 %4062
      %4064 = vrot.lane.b32.xlu0 %v3561, 72
      %v4065 = vpop.permute.xlu0 %4064
      %4066 = vrot.lane.b32.xlu0 %v3562, 72
      %v4067 = vpop.permute.xlu0 %4066
      %4068 = vrot.lane.b32.xlu0 %v3563, 72
      %v4069 = vpop.permute.xlu0 %4068
      %4070 = vrot.lane.b32.xlu0 %v3564, 72
      %v4071 = vpop.permute.xlu0 %4070
      %4072 = vrot.lane.b32.xlu0 %v3565, 72
      %v4073 = vpop.permute.xlu0 %4072
      %4074 = vrot.lane.b32.xlu0 %v3566, 72
      %v4075 = vpop.permute.xlu0 %4074
      %4076 = vrot.lane.b32.xlu0 %v3567, 72
      %v4077 = vpop.permute.xlu0 %4076
      %4078 = vrot.lane.b32.xlu0 %v3568, 72
      %v4079 = vpop.permute.xlu0 %4078
      %4080 = vrot.lane.b32.xlu0 %v3569, 72
      %v4081 = vpop.permute.xlu0 %4080
      %4082 = vrot.lane.b32.xlu0 %v3570, 72
      %v4083 = vpop.permute.xlu0 %4082
      %4148 = vrot.lane.b32.xlu0 %v3571, 96
      %v4149 = vpop.permute.xlu0 %4148
      %4150 = vrot.lane.b32.xlu0 %v3572, 96
      %v4151 = vpop.permute.xlu0 %4150
      %4152 = vrot.lane.b32.xlu0 %v3573, 96
      %v4153 = vpop.permute.xlu0 %4152
      %4154 = vrot.lane.b32.xlu0 %v3574, 96
      %v4155 = vpop.permute.xlu0 %4154
      %4156 = vrot.lane.b32.xlu0 %v3575, 96
      %v4157 = vpop.permute.xlu0 %4156
      %4158 = vrot.lane.b32.xlu0 %v3576, 96
      %v4159 = vpop.permute.xlu0 %4158
      %4160 = vrot.lane.b32.xlu0 %v3577, 96
      %v4161 = vpop.permute.xlu0 %4160
      %4162 = vrot.lane.b32.xlu0 %v3578, 96
      %v4163 = vpop.permute.xlu0 %4162
      %4164 = vrot.lane.b32.xlu0 %v3579, 96
      %v4165 = vpop.permute.xlu0 %4164
      %4166 = vrot.lane.b32.xlu0 %v3580, 96
      %v4167 = vpop.permute.xlu0 %4166
      %4168 = vrot.lane.b32.xlu0 %v3581, 96
      %v4169 = vpop.permute.xlu0 %4168
      %4170 = vrot.lane.b32.xlu0 %v3582, 96
      %v4171 = vpop.permute.xlu0 %4170
      %4172 = vrot.lane.b32.xlu0 %v3583, 96
      %v4173 = vpop.permute.xlu0 %4172
      %4174 = vrot.lane.b32.xlu0 %v3584, 96
      %v4175 = vpop.permute.xlu0 %4174
      %4176 = vrot.lane.b32.xlu0 %v3585, 96
      %v4177 = vpop.permute.xlu0 %4176
      %4178 = vrot.lane.b32.xlu0 %v3586, 96
      %v4179 = vpop.permute.xlu0 %4178
      %4180 = vrot.lane.b32.xlu0 %v3587, 96
      %v4181 = vpop.permute.xlu0 %4180
      %4182 = vrot.lane.b32.xlu0 %v3588, 96
      %v4183 = vpop.permute.xlu0 %4182
      %4184 = vrot.lane.b32.xlu0 %v3589, 96
      %v4185 = vpop.permute.xlu0 %4184
      %4186 = vrot.lane.b32.xlu0 %v3590, 96
      %v4187 = vpop.permute.xlu0 %4186
      %4188 = vrot.lane.b32.xlu0 %v3591, 96
      %v4189 = vpop.permute.xlu0 %4188
      %4190 = vrot.lane.b32.xlu0 %v3592, 96
      %v4191 = vpop.permute.xlu0 %4190
      %4192 = vrot.lane.b32.xlu0 %v3593, 96
      %v4193 = vpop.permute.xlu0 %4192
      %4194 = vrot.lane.b32.xlu0 %v3594, 96
      %v4195 = vpop.permute.xlu0 %4194
      %4196 = vrot.lane.b32.xlu0 %v3595, 96
      %v4197 = vpop.permute.xlu0 %4196
      %4198 = vrot.lane.b32.xlu0 %v3596, 96
      %v4199 = vpop.permute.xlu0 %4198
      %4200 = vrot.lane.b32.xlu0 %v3597, 96
      %v4201 = vpop.permute.xlu0 %4200
      %4202 = vrot.lane.b32.xlu0 %v3598, 96
      %v4203 = vpop.permute.xlu0 %4202
      %4204 = vrot.lane.b32.xlu0 %v3599, 96
      %v4205 = vpop.permute.xlu0 %4204
      %4206 = vrot.lane.b32.xlu0 %v3600, 96
      %v4207 = vpop.permute.xlu0 %4206
      %4208 = vrot.lane.b32.xlu0 %v3601, 96
      %v4209 = vpop.permute.xlu0 %4208
      %4210 = vrot.lane.b32.xlu0 %v3602, 96
      %v4211 = vpop.permute.xlu0 %4210
      %4276 = vrot.lane.b32.xlu0 %v3603, 120
      %v4277 = vpop.permute.xlu0 %4276
      %4278 = vrot.lane.b32.xlu0 %v3604, 120
      %v4279 = vpop.permute.xlu0 %4278
      %4280 = vrot.lane.b32.xlu0 %v3605, 120
      %v4281 = vpop.permute.xlu0 %4280
      %4282 = vrot.lane.b32.xlu0 %v3606, 120
      %v4283 = vpop.permute.xlu0 %4282
      %4284 = vrot.lane.b32.xlu0 %v3607, 120
      %v4285 = vpop.permute.xlu0 %4284
      %4286 = vrot.lane.b32.xlu0 %v3608, 120
      %v4287 = vpop.permute.xlu0 %4286
      %4288 = vrot.lane.b32.xlu0 %v3609, 120
      %v4289 = vpop.permute.xlu0 %4288
      %4290 = vrot.lane.b32.xlu0 %v3610, 120
      %v4291 = vpop.permute.xlu0 %4290
      %4292 = vrot.lane.b32.xlu0 %v3611, 120
      %v4293 = vpop.permute.xlu0 %4292
      %4294 = vrot.lane.b32.xlu0 %v3612, 120
      %v4295 = vpop.permute.xlu0 %4294
      %4296 = vrot.lane.b32.xlu0 %v3613, 120
      %v4297 = vpop.permute.xlu0 %4296
      %4298 = vrot.lane.b32.xlu0 %v3614, 120
      %v4299 = vpop.permute.xlu0 %4298
      %4300 = vrot.lane.b32.xlu0 %v3615, 120
      %v4301 = vpop.permute.xlu0 %4300
      %4302 = vrot.lane.b32.xlu0 %v3616, 120
      %v4303 = vpop.permute.xlu0 %4302
      %4304 = vrot.lane.b32.xlu0 %v3617, 120
      %v4305 = vpop.permute.xlu0 %4304
      %4306 = vrot.lane.b32.xlu0 %v3618, 120
      %v4307 = vpop.permute.xlu0 %4306
      %4308 = vrot.lane.b32.xlu0 %v3619, 120
      %v4309 = vpop.permute.xlu0 %4308
      %4310 = vrot.lane.b32.xlu0 %v3620, 120
      %v4311 = vpop.permute.xlu0 %4310
      %4312 = vrot.lane.b32.xlu0 %v3621, 120
      %v4313 = vpop.permute.xlu0 %4312
      %4314 = vrot.lane.b32.xlu0 %v3622, 120
      %v4315 = vpop.permute.xlu0 %4314
      %4316 = vrot.lane.b32.xlu0 %v3623, 120
      %v4317 = vpop.permute.xlu0 %4316
      %4318 = vrot.lane.b32.xlu0 %v3624, 120
      %v4319 = vpop.permute.xlu0 %4318
      %4320 = vrot.lane.b32.xlu0 %v3625, 120
      %v4321 = vpop.permute.xlu0 %4320
      %4322 = vrot.lane.b32.xlu0 %v3626, 120
      %v4323 = vpop.permute.xlu0 %4322
      %4324 = vrot.lane.b32.xlu0 %v3627, 120
      %v4325 = vpop.permute.xlu0 %4324
      %4326 = vrot.lane.b32.xlu0 %v3628, 120
      %v4327 = vpop.permute.xlu0 %4326
      %4328 = vrot.lane.b32.xlu0 %v3629, 120
      %v4329 = vpop.permute.xlu0 %4328
      %4330 = vrot.lane.b32.xlu0 %v3630, 120
      %v4331 = vpop.permute.xlu0 %4330
      %4332 = vrot.lane.b32.xlu0 %v3631, 120
      %v4333 = vpop.permute.xlu0 %4332
      %4334 = vrot.lane.b32.xlu0 %v3632, 120
      %v4335 = vpop.permute.xlu0 %4334
      %4336 = vrot.lane.b32.xlu0 %v3633, 120
      %v4337 = vpop.permute.xlu0 %4336
      %4338 = vrot.lane.b32.xlu0 %v3634, 120
      %v4339 = vpop.permute.xlu0 %4338
      %4404 = vrot.lane.b32.xlu0 %v3636, 16
      %v4405 = vpop.permute.xlu0 %4404
      %4406 = vrot.lane.b32.xlu0 %v3637, 16
      %v4407 = vpop.permute.xlu0 %4406
      %4408 = vrot.lane.b32.xlu0 %v3638, 16
      %v4409 = vpop.permute.xlu0 %4408
      %4410 = vrot.lane.b32.xlu0 %v3639, 16
      %v4411 = vpop.permute.xlu0 %4410
      %4412 = vrot.lane.b32.xlu0 %v3640, 16
      %v4413 = vpop.permute.xlu0 %4412
      %4414 = vrot.lane.b32.xlu0 %v3641, 16
      %v4415 = vpop.permute.xlu0 %4414
      %4416 = vrot.lane.b32.xlu0 %v3642, 16
      %v4417 = vpop.permute.xlu0 %4416
      %4418 = vrot.lane.b32.xlu0 %v3643, 16
      %v4419 = vpop.permute.xlu0 %4418
      %4420 = vrot.lane.b32.xlu0 %v3644, 16
      %v4421 = vpop.permute.xlu0 %4420
      %4422 = vrot.lane.b32.xlu0 %v3645, 16
      %v4423 = vpop.permute.xlu0 %4422
      %4424 = vrot.lane.b32.xlu0 %v3646, 16
      %v4425 = vpop.permute.xlu0 %4424
      %4426 = vrot.lane.b32.xlu0 %v3647, 16
      %v4427 = vpop.permute.xlu0 %4426
      %4428 = vrot.lane.b32.xlu0 %v3648, 16
      %v4429 = vpop.permute.xlu0 %4428
      %4430 = vrot.lane.b32.xlu0 %v3649, 16
      %v4431 = vpop.permute.xlu0 %4430
      %4432 = vrot.lane.b32.xlu0 %v3650, 16
      %v4433 = vpop.permute.xlu0 %4432
      %4434 = vrot.lane.b32.xlu0 %v3651, 16
      %v4435 = vpop.permute.xlu0 %4434
      %4436 = vrot.lane.b32.xlu0 %v3652, 16
      %v4437 = vpop.permute.xlu0 %4436
      %4438 = vrot.lane.b32.xlu0 %v3653, 16
      %v4439 = vpop.permute.xlu0 %4438
      %4440 = vrot.lane.b32.xlu0 %v3654, 16
      %v4441 = vpop.permute.xlu0 %4440
      %4442 = vrot.lane.b32.xlu0 %v3655, 16
      %v4443 = vpop.permute.xlu0 %4442
      %4444 = vrot.lane.b32.xlu0 %v3656, 16
      %v4445 = vpop.permute.xlu0 %4444
      %4446 = vrot.lane.b32.xlu0 %v3657, 16
      %v4447 = vpop.permute.xlu0 %4446
      %4448 = vrot.lane.b32.xlu0 %v3658, 16
      %v4449 = vpop.permute.xlu0 %4448
      %4450 = vrot.lane.b32.xlu0 %v3659, 16
      %v4451 = vpop.permute.xlu0 %4450
      %4452 = vrot.lane.b32.xlu0 %v3660, 16
      %v4453 = vpop.permute.xlu0 %4452
      %4454 = vrot.lane.b32.xlu0 %v3661, 16
      %v4455 = vpop.permute.xlu0 %4454
      %4456 = vrot.lane.b32.xlu0 %v3662, 16
      %v4457 = vpop.permute.xlu0 %4456
      %4458 = vrot.lane.b32.xlu0 %v3663, 16
      %v4459 = vpop.permute.xlu0 %4458
      %4460 = vrot.lane.b32.xlu0 %v3664, 16
      %v4461 = vpop.permute.xlu0 %4460
      %4462 = vrot.lane.b32.xlu0 %v3665, 16
      %v4463 = vpop.permute.xlu0 %4462
      %4464 = vrot.lane.b32.xlu0 %v3666, 16
      %v4465 = vpop.permute.xlu0 %4464
      %4466 = vrot.lane.b32.xlu0 %v3667, 16
      %v4467 = vpop.permute.xlu0 %4466
      %4532 = vrot.lane.b32.xlu0 %v3668, 40
      %v4533 = vpop.permute.xlu0 %4532
      %4534 = vrot.lane.b32.xlu0 %v3669, 40
      %v4535 = vpop.permute.xlu0 %4534
      %4536 = vrot.lane.b32.xlu0 %v3670, 40
      %v4537 = vpop.permute.xlu0 %4536
      %4538 = vrot.lane.b32.xlu0 %v3671, 40
      %v4539 = vpop.permute.xlu0 %4538
      %4540 = vrot.lane.b32.xlu0 %v3672, 40
      %v4541 = vpop.permute.xlu0 %4540
      %4542 = vrot.lane.b32.xlu0 %v3673, 40
      %v4543 = vpop.permute.xlu0 %4542
      %4544 = vrot.lane.b32.xlu0 %v3674, 40
      %v4545 = vpop.permute.xlu0 %4544
      %4546 = vrot.lane.b32.xlu0 %v3675, 40
      %v4547 = vpop.permute.xlu0 %4546
      %4548 = vrot.lane.b32.xlu0 %v3676, 40
      %v4549 = vpop.permute.xlu0 %4548
      %4550 = vrot.lane.b32.xlu0 %v3677, 40
      %v4551 = vpop.permute.xlu0 %4550
      %4552 = vrot.lane.b32.xlu0 %v3678, 40
      %v4553 = vpop.permute.xlu0 %4552
      %4554 = vrot.lane.b32.xlu0 %v3679, 40
      %v4555 = vpop.permute.xlu0 %4554
      %4556 = vrot.lane.b32.xlu0 %v3680, 40
      %v4557 = vpop.permute.xlu0 %4556
      %4558 = vrot.lane.b32.xlu0 %v3681, 40
      %v4559 = vpop.permute.xlu0 %4558
      %4560 = vrot.lane.b32.xlu0 %v3682, 40
      %v4561 = vpop.permute.xlu0 %4560
      %4562 = vrot.lane.b32.xlu0 %v3683, 40
      %v4563 = vpop.permute.xlu0 %4562
      %4564 = vrot.lane.b32.xlu0 %v3684, 40
      %v4565 = vpop.permute.xlu0 %4564
      %4566 = vrot.lane.b32.xlu0 %v3685, 40
      %v4567 = vpop.permute.xlu0 %4566
      %4568 = vrot.lane.b32.xlu0 %v3686, 40
      %v4569 = vpop.permute.xlu0 %4568
      %4570 = vrot.lane.b32.xlu0 %v3687, 40
      %v4571 = vpop.permute.xlu0 %4570
      %4572 = vrot.lane.b32.xlu0 %v3688, 40
      %v4573 = vpop.permute.xlu0 %4572
      %4574 = vrot.lane.b32.xlu0 %v3689, 40
      %v4575 = vpop.permute.xlu0 %4574
      %4576 = vrot.lane.b32.xlu0 %v3690, 40
      %v4577 = vpop.permute.xlu0 %4576
      %4578 = vrot.lane.b32.xlu0 %v3691, 40
      %v4579 = vpop.permute.xlu0 %4578
      %4580 = vrot.lane.b32.xlu0 %v3692, 40
      %v4581 = vpop.permute.xlu0 %4580
      %4582 = vrot.lane.b32.xlu0 %v3693, 40
      %v4583 = vpop.permute.xlu0 %4582
      %4584 = vrot.lane.b32.xlu0 %v3694, 40
      %v4585 = vpop.permute.xlu0 %4584
      %4586 = vrot.lane.b32.xlu0 %v3695, 40
      %v4587 = vpop.permute.xlu0 %4586
      %4588 = vrot.lane.b32.xlu0 %v3696, 40
      %v4589 = vpop.permute.xlu0 %4588
      %4590 = vrot.lane.b32.xlu0 %v3697, 40
      %v4591 = vpop.permute.xlu0 %4590
      %4592 = vrot.lane.b32.xlu0 %v3698, 40
      %v4593 = vpop.permute.xlu0 %4592
      %4594 = vrot.lane.b32.xlu0 %v3699, 40
      %v4595 = vpop.permute.xlu0 %4594
      %4660 = vrot.lane.b32.xlu0 %v3700, 64
      %v4661 = vpop.permute.xlu0 %4660
      %4662 = vrot.lane.b32.xlu0 %v3701, 64
      %v4663 = vpop.permute.xlu0 %4662
      %4664 = vrot.lane.b32.xlu0 %v3702, 64
      %v4665 = vpop.permute.xlu0 %4664
      %4666 = vrot.lane.b32.xlu0 %v3703, 64
      %v4667 = vpop.permute.xlu0 %4666
      %4668 = vrot.lane.b32.xlu0 %v3704, 64
      %v4669 = vpop.permute.xlu0 %4668
      %4670 = vrot.lane.b32.xlu0 %v3705, 64
      %v4671 = vpop.permute.xlu0 %4670
      %4672 = vrot.lane.b32.xlu0 %v3706, 64
      %v4673 = vpop.permute.xlu0 %4672
      %4674 = vrot.lane.b32.xlu0 %v3707, 64
      %v4675 = vpop.permute.xlu0 %4674
      %4676 = vrot.lane.b32.xlu0 %v3708, 64
      %v4677 = vpop.permute.xlu0 %4676
      %4678 = vrot.lane.b32.xlu0 %v3709, 64
      %v4679 = vpop.permute.xlu0 %4678
      %4680 = vrot.lane.b32.xlu0 %v3710, 64
      %v4681 = vpop.permute.xlu0 %4680
      %4682 = vrot.lane.b32.xlu0 %v3711, 64
      %v4683 = vpop.permute.xlu0 %4682
      %4684 = vrot.lane.b32.xlu0 %v3712, 64
      %v4685 = vpop.permute.xlu0 %4684
      %4686 = vrot.lane.b32.xlu0 %v3713, 64
      %v4687 = vpop.permute.xlu0 %4686
      %4688 = vrot.lane.b32.xlu0 %v3714, 64
      %v4689 = vpop.permute.xlu0 %4688
      %4690 = vrot.lane.b32.xlu0 %v3715, 64
      %v4691 = vpop.permute.xlu0 %4690
      %4692 = vrot.lane.b32.xlu0 %v3716, 64
      %v4693 = vpop.permute.xlu0 %4692
      %4694 = vrot.lane.b32.xlu0 %v3717, 64
      %v4695 = vpop.permute.xlu0 %4694
      %4696 = vrot.lane.b32.xlu0 %v3718, 64
      %v4697 = vpop.permute.xlu0 %4696
      %4698 = vrot.lane.b32.xlu0 %v3719, 64
      %v4699 = vpop.permute.xlu0 %4698
      %4700 = vrot.lane.b32.xlu0 %v3720, 64
      %v4701 = vpop.permute.xlu0 %4700
      %4702 = vrot.lane.b32.xlu0 %v3721, 64
      %v4703 = vpop.permute.xlu0 %4702
      %4704 = vrot.lane.b32.xlu0 %v3722, 64
      %v4705 = vpop.permute.xlu0 %4704
      %4706 = vrot.lane.b32.xlu0 %v3723, 64
      %v4707 = vpop.permute.xlu0 %4706
      %4708 = vrot.lane.b32.xlu0 %v3724, 64
      %v4709 = vpop.permute.xlu0 %4708
      %4710 = vrot.lane.b32.xlu0 %v3725, 64
      %v4711 = vpop.permute.xlu0 %4710
      %4712 = vrot.lane.b32.xlu0 %v3726, 64
      %v4713 = vpop.permute.xlu0 %4712
      %4714 = vrot.lane.b32.xlu0 %v3727, 64
      %v4715 = vpop.permute.xlu0 %4714
      %4716 = vrot.lane.b32.xlu0 %v3728, 64
      %v4717 = vpop.permute.xlu0 %4716
      %4718 = vrot.lane.b32.xlu0 %v3729, 64
      %v4719 = vpop.permute.xlu0 %4718
      %4720 = vrot.lane.b32.xlu0 %v3730, 64
      %v4721 = vpop.permute.xlu0 %4720
      %4722 = vrot.lane.b32.xlu0 %v3731, 64
      %v4723 = vpop.permute.xlu0 %4722
      %v4756 = vsel %vm472, %v3443, %v3765
      %v4757 = vsel %vm472, %v3444, %v3767
      %v4758 = vsel %vm472, %v3445, %v3769
      %v4759 = vsel %vm472, %v3446, %v3771
      %v4760 = vsel %vm472, %v3447, %v3773
      %v4761 = vsel %vm472, %v3448, %v3775
      %v4762 = vsel %vm472, %v3449, %v3777
      %v4763 = vsel %vm472, %v3450, %v3779
      %v4764 = vsel %vm472, %v3451, %v3781
      %v4765 = vsel %vm472, %v3452, %v3783
      %v4766 = vsel %vm472, %v3453, %v3785
      %v4767 = vsel %vm472, %v3454, %v3787
      %v4768 = vsel %vm472, %v3455, %v3789
      %v4769 = vsel %vm472, %v3456, %v3791
      %v4770 = vsel %vm472, %v3457, %v3793
      %v4771 = vsel %vm472, %v3458, %v3795
      %v4772 = vsel %vm472, %v3459, %v3797
      %v4773 = vsel %vm472, %v3460, %v3799
      %v4774 = vsel %vm472, %v3461, %v3801
      %v4775 = vsel %vm472, %v3462, %v3803
      %v4776 = vsel %vm472, %v3463, %v3805
      %v4777 = vsel %vm472, %v3464, %v3807
      %v4778 = vsel %vm472, %v3465, %v3809
      %v4779 = vsel %vm472, %v3466, %v3811
      %v4780 = vsel %vm472, %v3467, %v3813
      %v4781 = vsel %vm472, %v3468, %v3815
      %v4782 = vsel %vm472, %v3469, %v3817
      %v4783 = vsel %vm472, %v3470, %v3819
      %v4784 = vsel %vm472, %v3471, %v3821
      %v4785 = vsel %vm472, %v3472, %v3823
      %v4786 = vsel %vm472, %v3473, %v3825
      %v4787 = vsel %vm472, %v3474, %v3827
      %v4788 = vsel %vm2894, %v4756, %v3893
      %v4789 = vsel %vm2894, %v4757, %v3895
      %v4790 = vsel %vm2894, %v4758, %v3897
      %v4791 = vsel %vm2894, %v4759, %v3899
      %v4792 = vsel %vm2894, %v4760, %v3901
      %v4793 = vsel %vm2894, %v4761, %v3903
      %v4794 = vsel %vm2894, %v4762, %v3905
      %v4795 = vsel %vm2894, %v4763, %v3907
      %v4796 = vsel %vm2894, %v4764, %v3909
      %v4797 = vsel %vm2894, %v4765, %v3911
      %v4798 = vsel %vm2894, %v4766, %v3913
      %v4799 = vsel %vm2894, %v4767, %v3915
      %v4800 = vsel %vm2894, %v4768, %v3917
      %v4801 = vsel %vm2894, %v4769, %v3919
      %v4802 = vsel %vm2894, %v4770, %v3921
      %v4803 = vsel %vm2894, %v4771, %v3923
      %v4804 = vsel %vm2894, %v4772, %v3925
      %v4805 = vsel %vm2894, %v4773, %v3927
      %v4806 = vsel %vm2894, %v4774, %v3929
      %v4807 = vsel %vm2894, %v4775, %v3931
      %v4808 = vsel %vm2894, %v4776, %v3933
      %v4809 = vsel %vm2894, %v4777, %v3935
      %v4810 = vsel %vm2894, %v4778, %v3937
      %v4811 = vsel %vm2894, %v4779, %v3939
      %v4812 = vsel %vm2894, %v4780, %v3941
      %v4813 = vsel %vm2894, %v4781, %v3943
      %v4814 = vsel %vm2894, %v4782, %v3945
      %v4815 = vsel %vm2894, %v4783, %v3947
      %v4816 = vsel %vm2894, %v4784, %v3949
      %v4817 = vsel %vm2894, %v4785, %v3951
      %v4818 = vsel %vm2894, %v4786, %v3953
      %v4819 = vsel %vm2894, %v4787, %v3955
      %v4820 = vsel %vm2934, %v4788, %v4021
      %v4821 = vsel %vm2934, %v4789, %v4023
      %v4822 = vsel %vm2934, %v4790, %v4025
      %v4823 = vsel %vm2934, %v4791, %v4027
      %v4824 = vsel %vm2934, %v4792, %v4029
      %v4825 = vsel %vm2934, %v4793, %v4031
      %v4826 = vsel %vm2934, %v4794, %v4033
      %v4827 = vsel %vm2934, %v4795, %v4035
      %v4828 = vsel %vm2934, %v4796, %v4037
      %v4829 = vsel %vm2934, %v4797, %v4039
      %v4830 = vsel %vm2934, %v4798, %v4041
      %v4831 = vsel %vm2934, %v4799, %v4043
      %v4832 = vsel %vm2934, %v4800, %v4045
      %v4833 = vsel %vm2934, %v4801, %v4047
      %v4834 = vsel %vm2934, %v4802, %v4049
      %v4835 = vsel %vm2934, %v4803, %v4051
      %v4836 = vsel %vm2934, %v4804, %v4053
      %v4837 = vsel %vm2934, %v4805, %v4055
      %v4838 = vsel %vm2934, %v4806, %v4057
      %v4839 = vsel %vm2934, %v4807, %v4059
      %v4840 = vsel %vm2934, %v4808, %v4061
      %v4841 = vsel %vm2934, %v4809, %v4063
      %v4842 = vsel %vm2934, %v4810, %v4065
      %v4843 = vsel %vm2934, %v4811, %v4067
      %v4844 = vsel %vm2934, %v4812, %v4069
      %v4845 = vsel %vm2934, %v4813, %v4071
      %v4846 = vsel %vm2934, %v4814, %v4073
      %v4847 = vsel %vm2934, %v4815, %v4075
      %v4848 = vsel %vm2934, %v4816, %v4077
      %v4849 = vsel %vm2934, %v4817, %v4079
      %v4850 = vsel %vm2934, %v4818, %v4081
      %v4851 = vsel %vm2934, %v4819, %v4083
      %vm4852 = vcmask 785408
      %v4853 = vsel %vm4852, %v4820, %v4149
      %v4854 = vsel %vm4852, %v4821, %v4151
      %v4855 = vsel %vm4852, %v4822, %v4153
      %v4856 = vsel %vm4852, %v4823, %v4155
      %v4857 = vsel %vm4852, %v4824, %v4157
      %v4858 = vsel %vm4852, %v4825, %v4159
      %v4859 = vsel %vm4852, %v4826, %v4161
      %v4860 = vsel %vm4852, %v4827, %v4163
      %v4861 = vsel %vm4852, %v4828, %v4165
      %v4862 = vsel %vm4852, %v4829, %v4167
      %v4863 = vsel %vm4852, %v4830, %v4169
      %v4864 = vsel %vm4852, %v4831, %v4171
      %v4865 = vsel %vm4852, %v4832, %v4173
      %v4866 = vsel %vm4852, %v4833, %v4175
      %v4867 = vsel %vm4852, %v4834, %v4177
      %v4868 = vsel %vm4852, %v4835, %v4179
      %v4869 = vsel %vm4852, %v4836, %v4181
      %v4870 = vsel %vm4852, %v4837, %v4183
      %v4871 = vsel %vm4852, %v4838, %v4185
      %v4872 = vsel %vm4852, %v4839, %v4187
      %v4873 = vsel %vm4852, %v4840, %v4189
      %v4874 = vsel %vm4852, %v4841, %v4191
      %v4875 = vsel %vm4852, %v4842, %v4193
      %v4876 = vsel %vm4852, %v4843, %v4195
      %v4877 = vsel %vm4852, %v4844, %v4197
      %v4878 = vsel %vm4852, %v4845, %v4199
      %v4879 = vsel %vm4852, %v4846, %v4201
      %v4880 = vsel %vm4852, %v4847, %v4203
      %v4881 = vsel %vm4852, %v4848, %v4205
      %v4882 = vsel %vm4852, %v4849, %v4207
      %v4883 = vsel %vm4852, %v4850, %v4209
      %v4884 = vsel %vm4852, %v4851, %v4211
      %vm4885 = vcmask 982016
      %v4886 = vsel %vm4885, %v4853, %v4277
      %v4887 = vsel %vm4885, %v4854, %v4279
      %v4888 = vsel %vm4885, %v4855, %v4281
      %v4889 = vsel %vm4885, %v4856, %v4283
      %v4890 = vsel %vm4885, %v4857, %v4285
      %v4891 = vsel %vm4885, %v4858, %v4287
      %v4892 = vsel %vm4885, %v4859, %v4289
      %v4893 = vsel %vm4885, %v4860, %v4291
      %v4894 = vsel %vm4885, %v4861, %v4293
      %v4895 = vsel %vm4885, %v4862, %v4295
      %v4896 = vsel %vm4885, %v4863, %v4297
      %v4897 = vsel %vm4885, %v4864, %v4299
      %v4898 = vsel %vm4885, %v4865, %v4301
      %v4899 = vsel %vm4885, %v4866, %v4303
      %v4900 = vsel %vm4885, %v4867, %v4305
      %v4901 = vsel %vm4885, %v4868, %v4307
      %v4902 = vsel %vm4885, %v4869, %v4309
      %v4903 = vsel %vm4885, %v4870, %v4311
      %v4904 = vsel %vm4885, %v4871, %v4313
      %v4905 = vsel %vm4885, %v4872, %v4315
      %v4906 = vsel %vm4885, %v4873, %v4317
      %v4907 = vsel %vm4885, %v4874, %v4319
      %v4908 = vsel %vm4885, %v4875, %v4321
      %v4909 = vsel %vm4885, %v4876, %v4323
      %v4910 = vsel %vm4885, %v4877, %v4325
      %v4911 = vsel %vm4885, %v4878, %v4327
      %v4912 = vsel %vm4885, %v4879, %v4329
      %v4913 = vsel %vm4885, %v4880, %v4331
      %v4914 = vsel %vm4885, %v4881, %v4333
      %v4915 = vsel %vm4885, %v4882, %v4335
      %v4916 = vsel %vm4885, %v4883, %v4337
      %v4917 = vsel %vm4885, %v4884, %v4339
      %v4918 = vsel %vm2003, %v4277, %v4405
      %v4919 = vsel %vm2003, %v4279, %v4407
      %v4920 = vsel %vm2003, %v4281, %v4409
      %v4921 = vsel %vm2003, %v4283, %v4411
      %v4922 = vsel %vm2003, %v4285, %v4413
      %v4923 = vsel %vm2003, %v4287, %v4415
      %v4924 = vsel %vm2003, %v4289, %v4417
      %v4925 = vsel %vm2003, %v4291, %v4419
      %v4926 = vsel %vm2003, %v4293, %v4421
      %v4927 = vsel %vm2003, %v4295, %v4423
      %v4928 = vsel %vm2003, %v4297, %v4425
      %v4929 = vsel %vm2003, %v4299, %v4427
      %v4930 = vsel %vm2003, %v4301, %v4429
      %v4931 = vsel %vm2003, %v4303, %v4431
      %v4932 = vsel %vm2003, %v4305, %v4433
      %v4933 = vsel %vm2003, %v4307, %v4435
      %v4934 = vsel %vm2003, %v4309, %v4437
      %v4935 = vsel %vm2003, %v4311, %v4439
      %v4936 = vsel %vm2003, %v4313, %v4441
      %v4937 = vsel %vm2003, %v4315, %v4443
      %v4938 = vsel %vm2003, %v4317, %v4445
      %v4939 = vsel %vm2003, %v4319, %v4447
      %v4940 = vsel %vm2003, %v4321, %v4449
      %v4941 = vsel %vm2003, %v4323, %v4451
      %v4942 = vsel %vm2003, %v4325, %v4453
      %v4943 = vsel %vm2003, %v4327, %v4455
      %v4944 = vsel %vm2003, %v4329, %v4457
      %v4945 = vsel %vm2003, %v4331, %v4459
      %v4946 = vsel %vm2003, %v4333, %v4461
      %v4947 = vsel %vm2003, %v4335, %v4463
      %v4948 = vsel %vm2003, %v4337, %v4465
      %v4949 = vsel %vm2003, %v4339, %v4467
      %v4950 = vsel %vm2885, %v4918, %v4533
      %v4951 = vsel %vm2885, %v4919, %v4535
      %v4952 = vsel %vm2885, %v4920, %v4537
      %v4953 = vsel %vm2885, %v4921, %v4539
      %v4954 = vsel %vm2885, %v4922, %v4541
      %v4955 = vsel %vm2885, %v4923, %v4543
      %v4956 = vsel %vm2885, %v4924, %v4545
      %v4957 = vsel %vm2885, %v4925, %v4547
      %v4958 = vsel %vm2885, %v4926, %v4549
      %v4959 = vsel %vm2885, %v4927, %v4551
      %v4960 = vsel %vm2885, %v4928, %v4553
      %v4961 = vsel %vm2885, %v4929, %v4555
      %v4962 = vsel %vm2885, %v4930, %v4557
      %v4963 = vsel %vm2885, %v4931, %v4559
      %v4964 = vsel %vm2885, %v4932, %v4561
      %v4965 = vsel %vm2885, %v4933, %v4563
      %v4966 = vsel %vm2885, %v4934, %v4565
      %v4967 = vsel %vm2885, %v4935, %v4567
      %v4968 = vsel %vm2885, %v4936, %v4569
      %v4969 = vsel %vm2885, %v4937, %v4571
      %v4970 = vsel %vm2885, %v4938, %v4573
      %v4971 = vsel %vm2885, %v4939, %v4575
      %v4972 = vsel %vm2885, %v4940, %v4577
      %v4973 = vsel %vm2885, %v4941, %v4579
      %v4974 = vsel %vm2885, %v4942, %v4581
      %v4975 = vsel %vm2885, %v4943, %v4583
      %v4976 = vsel %vm2885, %v4944, %v4585
      %v4977 = vsel %vm2885, %v4945, %v4587
      %v4978 = vsel %vm2885, %v4946, %v4589
      %v4979 = vsel %vm2885, %v4947, %v4591
      %v4980 = vsel %vm2885, %v4948, %v4593
      %v4981 = vsel %vm2885, %v4949, %v4595
      %v4982 = vsel %vm2912, %v4950, %v4661
      %v4983 = vsel %vm2912, %v4951, %v4663
      %v4984 = vsel %vm2912, %v4952, %v4665
      %v4985 = vsel %vm2912, %v4953, %v4667
      %v4986 = vsel %vm2912, %v4954, %v4669
      %v4987 = vsel %vm2912, %v4955, %v4671
      %v4988 = vsel %vm2912, %v4956, %v4673
      %v4989 = vsel %vm2912, %v4957, %v4675
      %v4990 = vsel %vm2912, %v4958, %v4677
      %v4991 = vsel %vm2912, %v4959, %v4679
      %v4992 = vsel %vm2912, %v4960, %v4681
      %v4993 = vsel %vm2912, %v4961, %v4683
      %v4994 = vsel %vm2912, %v4962, %v4685
      %v4995 = vsel %vm2912, %v4963, %v4687
      %v4996 = vsel %vm2912, %v4964, %v4689
      %v4997 = vsel %vm2912, %v4965, %v4691
      %v4998 = vsel %vm2912, %v4966, %v4693
      %v4999 = vsel %vm2912, %v4967, %v4695
      %v5000 = vsel %vm2912, %v4968, %v4697
      %v5001 = vsel %vm2912, %v4969, %v4699
      %v5002 = vsel %vm2912, %v4970, %v4701
      %v5003 = vsel %vm2912, %v4971, %v4703
      %v5004 = vsel %vm2912, %v4972, %v4705
      %v5005 = vsel %vm2912, %v4973, %v4707
      %v5006 = vsel %vm2912, %v4974, %v4709
      %v5007 = vsel %vm2912, %v4975, %v4711
      %v5008 = vsel %vm2912, %v4976, %v4713
      %v5009 = vsel %vm2912, %v4977, %v4715
      %v5010 = vsel %vm2912, %v4978, %v4717
      %v5011 = vsel %vm2912, %v4979, %v4719
      %v5012 = vsel %vm2912, %v4980, %v4721
      %v5013 = vsel %vm2912, %v4981, %v4723
      %v5014 = vld [vmem:[%s6] sm:$0xff]
      %v5015 = vld [vmem:[%s6 + $0x8] sm:$0xff]
      %v5016 = vld [vmem:[%s6 + $0x10] sm:$0xff]
      %v5017 = vld [vmem:[%s6 + $0x18] sm:$0xff]
      %v5018 = vld [vmem:[%s6 + $0x20] sm:$0xff]
      %v5019 = vld [vmem:[%s6 + $0x28] sm:$0xff]
      %v5020 = vld [vmem:[%s6 + $0x30] sm:$0xff]
      %v5021 = vld [vmem:[%s6 + $0x38] sm:$0xff]
      %v5022 = vld [vmem:[%s6 + $0x40] sm:$0xff]
      %v5023 = vld [vmem:[%s6 + $0x48] sm:$0xff]
      %v5024 = vld [vmem:[%s6 + $0x50] sm:$0xff]
      %v5025 = vld [vmem:[%s6 + $0x58] sm:$0xff]
      %v5026 = vld [vmem:[%s6 + $0x60] sm:$0xff]
      %v5027 = vld [vmem:[%s6 + $0x68] sm:$0xff]
      %v5028 = vld [vmem:[%s6 + $0x70] sm:$0xff]
      %v5029 = vld [vmem:[%s6 + $0x78] sm:$0xff]
      %v5030 = vld [vmem:[%s6 + $0x80] sm:$0xff]
      %v5031 = vld [vmem:[%s6 + $0x88] sm:$0xff]
      %v5032 = vld [vmem:[%s6 + $0x90] sm:$0xff]
      %v5033 = vld [vmem:[%s6 + $0x98] sm:$0xff]
      %v5034 = vld [vmem:[%s6 + $0xa0] sm:$0xff]
      %v5035 = vld [vmem:[%s6 + $0xa8] sm:$0xff]
      %v5036 = vld [vmem:[%s6 + $0xb0] sm:$0xff]
      %v5037 = vld [vmem:[%s6 + $0xb8] sm:$0xff]
      %v5038 = vld [vmem:[%s6 + $0xc0] sm:$0xff]
      %v5039 = vld [vmem:[%s6 + $0xc8] sm:$0xff]
      %v5040 = vld [vmem:[%s6 + $0xd0] sm:$0xff]
      %v5041 = vld [vmem:[%s7] sm:$0x1]
      %v5043 = vperm.slane %v5041, 0
      %vm5045 = vcmask 719872
      %v5047 = vsel %vm5045, %v4982, 0
      %v5050 = vsel %vm5045, %v4983, 0
      %v5053 = vsel %vm5045, %v4984, 0
      %v5056 = vsel %vm5045, %v4985, 0
      %v5059 = vsel %vm5045, %v4986, 0
      %v5062 = vsel %vm5045, %v4987, 0
      %v5065 = vsel %vm5045, %v4988, 0
      %v5068 = vsel %vm5045, %v4989, 0
      %v5071 = vsel %vm5045, %v4990, 0
      %v5074 = vsel %vm5045, %v4991, 0
      %v5077 = vsel %vm5045, %v4992, 0
      %v5080 = vsel %vm5045, %v4993, 0
      %v5083 = vsel %vm5045, %v4994, 0
      %v5086 = vsel %vm5045, %v4995, 0
      %v5089 = vsel %vm5045, %v4996, 0
      %v5092 = vsel %vm5045, %v4997, 0
      %v5095 = vsel %vm5045, %v4998, 0
      %v5098 = vsel %vm5045, %v4999, 0
      %v5101 = vsel %vm5045, %v5000, 0
      %v5104 = vsel %vm5045, %v5001, 0
      %v5107 = vsel %vm5045, %v5002, 0
      %v5110 = vsel %vm5045, %v5003, 0
      %v5113 = vsel %vm5045, %v5004, 0
      %v5116 = vsel %vm5045, %v5005, 0
      %v5119 = vsel %vm5045, %v5006, 0
      %v5122 = vsel %vm5045, %v5007, 0
      %v5125 = vsel %vm5045, %v5008, 0
      %v5128 = vsel %vm5045, %v5009, 0
      %v5131 = vsel %vm5045, %v5010, 0
      %v5134 = vsel %vm5045, %v5011, 0
      %v5137 = vsel %vm5045, %v5012, 0
      %v5140 = vsel %vm5045, %v5013, 0
      %5142 = vmatpush.msra.mxu0 %v5029
      %5143 = vmatpush.msra.mxu0 %v5028
      %5144 = vmatpush.msra.mxu0 %v5027
      %5145 = vmatpush.msra.mxu0 %v5026
      %5146 = vmatpush.msra.mxu0 %v5025
      %5147 = vmatpush.msra.mxu0 %v5024
      %5148 = vmatpush.msra.mxu0 %v5023
      %5149 = vmatpush.msra.mxu0 %v5022
      %5150 = vmatpush.msra.mxu0 %v5021
      %5151 = vmatpush.msra.mxu0 %v5020
      %5152 = vmatpush.msra.mxu0 %v5019
      %5153 = vmatpush.msra.mxu0 %v5018
      %5154 = vmatpush.msra.mxu0 %v5017
      %5155 = vmatpush.msra.mxu0 %v5016
      %5156 = vmatpush.msra.mxu0 %v5015
      %5157 = vmatpush.msra.mxu0 %v5014
      %5158 = vmatmul.f32.gmra.mxu0 %v4886
      %v5159 = vpop.f32.mrf.mxu0
      %v5160 = vadd.f32 %v5043, %v5159
      %5161 = vmatmul.f32.gmra.mxu0 %v4887
      %v5162 = vpop.f32.mrf.mxu0
      %v5163 = vadd.f32 %v5043, %v5162
      %5164 = vmatmul.f32.gmra.mxu0 %v4888
      %v5165 = vpop.f32.mrf.mxu0
      %v5166 = vadd.f32 %v5043, %v5165
      %5167 = vmatmul.f32.gmra.mxu0 %v4889
      %v5168 = vpop.f32.mrf.mxu0
      %v5169 = vadd.f32 %v5043, %v5168
      %5170 = vmatmul.f32.gmra.mxu0 %v4890
      %v5171 = vpop.f32.mrf.mxu0
      %v5172 = vadd.f32 %v5043, %v5171
      %5173 = vmatmul.f32.gmra.mxu0 %v4891
      %v5174 = vpop.f32.mrf.mxu0
      %v5175 = vadd.f32 %v5043, %v5174
      %5176 = vmatmul.f32.gmra.mxu0 %v4892
      %v5177 = vpop.f32.mrf.mxu0
      %v5178 = vadd.f32 %v5043, %v5177
      %5179 = vmatmul.f32.gmra.mxu0 %v4893
      %v5180 = vpop.f32.mrf.mxu0
      %v5181 = vadd.f32 %v5043, %v5180
      %5182 = vmatmul.f32.gmra.mxu0 %v4894
      %v5183 = vpop.f32.mrf.mxu0
      %v5184 = vadd.f32 %v5043, %v5183
      %5185 = vmatmul.f32.gmra.mxu0 %v4895
      %v5186 = vpop.f32.mrf.mxu0
      %v5187 = vadd.f32 %v5043, %v5186
      %5188 = vmatmul.f32.gmra.mxu0 %v4896
      %v5189 = vpop.f32.mrf.mxu0
      %v5190 = vadd.f32 %v5043, %v5189
      %5191 = vmatmul.f32.gmra.mxu0 %v4897
      %v5192 = vpop.f32.mrf.mxu0
      %v5193 = vadd.f32 %v5043, %v5192
      %5194 = vmatmul.f32.gmra.mxu0 %v4898
      %v5195 = vpop.f32.mrf.mxu0
      %v5196 = vadd.f32 %v5043, %v5195
      %5197 = vmatmul.f32.gmra.mxu0 %v4899
      %v5198 = vpop.f32.mrf.mxu0
      %v5199 = vadd.f32 %v5043, %v5198
      %5200 = vmatmul.f32.gmra.mxu0 %v4900
      %v5201 = vpop.f32.mrf.mxu0
      %v5202 = vadd.f32 %v5043, %v5201
      %5203 = vmatmul.f32.gmra.mxu0 %v4901
      %v5204 = vpop.f32.mrf.mxu0
      %v5205 = vadd.f32 %v5043, %v5204
      %5206 = vmatmul.f32.gmra.mxu0 %v4902
      %v5207 = vpop.f32.mrf.mxu0
      %v5208 = vadd.f32 %v5043, %v5207
      %5209 = vmatmul.f32.gmra.mxu0 %v4903
      %v5210 = vpop.f32.mrf.mxu0
      %v5211 = vadd.f32 %v5043, %v5210
      %5212 = vmatmul.f32.gmra.mxu0 %v4904
      %v5213 = vpop.f32.mrf.mxu0
      %v5214 = vadd.f32 %v5043, %v5213
      %5215 = vmatmul.f32.gmra.mxu0 %v4905
      %v5216 = vpop.f32.mrf.mxu0
      %v5217 = vadd.f32 %v5043, %v5216
      %5218 = vmatmul.f32.gmra.mxu0 %v4906
      %v5219 = vpop.f32.mrf.mxu0
      %v5220 = vadd.f32 %v5043, %v5219
      %5221 = vmatmul.f32.gmra.mxu0 %v4907
      %v5222 = vpop.f32.mrf.mxu0
      %v5223 = vadd.f32 %v5043, %v5222
      %5224 = vmatmul.f32.gmra.mxu0 %v4908
      %v5225 = vpop.f32.mrf.mxu0
      %v5226 = vadd.f32 %v5043, %v5225
      %5227 = vmatmul.f32.gmra.mxu0 %v4909
      %v5228 = vpop.f32.mrf.mxu0
      %v5229 = vadd.f32 %v5043, %v5228
      %5230 = vmatmul.f32.gmra.mxu0 %v4910
      %v5231 = vpop.f32.mrf.mxu0
      %v5232 = vadd.f32 %v5043, %v5231
      %5233 = vmatmul.f32.gmra.mxu0 %v4911
      %v5234 = vpop.f32.mrf.mxu0
      %v5235 = vadd.f32 %v5043, %v5234
      %5236 = vmatmul.f32.gmra.mxu0 %v4912
      %v5237 = vpop.f32.mrf.mxu0
      %v5238 = vadd.f32 %v5043, %v5237
      %5239 = vmatmul.f32.gmra.mxu0 %v4913
      %v5240 = vpop.f32.mrf.mxu0
      %v5241 = vadd.f32 %v5043, %v5240
      %5242 = vmatmul.f32.gmra.mxu0 %v4914
      %v5243 = vpop.f32.mrf.mxu0
      %v5244 = vadd.f32 %v5043, %v5243
      %5245 = vmatmul.f32.gmra.mxu0 %v4915
      %v5246 = vpop.f32.mrf.mxu0
      %v5247 = vadd.f32 %v5043, %v5246
      %5248 = vmatmul.f32.gmra.mxu0 %v4916
      %v5249 = vpop.f32.mrf.mxu0
      %v5250 = vadd.f32 %v5043, %v5249
      %5251 = vmatmul.f32.gmra.mxu0 %v4917
      %v5252 = vpop.f32.mrf.mxu0
      %v5253 = vadd.f32 %v5043, %v5252
      %5254 = vdwg.mxu0
      %5255 = vmatpush.msra.mxu0 0.0
      %5256 = vmatpush.msra.mxu0 0.0
      %5257 = vmatpush.msra.mxu0 0.0
      %5258 = vmatpush.msra.mxu0 0.0
      %5259 = vmatpush.msra.mxu0 0.0
      %5260 = vmatpush.msra.mxu0 %v5040
      %5261 = vmatpush.msra.mxu0 %v5039
      %5262 = vmatpush.msra.mxu0 %v5038
      %5263 = vmatpush.msra.mxu0 %v5037
      %5264 = vmatpush.msra.mxu0 %v5036
      %5265 = vmatpush.msra.mxu0 %v5035
      %5266 = vmatpush.msra.mxu0 %v5034
      %5267 = vmatpush.msra.mxu0 %v5033
      %5268 = vmatpush.msra.mxu0 %v5032
      %5269 = vmatpush.msra.mxu0 %v5031
      %5270 = vmatpush.msra.mxu0 %v5030
      %5271 = vmatmul.f32.gmra.mxu0 %v5047
      %v5272 = vpop.f32.mrf.mxu0
      %v5273 = vadd.f32 %v5160, %v5272
      %5274 = vmatmul.f32.gmra.mxu0 %v5050
      %v5275 = vpop.f32.mrf.mxu0
      %v5276 = vadd.f32 %v5163, %v5275
      %5277 = vmatmul.f32.gmra.mxu0 %v5053
      %v5278 = vpop.f32.mrf.mxu0
      %v5279 = vadd.f32 %v5166, %v5278
      %5280 = vmatmul.f32.gmra.mxu0 %v5056
      %v5281 = vpop.f32.mrf.mxu0
      %v5282 = vadd.f32 %v5169, %v5281
      %5283 = vmatmul.f32.gmra.mxu0 %v5059
      %v5284 = vpop.f32.mrf.mxu0
      %v5285 = vadd.f32 %v5172, %v5284
      %5286 = vmatmul.f32.gmra.mxu0 %v5062
      %v5287 = vpop.f32.mrf.mxu0
      %v5288 = vadd.f32 %v5175, %v5287
      %5289 = vmatmul.f32.gmra.mxu0 %v5065
      %v5290 = vpop.f32.mrf.mxu0
      %v5291 = vadd.f32 %v5178, %v5290
      %5292 = vmatmul.f32.gmra.mxu0 %v5068
      %v5293 = vpop.f32.mrf.mxu0
      %v5294 = vadd.f32 %v5181, %v5293
      %5295 = vmatmul.f32.gmra.mxu0 %v5071
      %v5296 = vpop.f32.mrf.mxu0
      %v5297 = vadd.f32 %v5184, %v5296
      %5298 = vmatmul.f32.gmra.mxu0 %v5074
      %v5299 = vpop.f32.mrf.mxu0
      %v5300 = vadd.f32 %v5187, %v5299
      %5301 = vmatmul.f32.gmra.mxu0 %v5077
      %v5302 = vpop.f32.mrf.mxu0
      %v5303 = vadd.f32 %v5190, %v5302
      %5304 = vmatmul.f32.gmra.mxu0 %v5080
      %v5305 = vpop.f32.mrf.mxu0
      %v5306 = vadd.f32 %v5193, %v5305
      %5307 = vmatmul.f32.gmra.mxu0 %v5083
      %v5308 = vpop.f32.mrf.mxu0
      %v5309 = vadd.f32 %v5196, %v5308
      %5310 = vmatmul.f32.gmra.mxu0 %v5086
      %v5311 = vpop.f32.mrf.mxu0
      %v5312 = vadd.f32 %v5199, %v5311
      %5313 = vmatmul.f32.gmra.mxu0 %v5089
      %v5314 = vpop.f32.mrf.mxu0
      %v5315 = vadd.f32 %v5202, %v5314
      %5316 = vmatmul.f32.gmra.mxu0 %v5092
      %v5317 = vpop.f32.mrf.mxu0
      %v5318 = vadd.f32 %v5205, %v5317
      %5319 = vmatmul.f32.gmra.mxu0 %v5095
      %v5320 = vpop.f32.mrf.mxu0
      %v5321 = vadd.f32 %v5208, %v5320
      %5322 = vmatmul.f32.gmra.mxu0 %v5098
      %v5323 = vpop.f32.mrf.mxu0
      %v5324 = vadd.f32 %v5211, %v5323
      %5325 = vmatmul.f32.gmra.mxu0 %v5101
      %v5326 = vpop.f32.mrf.mxu0
      %v5327 = vadd.f32 %v5214, %v5326
      %5328 = vmatmul.f32.gmra.mxu0 %v5104
      %v5329 = vpop.f32.mrf.mxu0
      %v5330 = vadd.f32 %v5217, %v5329
      %5331 = vmatmul.f32.gmra.mxu0 %v5107
      %v5332 = vpop.f32.mrf.mxu0
      %v5333 = vadd.f32 %v5220, %v5332
      %5334 = vmatmul.f32.gmra.mxu0 %v5110
      %v5335 = vpop.f32.mrf.mxu0
      %v5336 = vadd.f32 %v5223, %v5335
      %5337 = vmatmul.f32.gmra.mxu0 %v5113
      %v5338 = vpop.f32.mrf.mxu0
      %v5339 = vadd.f32 %v5226, %v5338
      %5340 = vmatmul.f32.gmra.mxu0 %v5116
      %v5341 = vpop.f32.mrf.mxu0
      %v5342 = vadd.f32 %v5229, %v5341
      %5343 = vmatmul.f32.gmra.mxu0 %v5119
      %v5344 = vpop.f32.mrf.mxu0
      %v5345 = vadd.f32 %v5232, %v5344
      %5346 = vmatmul.f32.gmra.mxu0 %v5122
      %v5347 = vpop.f32.mrf.mxu0
      %v5348 = vadd.f32 %v5235, %v5347
      %5349 = vmatmul.f32.gmra.mxu0 %v5125
      %v5350 = vpop.f32.mrf.mxu0
      %v5351 = vadd.f32 %v5238, %v5350
      %5352 = vmatmul.f32.gmra.mxu0 %v5128
      %v5353 = vpop.f32.mrf.mxu0
      %v5354 = vadd.f32 %v5241, %v5353
      %5355 = vmatmul.f32.gmra.mxu0 %v5131
      %v5356 = vpop.f32.mrf.mxu0
      %v5357 = vadd.f32 %v5244, %v5356
      %5358 = vmatmul.f32.gmra.mxu0 %v5134
      %v5359 = vpop.f32.mrf.mxu0
      %v5360 = vadd.f32 %v5247, %v5359
      %5361 = vmatmul.f32.gmra.mxu0 %v5137
      %v5362 = vpop.f32.mrf.mxu0
      %v5363 = vadd.f32 %v5250, %v5362
      %5364 = vmatmul.f32.gmra.mxu0 %v5140
      %v5365 = vpop.f32.mrf.mxu0
      %v5366 = vadd.f32 %v5253, %v5365
      %5367 = vdwg.mxu0
      %v5368 = vmax.f32 %v5273, 0.0
      %v5369 = vmax.f32 %v5276, 0.0
      %v5370 = vmax.f32 %v5279, 0.0
      %v5371 = vmax.f32 %v5282, 0.0
      %v5372 = vmax.f32 %v5285, 0.0
      %v5373 = vmax.f32 %v5288, 0.0
      %v5374 = vmax.f32 %v5291, 0.0
      %v5375 = vmax.f32 %v5294, 0.0
      %v5376 = vmax.f32 %v5297, 0.0
      %v5377 = vmax.f32 %v5300, 0.0
      %v5378 = vmax.f32 %v5303, 0.0
      %v5379 = vmax.f32 %v5306, 0.0
      %v5380 = vmax.f32 %v5309, 0.0
      %v5381 = vmax.f32 %v5312, 0.0
      %v5382 = vmax.f32 %v5315, 0.0
      %v5383 = vmax.f32 %v5318, 0.0
      %v5384 = vmax.f32 %v5321, 0.0
      %v5385 = vmax.f32 %v5324, 0.0
      %v5386 = vmax.f32 %v5327, 0.0
      %v5387 = vmax.f32 %v5330, 0.0
      %v5388 = vmax.f32 %v5333, 0.0
      %v5389 = vmax.f32 %v5336, 0.0
      %v5390 = vmax.f32 %v5339, 0.0
      %v5391 = vmax.f32 %v5342, 0.0
      %v5392 = vmax.f32 %v5345, 0.0
      %v5393 = vmax.f32 %v5348, 0.0
      %v5394 = vmax.f32 %v5351, 0.0
      %v5395 = vmax.f32 %v5354, 0.0
      %v5396 = vmax.f32 %v5357, 0.0
      %v5397 = vmax.f32 %v5360, 0.0
      %v5398 = vmax.f32 %v5363, 0.0
      %v5399 = vmax.f32 %v5366, 0.0
      %v5400 = vld [vmem:[%s8] sm:$0xff]
      %v5401 = vld [vmem:[%s9] sm:$0x1]
      %v5403 = vperm.slane %v5401, 0
      %v5406 = vsel %vm416, %v5368, 0
      %v5409 = vsel %vm416, %v5369, 0
      %v5412 = vsel %vm416, %v5370, 0
      %v5415 = vsel %vm416, %v5371, 0
      %v5418 = vsel %vm416, %v5372, 0
      %v5421 = vsel %vm416, %v5373, 0
      %v5424 = vsel %vm416, %v5374, 0
      %v5427 = vsel %vm416, %v5375, 0
      %v5430 = vsel %vm416, %v5376, 0
      %v5433 = vsel %vm416, %v5377, 0
      %v5436 = vsel %vm416, %v5378, 0
      %v5439 = vsel %vm416, %v5379, 0
      %v5442 = vsel %vm416, %v5380, 0
      %v5445 = vsel %vm416, %v5381, 0
      %v5448 = vsel %vm416, %v5382, 0
      %v5451 = vsel %vm416, %v5383, 0
      %v5454 = vsel %vm416, %v5384, 0
      %v5457 = vsel %vm416, %v5385, 0
      %v5460 = vsel %vm416, %v5386, 0
      %v5463 = vsel %vm416, %v5387, 0
      %v5466 = vsel %vm416, %v5388, 0
      %v5469 = vsel %vm416, %v5389, 0
      %v5472 = vsel %vm416, %v5390, 0
      %v5475 = vsel %vm416, %v5391, 0
      %v5478 = vsel %vm416, %v5392, 0
      %v5481 = vsel %vm416, %v5393, 0
      %v5484 = vsel %vm416, %v5394, 0
      %v5487 = vsel %vm416, %v5395, 0
      %v5490 = vsel %vm416, %v5396, 0
      %v5493 = vsel %vm416, %v5397, 0
      %v5496 = vsel %vm416, %v5398, 0
      %v5499 = vsel %vm416, %v5399, 0
      %5501 = vmatpush.msra.mxu0 0.0
      %5502 = vmatpush.msra.mxu0 0.0
      %5503 = vmatpush.msra.mxu0 0.0
      %5504 = vmatpush.msra.mxu0 0.0
      %5505 = vmatpush.msra.mxu0 0.0
      %5506 = vmatpush.msra.mxu0 0.0
      %5507 = vmatpush.msra.mxu0 0.0
      %5508 = vmatpush.msra.mxu0 0.0
      %5509 = vmatpush.msra.mxu0 0.0
      %5510 = vmatpush.msra.mxu0 0.0
      %5511 = vmatpush.msra.mxu0 0.0
      %5512 = vmatpush.msra.mxu0 0.0
      %5513 = vmatpush.msra.mxu0 0.0
      %5514 = vmatpush.msra.mxu0 0.0
      %5515 = vmatpush.msra.mxu0 0.0
      %5516 = vmatpush.msra.mxu0 %v5400
      %5517 = vmatmul.f32.gmra.mxu0 %v5406
      %v5518 = vpop.f32.mrf.mxu0
      %v5519 = vadd.f32 %v5403, %v5518
      %5520 = vmatmul.f32.gmra.mxu0 %v5409
      %v5521 = vpop.f32.mrf.mxu0
      %v5522 = vadd.f32 %v5403, %v5521
      %5523 = vmatmul.f32.gmra.mxu0 %v5412
      %v5524 = vpop.f32.mrf.mxu0
      %v5525 = vadd.f32 %v5403, %v5524
      %5526 = vmatmul.f32.gmra.mxu0 %v5415
      %v5527 = vpop.f32.mrf.mxu0
      %v5528 = vadd.f32 %v5403, %v5527
      %5529 = vmatmul.f32.gmra.mxu0 %v5418
      %v5530 = vpop.f32.mrf.mxu0
      %v5531 = vadd.f32 %v5403, %v5530
      %5532 = vmatmul.f32.gmra.mxu0 %v5421
      %v5533 = vpop.f32.mrf.mxu0
      %v5534 = vadd.f32 %v5403, %v5533
      %5535 = vmatmul.f32.gmra.mxu0 %v5424
      %v5536 = vpop.f32.mrf.mxu0
      %v5537 = vadd.f32 %v5403, %v5536
      %5538 = vmatmul.f32.gmra.mxu0 %v5427
      %v5539 = vpop.f32.mrf.mxu0
      %v5540 = vadd.f32 %v5403, %v5539
      %5541 = vmatmul.f32.gmra.mxu0 %v5430
      %v5542 = vpop.f32.mrf.mxu0
      %v5543 = vadd.f32 %v5403, %v5542
      %5544 = vmatmul.f32.gmra.mxu0 %v5433
      %v5545 = vpop.f32.mrf.mxu0
      %v5546 = vadd.f32 %v5403, %v5545
      %5547 = vmatmul.f32.gmra.mxu0 %v5436
      %v5548 = vpop.f32.mrf.mxu0
      %v5549 = vadd.f32 %v5403, %v5548
      %5550 = vmatmul.f32.gmra.mxu0 %v5439
      %v5551 = vpop.f32.mrf.mxu0
      %v5552 = vadd.f32 %v5403, %v5551
      %5553 = vmatmul.f32.gmra.mxu0 %v5442
      %v5554 = vpop.f32.mrf.mxu0
      %v5555 = vadd.f32 %v5403, %v5554
      %5556 = vmatmul.f32.gmra.mxu0 %v5445
      %v5557 = vpop.f32.mrf.mxu0
      %v5558 = vadd.f32 %v5403, %v5557
      %5559 = vmatmul.f32.gmra.mxu0 %v5448
      %v5560 = vpop.f32.mrf.mxu0
      %v5561 = vadd.f32 %v5403, %v5560
      %5562 = vmatmul.f32.gmra.mxu0 %v5451
      %v5563 = vpop.f32.mrf.mxu0
      %v5564 = vadd.f32 %v5403, %v5563
      %5565 = vmatmul.f32.gmra.mxu0 %v5454
      %v5566 = vpop.f32.mrf.mxu0
      %v5567 = vadd.f32 %v5403, %v5566
      %5568 = vmatmul.f32.gmra.mxu0 %v5457
      %v5569 = vpop.f32.mrf.mxu0
      %v5570 = vadd.f32 %v5403, %v5569
      %5571 = vmatmul.f32.gmra.mxu0 %v5460
      %v5572 = vpop.f32.mrf.mxu0
      %v5573 = vadd.f32 %v5403, %v5572
      %5574 = vmatmul.f32.gmra.mxu0 %v5463
      %v5575 = vpop.f32.mrf.mxu0
      %v5576 = vadd.f32 %v5403, %v5575
      %5577 = vmatmul.f32.gmra.mxu0 %v5466
      %v5578 = vpop.f32.mrf.mxu0
      %v5579 = vadd.f32 %v5403, %v5578
      %5580 = vmatmul.f32.gmra.mxu0 %v5469
      %v5581 = vpop.f32.mrf.mxu0
      %v5582 = vadd.f32 %v5403, %v5581
      %5583 = vmatmul.f32.gmra.mxu0 %v5472
      %v5584 = vpop.f32.mrf.mxu0
      %v5585 = vadd.f32 %v5403, %v5584
      %5586 = vmatmul.f32.gmra.mxu0 %v5475
      %v5587 = vpop.f32.mrf.mxu0
      %v5588 = vadd.f32 %v5403, %v5587
      %5589 = vmatmul.f32.gmra.mxu0 %v5478
      %v5590 = vpop.f32.mrf.mxu0
      %v5591 = vadd.f32 %v5403, %v5590
      %5592 = vmatmul.f32.gmra.mxu0 %v5481
      %v5593 = vpop.f32.mrf.mxu0
      %v5594 = vadd.f32 %v5403, %v5593
      %5595 = vmatmul.f32.gmra.mxu0 %v5484
      %v5596 = vpop.f32.mrf.mxu0
      %v5597 = vadd.f32 %v5403, %v5596
      %5598 = vmatmul.f32.gmra.mxu0 %v5487
      %v5599 = vpop.f32.mrf.mxu0
      %v5600 = vadd.f32 %v5403, %v5599
      %5601 = vmatmul.f32.gmra.mxu0 %v5490
      %v5602 = vpop.f32.mrf.mxu0
      %v5603 = vadd.f32 %v5403, %v5602
      %5604 = vmatmul.f32.gmra.mxu0 %v5493
      %v5605 = vpop.f32.mrf.mxu0
      %v5606 = vadd.f32 %v5403, %v5605
      %5607 = vmatmul.f32.gmra.mxu0 %v5496
      %v5608 = vpop.f32.mrf.mxu0
      %v5609 = vadd.f32 %v5403, %v5608
      %5610 = vmatmul.f32.gmra.mxu0 %v5499
      %v5611 = vpop.f32.mrf.mxu0
      %v5612 = vadd.f32 %v5403, %v5611
      %5613 = vdwg.mxu0
      %5614 = vxpose.xlu0.b32.start [1/16] %v5519, 128
      %5615 = vxpose.xlu0.b32.cont [2/16] %v5522, 128
      %5616 = vxpose.xlu0.b32.cont [3/16] %v5525, 128
      %5617 = vxpose.xlu0.b32.cont [4/16] %v5528, 128
      %5618 = vxpose.xlu0.b32.cont [5/16] %v5531, 128
      %5619 = vxpose.xlu0.b32.cont [6/16] %v5534, 128
      %5620 = vxpose.xlu0.b32.cont [7/16] %v5537, 128
      %5621 = vxpose.xlu0.b32.cont [8/16] %v5540, 128
      %5622 = vxpose.xlu0.b32.cont [9/16] %v5543, 128
      %5623 = vxpose.xlu0.b32.cont [10/16] %v5546, 128
      %5624 = vxpose.xlu0.b32.cont [11/16] %v5549, 128
      %5625 = vxpose.xlu0.b32.cont [12/16] %v5552, 128
      %5626 = vxpose.xlu0.b32.cont [13/16] %v5555, 128
      %5627 = vxpose.xlu0.b32.cont [14/16] %v5558, 128
      %5628 = vxpose.xlu0.b32.cont [15/16] %v5561, 128
      %5629 = vxpose.xlu0.b32.end [16/16] %v5564, 128
      %v5630 = vpop.trf.xlu0
      %v5631 = vpop.trf.xlu0
      %v5632 = vpop.trf.xlu0
      %v5633 = vpop.trf.xlu0
      %v5634 = vpop.trf.xlu0
      %v5635 = vpop.trf.xlu0
      %v5636 = vpop.trf.xlu0
      %v5637 = vpop.trf.xlu0
      %v5638 = vpop.trf.xlu0
      %v5639 = vpop.trf.xlu0
      %v5640 = vpop.trf.xlu0
      %v5641 = vpop.trf.xlu0
      %v5642 = vpop.trf.xlu0
      %v5643 = vpop.trf.xlu0
      %v5644 = vpop.trf.xlu0
      %v5645 = vpop.trf.xlu0
      %5646 = vxpose.xlu0.b32.start [1/16] %v5567, 128
      %5647 = vxpose.xlu0.b32.cont [2/16] %v5570, 128
      %5648 = vxpose.xlu0.b32.cont [3/16] %v5573, 128
      %5649 = vxpose.xlu0.b32.cont [4/16] %v5576, 128
      %5650 = vxpose.xlu0.b32.cont [5/16] %v5579, 128
      %5651 = vxpose.xlu0.b32.cont [6/16] %v5582, 128
      %5652 = vxpose.xlu0.b32.cont [7/16] %v5585, 128
      %5653 = vxpose.xlu0.b32.cont [8/16] %v5588, 128
      %5654 = vxpose.xlu0.b32.cont [9/16] %v5591, 128
      %5655 = vxpose.xlu0.b32.cont [10/16] %v5594, 128
      %5656 = vxpose.xlu0.b32.cont [11/16] %v5597, 128
      %5657 = vxpose.xlu0.b32.cont [12/16] %v5600, 128
      %5658 = vxpose.xlu0.b32.cont [13/16] %v5603, 128
      %5659 = vxpose.xlu0.b32.cont [14/16] %v5606, 128
      %5660 = vxpose.xlu0.b32.cont [15/16] %v5609, 128
      %5661 = vxpose.xlu0.b32.end [16/16] %v5612, 128
      %v5662 = vpop.trf.xlu0
      %v5663 = vpop.trf.xlu0
      %v5664 = vpop.trf.xlu0
      %v5665 = vpop.trf.xlu0
      %v5666 = vpop.trf.xlu0
      %v5667 = vpop.trf.xlu0
      %v5668 = vpop.trf.xlu0
      %v5669 = vpop.trf.xlu0
      %v5670 = vpop.trf.xlu0
      %v5671 = vpop.trf.xlu0
      %v5672 = vpop.trf.xlu0
      %v5673 = vpop.trf.xlu0
      %v5674 = vpop.trf.xlu0
      %v5675 = vpop.trf.xlu0
      %v5676 = vpop.trf.xlu0
      %v5677 = vpop.trf.xlu0
      %v5680 = vrot.slane %v5662, 6
      %vm5681 = vcmask 1041408
      %v5682 = vsel %vm5681, %v5630, %v5680
      %5684 = vst [vmem:[%s359] sm:$0xf] %v5682
      %p5685 = scmp.lt.s32.totalorder %s21, 1
      %s5686 = scalar_select %p5685, %s21, 1
      %s5687 = smul.addr %s5686, 2
      %s5688 = smul.addr %s5687, 2
      %s5689 = scalar_lea.vmem %s10, %s5688
      // Predicated region
      $region61: #{encoder_decoder_forward.1} parent=59 // pred_check
        %p5690 = pneg %p254
      $region62: #{encoder_decoder_forward.1} parent=59 // pred_check_branch
        %5692 = sbr.rel (%p5690) target = $region64
      $region63: #{encoder_decoder_forward.1} parent=59 // pred_region
        _
      $region64: #{encoder_decoder_forward.1} parent=59 // pred_fallthru
        _
    $region60: #{encoder_decoder_forward.1} parent=5 // pred_fallthru
      _
    %p5693 = scmp.le.s32.totalorder 2, %s16
    // Predicated region
    $region65: #{encoder_decoder_forward.1} parent=5 // pred_check
      %p5694 = pneg %p5693
    $region66: #{encoder_decoder_forward.1} parent=5 // pred_check_branch
      %5696 = sbr.rel (%p5694) target = $region68
    $region67: #{encoder_decoder_forward.1} parent=5 // pred_region
      %s5697 = ssub.s32 %s16, 2
      // Predicated region
      $region69: #{encoder_decoder_forward.1} parent=67 // pred_check
        %p5698 = pneg %p260
      $region70: #{encoder_decoder_forward.1} parent=67 // pred_check_branch
        %5700 = sbr.rel (%p5698) target = $region72
      $region71: #{encoder_decoder_forward.1} parent=67 // pred_region
        %p5701 = scmp.lt.s32.totalorder %s22, 1
        %s5702 = scalar_select %p5701, %s22, 1
        %s5703 = smul.addr %s5702, 2
        %s5704 = smul.addr %s5703, 2
        %s5705 = scalar_lea.vmem %s10, %s5704
      $region72: #{encoder_decoder_forward.1} parent=67 // pred_fallthru
        _
    $region68: #{encoder_decoder_forward.1} parent=5 // pred_fallthru
      _
  $region6: #{encoder_decoder_forward.1} parent=0 // loop_footer
    %s20 = sadd.s32 1, %s16
  $region7: #{encoder_decoder_forward.1} parent=0 // loop_footer_branch
    %15 = sbr.rel target = $region3
  $region8: #{encoder_decoder_forward.1} parent=0 // loop_exit
    _

</llo_original>
